<compile_context>
chip_gen: v7x
topology: tpu7x:2x2x1
jax: 0.10.0
libtpu: 0.0.40
codegen_flags: <defaults>
</compile_context>

<pallas_src>
import functools

import jax
import jax.numpy as jnp
from jax.experimental import pallas as pl
from jax.experimental.pallas import tpu as pltpu


# ----------------------------------------------------------------------------
# helpers
# ----------------------------------------------------------------------------
def _pick_bblk(bs):
    """Largest sample block that divides BS while keeping >= 2 grid steps."""
    for cand in (8, 4, 2):
        if bs % cand == 0 and bs // cand >= 2:
            return cand
    return 1


def _build_banded_weights(w, W):
    """(3,3,3,Cin,Cmid) conv weights -> (9, (W+2)*Cin, W*Cmid) banded matrices.

    For each (kt, kh) tap pair the 3 kw taps are folded into a block-Toeplitz
    band, so the whole W axis (plus its zero halo) is consumed by one matmul:
        band[(w+kw)*Cin + ci, w*Cmid + co] = w[kt, kh, kw, ci, co]
    """
    _, _, _, Cin, Cmid = w.shape
    blk = w.reshape(3, 3, 3 * Cin, Cmid)          # rows ordered (kw, ci)
    wb = jnp.zeros((3, 3, (W + 2) * Cin, W * Cmid), w.dtype)
    for ow in range(W):
        wb = wb.at[:, :, ow * Cin:(ow + 3) * Cin,
                   ow * Cmid:(ow + 1) * Cmid].set(blk)
    return wb.reshape(9, (W + 2) * Cin, W * Cmid)


# ----------------------------------------------------------------------------
# Fused kernel: Conv3d(3x3x3, pad=1) + folded BN + ReLU + sum over (t, h)
# One grid step = `bblk` samples.  The W axis (with halo) lives in the lane
# dimension, so the conv becomes 9 banded matmuls (one per (kt, kh) tap pair).
# ----------------------------------------------------------------------------
def _conv_bn_relu_pool_kernel(x_ref, w_ref, scale_ref, shift_ref, o_ref,
                              xpad_ref, *, bblk, T, H, W, Cin, Cmid):
    # x_ref     : (bblk, T, H, (W+2)*Cin)   bf16, W halo already zero-packed
    # w_ref     : (9, (W+2)*Cin, W*Cmid)    bf16 banded taps per (kt, kh)
    # scale_ref : (1, W*Cmid)               f32 folded BN gamma/sqrt(var), tiled over W
    # shift_ref : (1, W*Cmid)               f32 folded BN shift, tiled over W
    # o_ref     : (1, bblk, W*Cmid)         f32 per-sample sum over (t, h)
    # xpad_ref  : (bblk, T+2, H+2, (W+2)*Cin) bf16 scratch for the T/H halo
    wc_in = (W + 2) * Cin
    wc_out = W * Cmid

    # In-kernel halo handling for T and H (no HBM-padded copy of the input).
    xpad_ref[...] = jnp.zeros_like(xpad_ref)
    xpad_ref[:, 1:T + 1, 1:H + 1, :] = x_ref[...]

    m = bblk * T * H
    acc = jnp.zeros((m, wc_out), jnp.float32)
    for kt in range(3):
        for kh in range(3):
            slab = xpad_ref[:, kt:kt + T, kh:kh + H, :]       # (bblk, T, H, wc_in)
            slab2d = slab.reshape(m, wc_in)                   # bf16, lane-dense
            acc = acc + jnp.dot(slab2d, w_ref[kt * 3 + kh],
                                preferred_element_type=jnp.float32)

    # Folded BatchNorm3d (eval) + ReLU in f32.
    y = jnp.maximum(acc * scale_ref[...] + shift_ref[...], 0.0)
    # Fused partial global-average-pool: sum over (t, h) rows per sample.
    # (The remaining sum over w and the 1/(T*H*W) scale happen in the wrapper.)
    o_ref[0] = jnp.sum(y.reshape(bblk, T * H, wc_out), axis=1)


def conv_bn_relu_pool(x, wband, scale_w, shift_w, *, T, H, W, Cin, Cmid):
    BS = x.shape[0]
    wc_in = (W + 2) * Cin
    wc_out = W * Cmid
    bblk = _pick_bblk(BS)
    nb = BS // bblk

    kern = functools.partial(_conv_bn_relu_pool_kernel,
                             bblk=bblk, T=T, H=H, W=W, Cin=Cin, Cmid=Cmid)
    out = pl.pallas_call(
        kern,
        out_shape=jax.ShapeDtypeStruct((nb, bblk, wc_out), jnp.float32),
        grid=(nb,),
        in_specs=[
            pl.BlockSpec((bblk, T, H, wc_in), lambda b: (b, 0, 0, 0)),
            pl.BlockSpec((9, wc_in, wc_out), lambda b: (0, 0, 0)),
            pl.BlockSpec((1, wc_out), lambda b: (0, 0)),
            pl.BlockSpec((1, wc_out), lambda b: (0, 0)),
        ],
        out_specs=pl.BlockSpec((1, bblk, wc_out), lambda b: (b, 0, 0)),
        scratch_shapes=[pltpu.VMEM((bblk, T + 2, H + 2, wc_in), jnp.bfloat16)],
        compiler_params=pltpu.CompilerParams(
            dimension_semantics=("parallel",)),
    )(x, wband, scale_w, shift_w)
    return out.reshape(BS, wc_out)


# ----------------------------------------------------------------------------
# Combine.forward : rearrange 'b s c t h w -> (b s) c t h w', run backbone,
# return pred of shape (b*s, num_classes).
# ----------------------------------------------------------------------------
@jax.jit
def combine_forward(data, params):
    B, S, C, T, H, W = data.shape
    Cmid = params["conv_w"].shape[-1]
    BS = B * S

    # (b s) merge, NCDHW -> channels-last, pack the W halo into the lane dim.
    x = jnp.transpose(data.reshape(BS, C, T, H, W), (0, 2, 3, 4, 1))
    x = jnp.pad(x, ((0, 0), (0, 0), (0, 0), (1, 1), (0, 0)))      # W halo only
    x = x.reshape(BS, T, H, (W + 2) * C).astype(jnp.bfloat16)

    # Banded (kw-folded) conv weights in bf16; folded BN affine in f32.
    wband = _build_banded_weights(params["conv_w"], W).astype(jnp.bfloat16)
    scale_w = jnp.tile(params["bn_scale"].astype(jnp.float32), (1, W))
    shift_w = jnp.tile(params["bn_shift"].astype(jnp.float32), (1, W))

    pooled_w = conv_bn_relu_pool(x, wband, scale_w, shift_w,
                                 T=T, H=H, W=W, Cin=C, Cmid=Cmid)   # (BS, W*Cmid)

    # Finish the GAP (sum over w, 1/(T*H*W)) and run the tiny FC head in XLA.
    pooled = pooled_w.reshape(BS, W, Cmid).sum(axis=1) * (1.0 / float(T * H * W))
    pred = jnp.dot(pooled, params["fc_w"]) + params["fc_b"]
    return pred


def init_params(key, Cin, Cmid, num_classes):
    k1, k2, k3 = jax.random.split(key, 3)
    conv_w = jax.random.normal(k1, (3, 3, 3, Cin, Cmid), jnp.float32) * 0.05
    bn_scale = jnp.ones((1, Cmid), jnp.float32)    # folded BN gamma/sqrt(var)
    bn_shift = jnp.zeros((1, Cmid), jnp.float32)   # folded BN beta - mean*scale
    fc_w = jax.random.normal(k2, (Cmid, num_classes), jnp.float32) * 0.05
    fc_b = jax.random.normal(k3, (1, num_classes), jnp.float32) * 0.01
    return dict(conv_w=conv_w, bn_scale=bn_scale, bn_shift=bn_shift,
                fc_w=fc_w, fc_b=fc_b)


# Pure-JAX reference (f32) of the same stem path, for a loose parity check.
def _reference_forward(data, params):
    B, S, C, T, H, W = data.shape
    Cmid = params["conv_w"].shape[-1]
    x = jnp.transpose(data.reshape(B * S, C, T, H, W), (0, 2, 3, 4, 1))
    xp = jnp.pad(x, ((0, 0), (1, 1), (1, 1), (1, 1), (0, 0)))
    acc = jnp.zeros((B * S, T, H, W, Cmid), jnp.float32)
    w = params["conv_w"]
    for kt in range(3):
        for kh in range(3):
            for kw in range(3):
                acc = acc + jnp.einsum(
                    "bthwc,cm->bthwm",
                    xp[:, kt:kt + T, kh:kh + H, kw:kw + W, :], w[kt, kh, kw])
    y = jnp.maximum(acc * params["bn_scale"].reshape(1, 1, 1, 1, Cmid)
                    + params["bn_shift"].reshape(1, 1, 1, 1, Cmid), 0.0)
    pooled = y.mean(axis=(1, 2, 3))
    return jnp.dot(pooled, params["fc_w"]) + params["fc_b"]


if __name__ == "__main__":
    B, S, C, T, H, W = 2, 2, 4, 8, 16, 16
    Cmid, num_classes = 16, 8

    key = jax.random.PRNGKey(0)
    kd, kp = jax.random.split(key)
    data = jax.random.normal(kd, (B, S, C, T, H, W), jnp.float32)
    params = init_params(kp, C, Cmid, num_classes)

    pred = combine_forward(data, params)
    pred = jax.block_until_ready(pred)
    assert pred.shape == (B * S, num_classes), pred.shape
    assert bool(jnp.all(jnp.isfinite(pred)))

    # Loose parity vs. the f32 reference (kernel uses bf16 MXU inputs).
    ref = _reference_forward(data, params)
    max_err = float(jnp.max(jnp.abs(pred - ref)))
    assert max_err < 3e-2, f"max abs err vs reference: {max_err}"

    print("KERNEL_OK")
</pallas_src>

<mosaic_0001>
module attributes {stable_mosaic.version = 11 : i64} {
  func.func @_conv_bn_relu_pool_kernel(%arg0: i32, %arg1: memref<2x8x16x72xbf16, #tpu.memory_space<vmem>>, %arg2: memref<9x72x256xbf16, #tpu.memory_space<vmem>>, %arg3: memref<1x256xf32, #tpu.memory_space<vmem>>, %arg4: memref<1x256xf32, #tpu.memory_space<vmem>>, %arg5: memref<1x2x256xf32, #tpu.memory_space<vmem>>, %arg6: memref<2x10x18x72xbf16, #tpu.memory_space<vmem>>) attributes {dimension_semantics = [#tpu.dimension_semantics<parallel>], iteration_bounds = array<i64: 2>, scalar_prefetch = 0 : i64, scratch_operands = 1 : i64, tpu.core_type = #tpu.core_type<tc>, window_params = [{transform_indices = @transform_0, window_bounds = array<i64: 2, 8, 16, 72>}, {pipeline_mode = #tpu.pipeline_mode<synchronous>, transform_indices = @transform_1, window_bounds = array<i64: 9, 72, 256>}, {pipeline_mode = #tpu.pipeline_mode<synchronous>, transform_indices = @transform_2, window_bounds = array<i64: 1, 256>}, {pipeline_mode = #tpu.pipeline_mode<synchronous>, transform_indices = @transform_3, window_bounds = array<i64: 1, 256>}, {transform_indices = @transform_4, window_bounds = array<i64: 1, 2, 256>}]} {
    %cst = arith.constant 0.000000e+00 : bf16
    %0 = vector.broadcast %cst : bf16 to vector<2x10x18x72xbf16>
    %c0 = arith.constant 0 : index
    %c0_0 = arith.constant 0 : index
    %c0_1 = arith.constant 0 : index
    %c0_2 = arith.constant 0 : index
    %1 = vector.load %arg6[%c0, %c0_0, %c0_1, %c0_2] : memref<2x10x18x72xbf16, #tpu.memory_space<vmem>>, vector<2x10x18x72xbf16>
    tpu.vector_store %arg6[%c0, %c0_0, %c0_1, %c0_2], %0 {strides = array<i32>} : memref<2x10x18x72xbf16, #tpu.memory_space<vmem>>, vector<2x10x18x72xbf16>,
    %c0_3 = arith.constant 0 : index
    %c0_4 = arith.constant 0 : index
    %c0_5 = arith.constant 0 : index
    %c0_6 = arith.constant 0 : index
    %2 = vector.load %arg1[%c0_3, %c0_4, %c0_5, %c0_6] : memref<2x8x16x72xbf16, #tpu.memory_space<vmem>>, vector<2x8x16x72xbf16>
    %c0_7 = arith.constant 0 : index
    %c1 = arith.constant 1 : index
    %c1_8 = arith.constant 1 : index
    %c0_9 = arith.constant 0 : index
    %3 = vector.load %arg6[%c0_7, %c1, %c1_8, %c0_9] : memref<2x10x18x72xbf16, #tpu.memory_space<vmem>>, vector<2x8x16x72xbf16>
    tpu.vector_store %arg6[%c0_7, %c1, %c1_8, %c0_9], %2 {strides = array<i32>} : memref<2x10x18x72xbf16, #tpu.memory_space<vmem>>, vector<2x8x16x72xbf16>,
    %cst_10 = arith.constant 0.000000e+00 : f32
    %4 = vector.broadcast %cst_10 : f32 to vector<256x256xf32>
    %c0_11 = arith.constant 0 : index
    %c0_12 = arith.constant 0 : index
    %c0_13 = arith.constant 0 : index
    %c0_14 = arith.constant 0 : index
    %5 = vector.load %arg6[%c0_11, %c0_12, %c0_13, %c0_14] : memref<2x10x18x72xbf16, #tpu.memory_space<vmem>>, vector<2x8x16x72xbf16>
    %6 = vector.shape_cast %5 : vector<2x8x16x72xbf16> to vector<256x72xbf16>
    %c0_15 = arith.constant 0 : index
    %c0_16 = arith.constant 0 : index
    %c0_17 = arith.constant 0 : index
    %7 = vector.load %arg2[%c0_15, %c0_16, %c0_17] : memref<9x72x256xbf16, #tpu.memory_space<vmem>>, vector<1x72x256xbf16>
    %8 = vector.shape_cast %7 : vector<1x72x256xbf16> to vector<72x256xbf16>
    %cst_18 = arith.constant dense<0.000000e+00> : vector<256x256xf32>
    %9 = tpu.matmul %6, %8, %cst_18 {dimension_numbers = #tpu.dot_dimension_numbers<[1], [0], [0], [1], [0, 0, 1, 1], [], []>} : vector<256x72xbf16>, vector<72x256xbf16>, vector<256x256xf32> -> vector<256x256xf32>
    %10 = arith.addf %4, %9 : vector<256x256xf32>
    %c0_19 = arith.constant 0 : index
    %c0_20 = arith.constant 0 : index
    %c1_21 = arith.constant 1 : index
    %c0_22 = arith.constant 0 : index
    %11 = vector.load %arg6[%c0_19, %c0_20, %c1_21, %c0_22] : memref<2x10x18x72xbf16, #tpu.memory_space<vmem>>, vector<2x8x16x72xbf16>
    %12 = vector.shape_cast %11 : vector<2x8x16x72xbf16> to vector<256x72xbf16>
    %c1_23 = arith.constant 1 : index
    %c0_24 = arith.constant 0 : index
    %c0_25 = arith.constant 0 : index
    %13 = vector.load %arg2[%c1_23, %c0_24, %c0_25] : memref<9x72x256xbf16, #tpu.memory_space<vmem>>, vector<1x72x256xbf16>
    %14 = vector.shape_cast %13 : vector<1x72x256xbf16> to vector<72x256xbf16>
    %cst_26 = arith.constant dense<0.000000e+00> : vector<256x256xf32>
    %15 = tpu.matmul %12, %14, %cst_26 {dimension_numbers = #tpu.dot_dimension_numbers<[1], [0], [0], [1], [0, 0, 1, 1], [], []>} : vector<256x72xbf16>, vector<72x256xbf16>, vector<256x256xf32> -> vector<256x256xf32>
    %16 = arith.addf %10, %15 : vector<256x256xf32>
    %c0_27 = arith.constant 0 : index
    %c0_28 = arith.constant 0 : index
    %c2 = arith.constant 2 : index
    %c0_29 = arith.constant 0 : index
    %17 = vector.load %arg6[%c0_27, %c0_28, %c2, %c0_29] : memref<2x10x18x72xbf16, #tpu.memory_space<vmem>>, vector<2x8x16x72xbf16>
    %18 = vector.shape_cast %17 : vector<2x8x16x72xbf16> to vector<256x72xbf16>
    %c2_30 = arith.constant 2 : index
    %c0_31 = arith.constant 0 : index
    %c0_32 = arith.constant 0 : index
    %19 = vector.load %arg2[%c2_30, %c0_31, %c0_32] : memref<9x72x256xbf16, #tpu.memory_space<vmem>>, vector<1x72x256xbf16>
    %20 = vector.shape_cast %19 : vector<1x72x256xbf16> to vector<72x256xbf16>
    %cst_33 = arith.constant dense<0.000000e+00> : vector<256x256xf32>
    %21 = tpu.matmul %18, %20, %cst_33 {dimension_numbers = #tpu.dot_dimension_numbers<[1], [0], [0], [1], [0, 0, 1, 1], [], []>} : vector<256x72xbf16>, vector<72x256xbf16>, vector<256x256xf32> -> vector<256x256xf32>
    %22 = arith.addf %16, %21 : vector<256x256xf32>
    %c0_34 = arith.constant 0 : index
    %c1_35 = arith.constant 1 : index
    %c0_36 = arith.constant 0 : index
    %c0_37 = arith.constant 0 : index
    %23 = vector.load %arg6[%c0_34, %c1_35, %c0_36, %c0_37] : memref<2x10x18x72xbf16, #tpu.memory_space<vmem>>, vector<2x8x16x72xbf16>
    %24 = vector.shape_cast %23 : vector<2x8x16x72xbf16> to vector<256x72xbf16>
    %c3 = arith.constant 3 : index
    %c0_38 = arith.constant 0 : index
    %c0_39 = arith.constant 0 : index
    %25 = vector.load %arg2[%c3, %c0_38, %c0_39] : memref<9x72x256xbf16, #tpu.memory_space<vmem>>, vector<1x72x256xbf16>
    %26 = vector.shape_cast %25 : vector<1x72x256xbf16> to vector<72x256xbf16>
    %cst_40 = arith.constant dense<0.000000e+00> : vector<256x256xf32>
    %27 = tpu.matmul %24, %26, %cst_40 {dimension_numbers = #tpu.dot_dimension_numbers<[1], [0], [0], [1], [0, 0, 1, 1], [], []>} : vector<256x72xbf16>, vector<72x256xbf16>, vector<256x256xf32> -> vector<256x256xf32>
    %28 = arith.addf %22, %27 : vector<256x256xf32>
    %c0_41 = arith.constant 0 : index
    %c1_42 = arith.constant 1 : index
    %c1_43 = arith.constant 1 : index
    %c0_44 = arith.constant 0 : index
    %29 = vector.load %arg6[%c0_41, %c1_42, %c1_43, %c0_44] : memref<2x10x18x72xbf16, #tpu.memory_space<vmem>>, vector<2x8x16x72xbf16>
    %30 = vector.shape_cast %29 : vector<2x8x16x72xbf16> to vector<256x72xbf16>
    %c4 = arith.constant 4 : index
    %c0_45 = arith.constant 0 : index
    %c0_46 = arith.constant 0 : index
    %31 = vector.load %arg2[%c4, %c0_45, %c0_46] : memref<9x72x256xbf16, #tpu.memory_space<vmem>>, vector<1x72x256xbf16>
    %32 = vector.shape_cast %31 : vector<1x72x256xbf16> to vector<72x256xbf16>
    %cst_47 = arith.constant dense<0.000000e+00> : vector<256x256xf32>
    %33 = tpu.matmul %30, %32, %cst_47 {dimension_numbers = #tpu.dot_dimension_numbers<[1], [0], [0], [1], [0, 0, 1, 1], [], []>} : vector<256x72xbf16>, vector<72x256xbf16>, vector<256x256xf32> -> vector<256x256xf32>
    %34 = arith.addf %28, %33 : vector<256x256xf32>
    %c0_48 = arith.constant 0 : index
    %c1_49 = arith.constant 1 : index
    %c2_50 = arith.constant 2 : index
    %c0_51 = arith.constant 0 : index
    %35 = vector.load %arg6[%c0_48, %c1_49, %c2_50, %c0_51] : memref<2x10x18x72xbf16, #tpu.memory_space<vmem>>, vector<2x8x16x72xbf16>
    %36 = vector.shape_cast %35 : vector<2x8x16x72xbf16> to vector<256x72xbf16>
    %c5 = arith.constant 5 : index
    %c0_52 = arith.constant 0 : index
    %c0_53 = arith.constant 0 : index
    %37 = vector.load %arg2[%c5, %c0_52, %c0_53] : memref<9x72x256xbf16, #tpu.memory_space<vmem>>, vector<1x72x256xbf16>
    %38 = vector.shape_cast %37 : vector<1x72x256xbf16> to vector<72x256xbf16>
    %cst_54 = arith.constant dense<0.000000e+00> : vector<256x256xf32>
    %39 = tpu.matmul %36, %38, %cst_54 {dimension_numbers = #tpu.dot_dimension_numbers<[1], [0], [0], [1], [0, 0, 1, 1], [], []>} : vector<256x72xbf16>, vector<72x256xbf16>, vector<256x256xf32> -> vector<256x256xf32>
    %40 = arith.addf %34, %39 : vector<256x256xf32>
    %c0_55 = arith.constant 0 : index
    %c2_56 = arith.constant 2 : index
    %c0_57 = arith.constant 0 : index
    %c0_58 = arith.constant 0 : index
    %41 = vector.load %arg6[%c0_55, %c2_56, %c0_57, %c0_58] : memref<2x10x18x72xbf16, #tpu.memory_space<vmem>>, vector<2x8x16x72xbf16>
    %42 = vector.shape_cast %41 : vector<2x8x16x72xbf16> to vector<256x72xbf16>
    %c6 = arith.constant 6 : index
    %c0_59 = arith.constant 0 : index
    %c0_60 = arith.constant 0 : index
    %43 = vector.load %arg2[%c6, %c0_59, %c0_60] : memref<9x72x256xbf16, #tpu.memory_space<vmem>>, vector<1x72x256xbf16>
    %44 = vector.shape_cast %43 : vector<1x72x256xbf16> to vector<72x256xbf16>
    %cst_61 = arith.constant dense<0.000000e+00> : vector<256x256xf32>
    %45 = tpu.matmul %42, %44, %cst_61 {dimension_numbers = #tpu.dot_dimension_numbers<[1], [0], [0], [1], [0, 0, 1, 1], [], []>} : vector<256x72xbf16>, vector<72x256xbf16>, vector<256x256xf32> -> vector<256x256xf32>
    %46 = arith.addf %40, %45 : vector<256x256xf32>
    %c0_62 = arith.constant 0 : index
    %c2_63 = arith.constant 2 : index
    %c1_64 = arith.constant 1 : index
    %c0_65 = arith.constant 0 : index
    %47 = vector.load %arg6[%c0_62, %c2_63, %c1_64, %c0_65] : memref<2x10x18x72xbf16, #tpu.memory_space<vmem>>, vector<2x8x16x72xbf16>
    %48 = vector.shape_cast %47 : vector<2x8x16x72xbf16> to vector<256x72xbf16>
    %c7 = arith.constant 7 : index
    %c0_66 = arith.constant 0 : index
    %c0_67 = arith.constant 0 : index
    %49 = vector.load %arg2[%c7, %c0_66, %c0_67] : memref<9x72x256xbf16, #tpu.memory_space<vmem>>, vector<1x72x256xbf16>
    %50 = vector.shape_cast %49 : vector<1x72x256xbf16> to vector<72x256xbf16>
    %cst_68 = arith.constant dense<0.000000e+00> : vector<256x256xf32>
    %51 = tpu.matmul %48, %50, %cst_68 {dimension_numbers = #tpu.dot_dimension_numbers<[1], [0], [0], [1], [0, 0, 1, 1], [], []>} : vector<256x72xbf16>, vector<72x256xbf16>, vector<256x256xf32> -> vector<256x256xf32>
    %52 = arith.addf %46, %51 : vector<256x256xf32>
    %c0_69 = arith.constant 0 : index
    %c2_70 = arith.constant 2 : index
    %c2_71 = arith.constant 2 : index
    %c0_72 = arith.constant 0 : index
    %53 = vector.load %arg6[%c0_69, %c2_70, %c2_71, %c0_72] : memref<2x10x18x72xbf16, #tpu.memory_space<vmem>>, vector<2x8x16x72xbf16>
    %54 = vector.shape_cast %53 : vector<2x8x16x72xbf16> to vector<256x72xbf16>
    %c8 = arith.constant 8 : index
    %c0_73 = arith.constant 0 : index
    %c0_74 = arith.constant 0 : index
    %55 = vector.load %arg2[%c8, %c0_73, %c0_74] : memref<9x72x256xbf16, #tpu.memory_space<vmem>>, vector<1x72x256xbf16>
    %56 = vector.shape_cast %55 : vector<1x72x256xbf16> to vector<72x256xbf16>
    %cst_75 = arith.constant dense<0.000000e+00> : vector<256x256xf32>
    %57 = tpu.matmul %54, %56, %cst_75 {dimension_numbers = #tpu.dot_dimension_numbers<[1], [0], [0], [1], [0, 0, 1, 1], [], []>} : vector<256x72xbf16>, vector<72x256xbf16>, vector<256x256xf32> -> vector<256x256xf32>
    %58 = arith.addf %52, %57 : vector<256x256xf32>
    %c0_76 = arith.constant 0 : index
    %c0_77 = arith.constant 0 : index
    %59 = vector.load %arg3[%c0_76, %c0_77] : memref<1x256xf32, #tpu.memory_space<vmem>>, vector<1x256xf32>
    %60 = vector.broadcast %59 : vector<1x256xf32> to vector<256x256xf32>
    %61 = arith.mulf %58, %60 : vector<256x256xf32>
    %c0_78 = arith.constant 0 : index
    %c0_79 = arith.constant 0 : index
    %62 = vector.load %arg4[%c0_78, %c0_79] : memref<1x256xf32, #tpu.memory_space<vmem>>, vector<1x256xf32>
    %63 = vector.broadcast %62 : vector<1x256xf32> to vector<256x256xf32>
    %64 = arith.addf %61, %63 : vector<256x256xf32>
    %cst_80 = arith.constant 0.000000e+00 : f32
    %65 = vector.broadcast %cst_80 : f32 to vector<256x256xf32>
    %66 = arith.maximumf %64, %65 : vector<256x256xf32>
    %67 = vector.shape_cast %66 : vector<256x256xf32> to vector<2x128x256xf32>
    %cst_81 = arith.constant dense<0.000000e+00> : vector<2x256xf32>
    %68 = vector.multi_reduction <add>, %67, %cst_81 [1] : vector<2x128x256xf32> to vector<2x256xf32>
    %c0_82 = arith.constant 0 : index
    %c0_83 = arith.constant 0 : index
    %c0_84 = arith.constant 0 : index
    %69 = vector.load %arg5[%c0_82, %c0_83, %c0_84] : memref<1x2x256xf32, #tpu.memory_space<vmem>>, vector<1x2x256xf32>
    %70 = vector.shape_cast %69 : vector<1x2x256xf32> to vector<2x256xf32>
    %71 = vector.shape_cast %68 : vector<2x256xf32> to vector<1x2x256xf32>
    tpu.vector_store %arg5[%c0_82, %c0_83, %c0_84], %71 {strides = array<i32>} : memref<1x2x256xf32, #tpu.memory_space<vmem>>, vector<1x2x256xf32>,
    return
  }
  func.func @transform_0(%arg0: i32) -> (i32, i32, i32, i32) {
    %c0_i32 = arith.constant 0 : i32
    %c0_i32_0 = arith.constant 0 : i32
    %c0_i32_1 = arith.constant 0 : i32
    %c0_i32_2 = arith.constant 0 : i32
    return %arg0, %c0_i32, %c0_i32_0, %c0_i32_1 : i32, i32, i32, i32
  }
  func.func @transform_1(%arg0: i32) -> (i32, i32, i32) {
    %c0_i32 = arith.constant 0 : i32
    %c0_i32_0 = arith.constant 0 : i32
    %c0_i32_1 = arith.constant 0 : i32
    %c0_i32_2 = arith.constant 0 : i32
    return %c0_i32, %c0_i32_0, %c0_i32_1 : i32, i32, i32
  }
  func.func @transform_2(%arg0: i32) -> (i32, i32) {
    %c0_i32 = arith.constant 0 : i32
    %c0_i32_0 = arith.constant 0 : i32
    %c0_i32_1 = arith.constant 0 : i32
    return %c0_i32, %c0_i32_0 : i32, i32
  }
  func.func @transform_3(%arg0: i32) -> (i32, i32) {
    %c0_i32 = arith.constant 0 : i32
    %c0_i32_0 = arith.constant 0 : i32
    %c0_i32_1 = arith.constant 0 : i32
    return %c0_i32, %c0_i32_0 : i32, i32
  }
  func.func @transform_4(%arg0: i32) -> (i32, i32, i32) {
    %c0_i32 = arith.constant 0 : i32
    %c0_i32_0 = arith.constant 0 : i32
    %c0_i32_1 = arith.constant 0 : i32
    return %arg0, %c0_i32, %c0_i32_0 : i32, i32, i32
  }
}

</mosaic_0001>

<llo_original>
// kernel: combine_forward.1
$region0: #{combine_forward.1}
  #allocation0 [shape = 'u32[]', space=smem, size = 0x4, offset = 0x4, fixed_abs, tag = 'smem constant byte address 0x4 - core index']
  #allocation1 [shape = 'u32[144,128]{1,0:T(1,128)}', space=vmem, size = 0x12000, scoped, tag = 'internal scratch']
  #allocation2 [shape = 'bf16[2,10,18,72]{3,2,1,0:T(8,128)(2,1)}', space=vmem, size = 0x1e000, scoped, tag = 'scratch operand']
  %s0 = inlined_call_operand.vmem [shape: bf16[4,8,16,72], index: 0, kind: input, shape index: {}]
  %s1 = inlined_call_operand.vmem [shape: bf16[9,72,256], index: 1, kind: input, shape index: {}]
  %s2 = inlined_call_operand.vmem [shape: f32[1,256], index: 2, kind: input, shape index: {}]
  %s3 = inlined_call_operand.vmem [shape: f32[1,256], index: 3, kind: input, shape index: {}]
  %s4 = inlined_call_operand.vmem [shape: f32[2,2,256], index: 4, kind: output, shape index: {}]
  %s5 = sld [smem:[#allocation0]]
  $region49: #{combine_forward.1} parent=0
    _
  %s7 = ssub.s32 1, %s5
  %s8 = scalar_select 0, %s7, %s5
  loop: start=0, step=1, limit=4
  $region2: #{combine_forward.1} parent=0 // loop_pre_header
    _
  $region3: #{combine_forward.1} parent=0 // loop_header
    %s10 = sphi 0, %s14
    %p11 = scmp.ge.s32.totalorder %s10, 4
    %s20 = sphi 0, %s22
    %s23 = sphi 0, %s20
    %s24 = sphi 0, %s23
    %s40 = sphi 0, %s24
    %s44 = sphi 0, %s44
    %s46 = sphi 0, %s44
    %s47 = sphi 0, %s46
    %s61 = sphi 0, %s47
    %s65 = sphi 0, %s65
    %s67 = sphi 0, %s65
    %s68 = sphi 0, %s67
    %s82 = sphi 0, %s68
    %s86 = sphi 0, %s86
    %s88 = sphi 0, %s86
    %s89 = sphi 0, %s88
    %s103 = sphi 0, %s89
    %s109 = sphi 0, %s111
    %s112 = sphi 0, %s109
    %s113 = sphi 0, %s112
    %s129 = sphi 0, %s113
  $region4: #{combine_forward.1} parent=0 // loop_header_branch
    %13 = sbr.rel (%p11) target = $region8
  $region5: #{combine_forward.1} parent=0 // loop_body
    %s15 = ssub.s32 %s10, 1
    %s16 = ssub.s32 %s10, 2
    %s17 = sadd.s32 %s10, 1
    %s18 = ssub.s32 %s10, %s17
    %p19 = scmp.eq.s32.totalorder %s18, 0
    %s21 = sadd.s32 %s20, 1
    %s22 = scalar_select %p19, %s20, %s21
    %p25 = pneg %p19
    %p26 = scmp.eq.s32.totalorder %s10, 1
    %p27 = por %p25, %p26
    %p28 = scmp.ne.s32.totalorder %s20, %s23
    %p29 = scmp.eq.s32.totalorder %s10, 0
    %p30 = por %p28, %p29
    %p31 = scmp.ne.s32.totalorder %s20, %s23
    %p32 = scmp.eq.s32.totalorder %s15, 1
    %p33 = por %p31, %p32
    %p34 = scmp.ne.s32.totalorder %s23, %s24
    %p35 = scmp.eq.s32.totalorder %s15, 0
    %p36 = por %p34, %p35
    %p37 = scmp.ne.s32.totalorder %s23, %s24
    %p38 = scmp.eq.s32.totalorder %s16, 1
    %p39 = por %p37, %p38
    %p41 = scmp.ne.s32.totalorder %s24, %s40
    %p42 = scmp.eq.s32.totalorder %s16, 0
    %p43 = por %p41, %p42
    %s45 = sadd.s32 %s44, 1
    %p48 = scmp.eq.s32.totalorder %s10, 1
    %p49 = scmp.ne.s32.totalorder %s44, %s46
    %p50 = scmp.eq.s32.totalorder %s10, 0
    %p51 = por %p49, %p50
    %p52 = scmp.ne.s32.totalorder %s44, %s46
    %p53 = scmp.eq.s32.totalorder %s15, 1
    %p54 = por %p52, %p53
    %p55 = scmp.ne.s32.totalorder %s46, %s47
    %p56 = scmp.eq.s32.totalorder %s15, 0
    %p57 = por %p55, %p56
    %p58 = scmp.ne.s32.totalorder %s46, %s47
    %p59 = scmp.eq.s32.totalorder %s16, 1
    %p60 = por %p58, %p59
    %p62 = scmp.ne.s32.totalorder %s47, %s61
    %p63 = scmp.eq.s32.totalorder %s16, 0
    %p64 = por %p62, %p63
    %s66 = sadd.s32 %s65, 1
    %p69 = scmp.eq.s32.totalorder %s10, 1
    %p70 = scmp.ne.s32.totalorder %s65, %s67
    %p71 = scmp.eq.s32.totalorder %s10, 0
    %p72 = por %p70, %p71
    %p73 = scmp.ne.s32.totalorder %s65, %s67
    %p74 = scmp.eq.s32.totalorder %s15, 1
    %p75 = por %p73, %p74
    %p76 = scmp.ne.s32.totalorder %s67, %s68
    %p77 = scmp.eq.s32.totalorder %s15, 0
    %p78 = por %p76, %p77
    %p79 = scmp.ne.s32.totalorder %s67, %s68
    %p80 = scmp.eq.s32.totalorder %s16, 1
    %p81 = por %p79, %p80
    %p83 = scmp.ne.s32.totalorder %s68, %s82
    %p84 = scmp.eq.s32.totalorder %s16, 0
    %p85 = por %p83, %p84
    %s87 = sadd.s32 %s86, 1
    %p90 = scmp.eq.s32.totalorder %s10, 1
    %p91 = scmp.ne.s32.totalorder %s86, %s88
    %p92 = scmp.eq.s32.totalorder %s10, 0
    %p93 = por %p91, %p92
    %p94 = scmp.ne.s32.totalorder %s86, %s88
    %p95 = scmp.eq.s32.totalorder %s15, 1
    %p96 = por %p94, %p95
    %p97 = scmp.ne.s32.totalorder %s88, %s89
    %p98 = scmp.eq.s32.totalorder %s15, 0
    %p99 = por %p97, %p98
    %p100 = scmp.ne.s32.totalorder %s88, %s89
    %p101 = scmp.eq.s32.totalorder %s16, 1
    %p102 = por %p100, %p101
    %p104 = scmp.ne.s32.totalorder %s89, %s103
    %p105 = scmp.eq.s32.totalorder %s16, 0
    %p106 = por %p104, %p105
    %s107 = ssub.s32 %s10, %s17
    %p108 = scmp.eq.s32.totalorder %s107, 0
    %s110 = sadd.s32 %s109, 1
    %s111 = scalar_select %p108, %s109, %s110
    %p114 = pneg %p108
    %p115 = scmp.eq.s32.totalorder %s10, 1
    %p116 = por %p114, %p115
    %p117 = scmp.ne.s32.totalorder %s109, %s112
    %p118 = scmp.eq.s32.totalorder %s10, 0
    %p119 = por %p117, %p118
    %p120 = scmp.ne.s32.totalorder %s109, %s112
    %p121 = scmp.eq.s32.totalorder %s15, 1
    %p122 = por %p120, %p121
    %p123 = scmp.ne.s32.totalorder %s112, %s113
    %p124 = scmp.eq.s32.totalorder %s15, 0
    %p125 = por %p123, %p124
    %p126 = scmp.ne.s32.totalorder %s112, %s113
    %p127 = scmp.eq.s32.totalorder %s16, 1
    %p128 = por %p126, %p127
    %p130 = scmp.ne.s32.totalorder %s113, %s129
    %p131 = scmp.eq.s32.totalorder %s16, 0
    %p132 = por %p130, %p131
    %p133 = scmp.le.s32.totalorder 1, %s10
    %p134 = scmp.lt.s32.totalorder %s10, 3
    %p135 = pnand %p133, %p134
    %p136 = pneg %p135
    // Predicated region
    $region9: #{combine_forward.1} parent=5 // pred_check
      _
    $region10: #{combine_forward.1} parent=5 // pred_check_branch
      %138 = sbr.rel (%p135) target = $region12
    $region11: #{combine_forward.1} parent=5 // pred_region
      %s139 = ssub.s32 %s10, 1
      // Predicated region
      $region13: #{combine_forward.1} parent=11 // pred_check
        %p140 = pneg %p57
      $region14: #{combine_forward.1} parent=11 // pred_check_branch
        %142 = sbr.rel (%p140) target = $region16
      $region15: #{combine_forward.1} parent=11 // pred_region
        _
      $region16: #{combine_forward.1} parent=11 // pred_fallthru
        _
      // Predicated region
      $region17: #{combine_forward.1} parent=11 // pred_check
        %p143 = pneg %p78
      $region18: #{combine_forward.1} parent=11 // pred_check_branch
        %145 = sbr.rel (%p143) target = $region20
      $region19: #{combine_forward.1} parent=11 // pred_region
        _
      $region20: #{combine_forward.1} parent=11 // pred_fallthru
        _
      // Predicated region
      $region21: #{combine_forward.1} parent=11 // pred_check
        %p146 = pneg %p99
      $region22: #{combine_forward.1} parent=11 // pred_check_branch
        %148 = sbr.rel (%p146) target = $region24
      $region23: #{combine_forward.1} parent=11 // pred_region
        _
      $region24: #{combine_forward.1} parent=11 // pred_fallthru
        _
    $region12: #{combine_forward.1} parent=5 // pred_fallthru
      _
    %p149 = scmp.lt.s32.totalorder %s10, 2
    // Predicated region
    $region25: #{combine_forward.1} parent=5 // pred_check
      %p150 = pneg %p149
    $region26: #{combine_forward.1} parent=5 // pred_check_branch
      %152 = sbr.rel (%p150) target = $region28
    $region27: #{combine_forward.1} parent=5 // pred_region
      // Predicated region
      $region29: #{combine_forward.1} parent=27 // pred_check
        %p153 = pneg %p30
      $region30: #{combine_forward.1} parent=27 // pred_check_branch
        %155 = sbr.rel (%p153) target = $region32
      $region31: #{combine_forward.1} parent=27 // pred_region
        %s156 = smul.u32 2, %s10
        %p157 = scmp.lt.s32.totalorder %s156, 3
        %s158 = scalar_select %p157, %s156, 3
        %s159 = smul.addr %s158, 16
        %s160 = smul.addr %s159, 4
        %s161 = scalar_lea.vmem %s0, %s160
        %s162 = smul.u32 2, %s10
      $region32: #{combine_forward.1} parent=27 // pred_fallthru
        _
    $region28: #{combine_forward.1} parent=5 // pred_fallthru
      _
    %p163 = scmp.le.s32.totalorder 1, %s10
    %p164 = scmp.lt.s32.totalorder %s10, 3
    %p165 = pnand %p163, %p164
    %p166 = pneg %p165
    // Predicated region
    $region33: #{combine_forward.1} parent=5 // pred_check
      _
    $region34: #{combine_forward.1} parent=5 // pred_check_branch
      %168 = sbr.rel (%p165) target = $region36
    $region35: #{combine_forward.1} parent=5 // pred_region
      %s169 = ssub.s32 %s10, 1
      %s170 = smul.u32 2, %s15
      %p171 = scmp.lt.s32.totalorder %s170, 3
      %s172 = scalar_select %p171, %s170, 3
      %s173 = smul.addr %s172, 16
      %s174 = smul.addr %s173, 4
      %s175 = scalar_lea.vmem %s0, %s174
      %p176 = pneg %p36
      %p177 = pneg %p33
      %p178 = pneg %p57
      %p179 = pneg %p54
      %p180 = pneg %p78
      %p181 = pneg %p75
      %p182 = pneg %p99
      %p183 = pneg %p96
      %p184 = pneg %p125
      %p185 = pneg %p122
      %p186 = scmp.lt.s32.totalorder %s15, 1
      %s187 = scalar_select %p186, %s15, 1
      %s188 = smul.addr %s187, 2
      %s189 = smul.addr %s188, 2
      %s190 = scalar_lea.vmem %s4, %s189
      %s191 = smul.u32 2, %s15
      %p192 = scmp.lt.s32.totalorder %s191, 3
      %s193 = scalar_select %p192, %s191, 3
      %s194 = smul.addr %s193, 16
      %s195 = smul.addr %s194, 4
      %s196 = scalar_lea.vmem %s0, %s195
      %s197 = smul.u32 2, %s15
      %p198 = scmp.lt.s32.totalorder %s15, 1
      %s199 = scalar_select %p198, %s15, 1
      %s200 = smul.addr %s199, 2
      %s201 = smul.addr %s200, 2
      %s202 = scalar_lea.vmem %s4, %s201
      %vm204 = vcmask 584704
      %205 = vst.msk [vmem:[#allocation2] sm:$0xf] %vm204, 0
      %206 = vst.msk [vmem:[#allocation2 + $0x4] sm:$0xf] %vm204, 0
      %vm207 = vcmask 581632
      %208 = vst.msk [vmem:[#allocation2 + $0x8] sm:$0x1] %vm207, 0
      %209 = vst.msk [vmem:[#allocation2 + $0xc] sm:$0xf] %vm204, 0
      %210 = vst.msk [vmem:[#allocation2 + $0x10] sm:$0xf] %vm204, 0
      %211 = vst.msk [vmem:[#allocation2 + $0x14] sm:$0x1] %vm207, 0
      %212 = vst.msk [vmem:[#allocation2 + $0x18] sm:$0xf] %vm204, 0
      %213 = vst.msk [vmem:[#allocation2 + $0x1c] sm:$0xf] %vm204, 0
      %214 = vst.msk [vmem:[#allocation2 + $0x20] sm:$0x1] %vm207, 0
      %215 = vst.msk [vmem:[#allocation2 + $0x24] sm:$0xf] %vm204, 0
      %216 = vst.msk [vmem:[#allocation2 + $0x28] sm:$0xf] %vm204, 0
      %217 = vst.msk [vmem:[#allocation2 + $0x2c] sm:$0x1] %vm207, 0
      %218 = vst.msk [vmem:[#allocation2 + $0x30] sm:$0xf] %vm204, 0
      %219 = vst.msk [vmem:[#allocation2 + $0x34] sm:$0xf] %vm204, 0
      %220 = vst.msk [vmem:[#allocation2 + $0x38] sm:$0x1] %vm207, 0
      %221 = vst.msk [vmem:[#allocation2 + $0x3c] sm:$0xf] %vm204, 0
      %222 = vst.msk [vmem:[#allocation2 + $0x40] sm:$0xf] %vm204, 0
      %223 = vst.msk [vmem:[#allocation2 + $0x44] sm:$0x1] %vm207, 0
      %224 = vst.msk [vmem:[#allocation2 + $0x48] sm:$0xf] %vm204, 0
      %225 = vst.msk [vmem:[#allocation2 + $0x4c] sm:$0xf] %vm204, 0
      %226 = vst.msk [vmem:[#allocation2 + $0x50] sm:$0x1] %vm207, 0
      %227 = vst.msk [vmem:[#allocation2 + $0x54] sm:$0xf] %vm204, 0
      %228 = vst.msk [vmem:[#allocation2 + $0x58] sm:$0xf] %vm204, 0
      %229 = vst.msk [vmem:[#allocation2 + $0x5c] sm:$0x1] %vm207, 0
      %230 = vst.msk [vmem:[#allocation2 + $0x60] sm:$0xf] %vm204, 0
      %231 = vst.msk [vmem:[#allocation2 + $0x64] sm:$0xf] %vm204, 0
      %232 = vst.msk [vmem:[#allocation2 + $0x68] sm:$0x1] %vm207, 0
      %233 = vst.msk [vmem:[#allocation2 + $0x6c] sm:$0xf] %vm204, 0
      %234 = vst.msk [vmem:[#allocation2 + $0x70] sm:$0xf] %vm204, 0
      %235 = vst.msk [vmem:[#allocation2 + $0x74] sm:$0x1] %vm207, 0
      %236 = vst.msk [vmem:[#allocation2 + $0x78] sm:$0xf] %vm204, 0
      %237 = vst.msk [vmem:[#allocation2 + $0x7c] sm:$0xf] %vm204, 0
      %238 = vst.msk [vmem:[#allocation2 + $0x80] sm:$0x1] %vm207, 0
      %239 = vst.msk [vmem:[#allocation2 + $0x84] sm:$0xf] %vm204, 0
      %240 = vst.msk [vmem:[#allocation2 + $0x88] sm:$0xf] %vm204, 0
      %241 = vst.msk [vmem:[#allocation2 + $0x8c] sm:$0x1] %vm207, 0
      %242 = vst.msk [vmem:[#allocation2 + $0x90] sm:$0xf] %vm204, 0
      %243 = vst.msk [vmem:[#allocation2 + $0x94] sm:$0xf] %vm204, 0
      %244 = vst.msk [vmem:[#allocation2 + $0x98] sm:$0x1] %vm207, 0
      %245 = vst.msk [vmem:[#allocation2 + $0x9c] sm:$0xf] %vm204, 0
      %246 = vst.msk [vmem:[#allocation2 + $0xa0] sm:$0xf] %vm204, 0
      %247 = vst.msk [vmem:[#allocation2 + $0xa4] sm:$0x1] %vm207, 0
      %248 = vst.msk [vmem:[#allocation2 + $0xa8] sm:$0xf] %vm204, 0
      %249 = vst.msk [vmem:[#allocation2 + $0xac] sm:$0xf] %vm204, 0
      %250 = vst.msk [vmem:[#allocation2 + $0xb0] sm:$0x1] %vm207, 0
      %251 = vst.msk [vmem:[#allocation2 + $0xb4] sm:$0xf] %vm204, 0
      %252 = vst.msk [vmem:[#allocation2 + $0xb8] sm:$0xf] %vm204, 0
      %253 = vst.msk [vmem:[#allocation2 + $0xbc] sm:$0x1] %vm207, 0
      %254 = vst.msk [vmem:[#allocation2 + $0xc0] sm:$0xf] %vm204, 0
      %255 = vst.msk [vmem:[#allocation2 + $0xc4] sm:$0xf] %vm204, 0
      %256 = vst.msk [vmem:[#allocation2 + $0xc8] sm:$0x1] %vm207, 0
      %257 = vst.msk [vmem:[#allocation2 + $0xcc] sm:$0xf] %vm204, 0
      %258 = vst.msk [vmem:[#allocation2 + $0xd0] sm:$0xf] %vm204, 0
      %259 = vst.msk [vmem:[#allocation2 + $0xd4] sm:$0x1] %vm207, 0
      %260 = vst.msk [vmem:[#allocation2 + $0xd8] sm:$0xf] %vm204, 0
      %261 = vst.msk [vmem:[#allocation2 + $0xdc] sm:$0xf] %vm204, 0
      %262 = vst.msk [vmem:[#allocation2 + $0xe0] sm:$0x1] %vm207, 0
      %263 = vst.msk [vmem:[#allocation2 + $0xe4] sm:$0xf] %vm204, 0
      %264 = vst.msk [vmem:[#allocation2 + $0xe8] sm:$0xf] %vm204, 0
      %265 = vst.msk [vmem:[#allocation2 + $0xec] sm:$0x1] %vm207, 0
      %v266 = vld [vmem:[%s196] sm:$0xf]
      %v267 = vld [vmem:[%s196 + $0x4] sm:$0xf]
      %v268 = vld [vmem:[%s196 + $0x8] sm:$0xf]
      %v269 = vld [vmem:[%s196 + $0xc] sm:$0xf]
      %v270 = vld [vmem:[%s196 + $0x10] sm:$0xf]
      %v271 = vld [vmem:[%s196 + $0x14] sm:$0xf]
      %v272 = vld [vmem:[%s196 + $0x18] sm:$0xf]
      %v273 = vld [vmem:[%s196 + $0x1c] sm:$0xf]
      %v274 = vld [vmem:[%s196 + $0x20] sm:$0xf]
      %v275 = vld [vmem:[%s196 + $0x24] sm:$0xf]
      %v276 = vld [vmem:[%s196 + $0x28] sm:$0xf]
      %v277 = vld [vmem:[%s196 + $0x2c] sm:$0xf]
      %v278 = vld [vmem:[%s196 + $0x30] sm:$0xf]
      %v279 = vld [vmem:[%s196 + $0x34] sm:$0xf]
      %v280 = vld [vmem:[%s196 + $0x38] sm:$0xf]
      %v281 = vld [vmem:[%s196 + $0x3c] sm:$0xf]
      %v282 = vld [vmem:[%s196 + $0x40] sm:$0xf]
      %v283 = vld [vmem:[%s196 + $0x44] sm:$0xf]
      %v284 = vld [vmem:[%s196 + $0x48] sm:$0xf]
      %v285 = vld [vmem:[%s196 + $0x4c] sm:$0xf]
      %v286 = vld [vmem:[%s196 + $0x50] sm:$0xf]
      %v287 = vld [vmem:[%s196 + $0x54] sm:$0xf]
      %v288 = vld [vmem:[%s196 + $0x58] sm:$0xf]
      %v289 = vld [vmem:[%s196 + $0x5c] sm:$0xf]
      %v290 = vld [vmem:[%s196 + $0x60] sm:$0xf]
      %v291 = vld [vmem:[%s196 + $0x64] sm:$0xf]
      %v292 = vld [vmem:[%s196 + $0x68] sm:$0xf]
      %v293 = vld [vmem:[%s196 + $0x6c] sm:$0xf]
      %v294 = vld [vmem:[%s196 + $0x70] sm:$0xf]
      %v295 = vld [vmem:[%s196 + $0x74] sm:$0xf]
      %v296 = vld [vmem:[%s196 + $0x78] sm:$0xf]
      %v297 = vld [vmem:[%s196 + $0x7c] sm:$0xf]
      %vm298 = vsmask.f32 256
      %vm299 = vsmask.f32 4368
      %vm300 = vmor %vm298, %vm299
      %v302 = vshrl.u32 %v266, 16
      %v304 = vrot.slane %v302, 7
      %v305 = vshll.u32 %v266, 16
      %v307 = vor.u32 %v304, %v305
      %v308 = vrot.slane %v304, 4
      %v310 = vshrl.u32 %v267, 16
      %v312 = vrot.slane %v310, 7
      %v313 = vshll.u32 %v267, 16
      %v315 = vor.u32 %v312, %v313
      %v316 = vsel %vm300, %v308, %v315
      %v317 = vrot.slane %v312, 4
      %v319 = vshrl.u32 %v268, 16
      %v321 = vrot.slane %v319, 7
      %v322 = vshll.u32 %v268, 16
      %v324 = vor.u32 %v321, %v322
      %v325 = vrot.slane %v321, 4
      %v327 = vshrl.u32 %v269, 16
      %v329 = vrot.slane %v327, 7
      %v330 = vshll.u32 %v269, 16
      %v332 = vor.u32 %v329, %v330
      %v333 = vsel %vm300, %v325, %v332
      %v334 = vrot.slane %v329, 4
      %v336 = vshrl.u32 %v270, 16
      %v338 = vrot.slane %v336, 7
      %v339 = vshll.u32 %v270, 16
      %v341 = vor.u32 %v338, %v339
      %v342 = vrot.slane %v338, 4
      %v344 = vshrl.u32 %v271, 16
      %v346 = vrot.slane %v344, 7
      %v347 = vshll.u32 %v271, 16
      %v349 = vor.u32 %v346, %v347
      %v350 = vsel %vm300, %v342, %v349
      %v351 = vrot.slane %v346, 4
      %v353 = vshrl.u32 %v272, 16
      %v355 = vrot.slane %v353, 7
      %v356 = vshll.u32 %v272, 16
      %v358 = vor.u32 %v355, %v356
      %v359 = vrot.slane %v355, 4
      %v361 = vshrl.u32 %v273, 16
      %v363 = vrot.slane %v361, 7
      %v364 = vshll.u32 %v273, 16
      %v366 = vor.u32 %v363, %v364
      %v367 = vsel %vm300, %v359, %v366
      %v368 = vrot.slane %v363, 4
      %v370 = vshrl.u32 %v274, 16
      %v372 = vrot.slane %v370, 7
      %v373 = vshll.u32 %v274, 16
      %v375 = vor.u32 %v372, %v373
      %v376 = vrot.slane %v372, 4
      %v378 = vshrl.u32 %v275, 16
      %v380 = vrot.slane %v378, 7
      %v381 = vshll.u32 %v275, 16
      %v383 = vor.u32 %v380, %v381
      %v384 = vsel %vm300, %v376, %v383
      %v385 = vrot.slane %v380, 4
      %v387 = vshrl.u32 %v276, 16
      %v389 = vrot.slane %v387, 7
      %v390 = vshll.u32 %v276, 16
      %v392 = vor.u32 %v389, %v390
      %v393 = vrot.slane %v389, 4
      %v395 = vshrl.u32 %v277, 16
      %v397 = vrot.slane %v395, 7
      %v398 = vshll.u32 %v277, 16
      %v400 = vor.u32 %v397, %v398
      %v401 = vsel %vm300, %v393, %v400
      %v402 = vrot.slane %v397, 4
      %v404 = vshrl.u32 %v278, 16
      %v406 = vrot.slane %v404, 7
      %v407 = vshll.u32 %v278, 16
      %v409 = vor.u32 %v406, %v407
      %v410 = vrot.slane %v406, 4
      %v412 = vshrl.u32 %v279, 16
      %v414 = vrot.slane %v412, 7
      %v415 = vshll.u32 %v279, 16
      %v417 = vor.u32 %v414, %v415
      %v418 = vsel %vm300, %v410, %v417
      %v419 = vrot.slane %v414, 4
      %v421 = vshrl.u32 %v280, 16
      %v423 = vrot.slane %v421, 7
      %v424 = vshll.u32 %v280, 16
      %v426 = vor.u32 %v423, %v424
      %v427 = vrot.slane %v423, 4
      %v429 = vshrl.u32 %v281, 16
      %v431 = vrot.slane %v429, 7
      %v432 = vshll.u32 %v281, 16
      %v434 = vor.u32 %v431, %v432
      %v435 = vsel %vm300, %v427, %v434
      %v436 = vrot.slane %v431, 4
      %v438 = vshrl.u32 %v282, 16
      %v440 = vrot.slane %v438, 7
      %v441 = vshll.u32 %v282, 16
      %v443 = vor.u32 %v440, %v441
      %v444 = vrot.slane %v440, 4
      %v446 = vshrl.u32 %v283, 16
      %v448 = vrot.slane %v446, 7
      %v449 = vshll.u32 %v283, 16
      %v451 = vor.u32 %v448, %v449
      %v452 = vsel %vm300, %v444, %v451
      %v453 = vrot.slane %v448, 4
      %v455 = vshrl.u32 %v284, 16
      %v457 = vrot.slane %v455, 7
      %v458 = vshll.u32 %v284, 16
      %v460 = vor.u32 %v457, %v458
      %v461 = vrot.slane %v457, 4
      %v463 = vshrl.u32 %v285, 16
      %v465 = vrot.slane %v463, 7
      %v466 = vshll.u32 %v285, 16
      %v468 = vor.u32 %v465, %v466
      %v469 = vsel %vm300, %v461, %v468
      %v470 = vrot.slane %v465, 4
      %v472 = vshrl.u32 %v286, 16
      %v474 = vrot.slane %v472, 7
      %v475 = vshll.u32 %v286, 16
      %v477 = vor.u32 %v474, %v475
      %v478 = vrot.slane %v474, 4
      %v480 = vshrl.u32 %v287, 16
      %v482 = vrot.slane %v480, 7
      %v483 = vshll.u32 %v287, 16
      %v485 = vor.u32 %v482, %v483
      %v486 = vsel %vm300, %v478, %v485
      %v487 = vrot.slane %v482, 4
      %v489 = vshrl.u32 %v288, 16
      %v491 = vrot.slane %v489, 7
      %v492 = vshll.u32 %v288, 16
      %v494 = vor.u32 %v491, %v492
      %v495 = vrot.slane %v491, 4
      %v497 = vshrl.u32 %v289, 16
      %v499 = vrot.slane %v497, 7
      %v500 = vshll.u32 %v289, 16
      %v502 = vor.u32 %v499, %v500
      %v503 = vsel %vm300, %v495, %v502
      %v504 = vrot.slane %v499, 4
      %v506 = vshrl.u32 %v290, 16
      %v508 = vrot.slane %v506, 7
      %v509 = vshll.u32 %v290, 16
      %v511 = vor.u32 %v508, %v509
      %v512 = vrot.slane %v508, 4
      %v514 = vshrl.u32 %v291, 16
      %v516 = vrot.slane %v514, 7
      %v517 = vshll.u32 %v291, 16
      %v519 = vor.u32 %v516, %v517
      %v520 = vsel %vm300, %v512, %v519
      %v521 = vrot.slane %v516, 4
      %v523 = vshrl.u32 %v292, 16
      %v525 = vrot.slane %v523, 7
      %v526 = vshll.u32 %v292, 16
      %v528 = vor.u32 %v525, %v526
      %v529 = vrot.slane %v525, 4
      %v531 = vshrl.u32 %v293, 16
      %v533 = vrot.slane %v531, 7
      %v534 = vshll.u32 %v293, 16
      %v536 = vor.u32 %v533, %v534
      %v537 = vsel %vm300, %v529, %v536
      %v538 = vrot.slane %v533, 4
      %v540 = vshrl.u32 %v294, 16
      %v542 = vrot.slane %v540, 7
      %v543 = vshll.u32 %v294, 16
      %v545 = vor.u32 %v542, %v543
      %v546 = vrot.slane %v542, 4
      %v548 = vshrl.u32 %v295, 16
      %v550 = vrot.slane %v548, 7
      %v551 = vshll.u32 %v295, 16
      %v553 = vor.u32 %v550, %v551
      %v554 = vsel %vm300, %v546, %v553
      %v555 = vrot.slane %v550, 4
      %v557 = vshrl.u32 %v296, 16
      %v559 = vrot.slane %v557, 7
      %v560 = vshll.u32 %v296, 16
      %v562 = vor.u32 %v559, %v560
      %v563 = vrot.slane %v559, 4
      %v565 = vshrl.u32 %v297, 16
      %v567 = vrot.slane %v565, 7
      %v568 = vshll.u32 %v297, 16
      %v570 = vor.u32 %v567, %v568
      %v571 = vsel %vm300, %v563, %v570
      %v572 = vrot.slane %v567, 4
      %s621 = scalar_lea.vmem [#allocation2], 12
      %vm622 = vcmask 584704
      %vm623 = vsmask.f32 7938
      %vm624 = vmand %vm622, %vm623
      %v625 = vld [vmem:[%s621] sm:$0xf]
      %v626 = vsel %vm624, %v307, %v625
      %627 = vst [vmem:[%s621] sm:$0xf] %v626
      %628 = vst.msk [vmem:[%s621 + $0x4] sm:$0xf] %vm204, %v316
      %vm629 = vcmask 581632
      %vm630 = vmand %vm629, %vm298
      %v631 = vld [vmem:[%s621 + $0x8] sm:$0x1]
      %v632 = vsel %vm630, %v317, %v631
      %633 = vst [vmem:[%s621 + $0x8] sm:$0x1] %v632
      %v634 = vld [vmem:[%s621 + $0xc] sm:$0xf]
      %v635 = vsel %vm624, %v324, %v634
      %636 = vst [vmem:[%s621 + $0xc] sm:$0xf] %v635
      %637 = vst.msk [vmem:[%s621 + $0x10] sm:$0xf] %vm204, %v333
      %v638 = vld [vmem:[%s621 + $0x14] sm:$0x1]
      %v639 = vsel %vm630, %v334, %v638
      %640 = vst [vmem:[%s621 + $0x14] sm:$0x1] %v639
      %v641 = vld [vmem:[%s621 + $0x18] sm:$0xf]
      %v642 = vsel %vm624, %v341, %v641
      %643 = vst [vmem:[%s621 + $0x18] sm:$0xf] %v642
      %644 = vst.msk [vmem:[%s621 + $0x1c] sm:$0xf] %vm204, %v350
      %v645 = vld [vmem:[%s621 + $0x20] sm:$0x1]
      %v646 = vsel %vm630, %v351, %v645
      %647 = vst [vmem:[%s621 + $0x20] sm:$0x1] %v646
      %v648 = vld [vmem:[%s621 + $0x24] sm:$0xf]
      %v649 = vsel %vm624, %v358, %v648
      %650 = vst [vmem:[%s621 + $0x24] sm:$0xf] %v649
      %651 = vst.msk [vmem:[%s621 + $0x28] sm:$0xf] %vm204, %v367
      %v652 = vld [vmem:[%s621 + $0x2c] sm:$0x1]
      %v653 = vsel %vm630, %v368, %v652
      %654 = vst [vmem:[%s621 + $0x2c] sm:$0x1] %v653
      %v655 = vld [vmem:[%s621 + $0x30] sm:$0xf]
      %v656 = vsel %vm624, %v375, %v655
      %657 = vst [vmem:[%s621 + $0x30] sm:$0xf] %v656
      %658 = vst.msk [vmem:[%s621 + $0x34] sm:$0xf] %vm204, %v384
      %v659 = vld [vmem:[%s621 + $0x38] sm:$0x1]
      %v660 = vsel %vm630, %v385, %v659
      %661 = vst [vmem:[%s621 + $0x38] sm:$0x1] %v660
      %v662 = vld [vmem:[%s621 + $0x3c] sm:$0xf]
      %v663 = vsel %vm624, %v392, %v662
      %664 = vst [vmem:[%s621 + $0x3c] sm:$0xf] %v663
      %665 = vst.msk [vmem:[%s621 + $0x40] sm:$0xf] %vm204, %v401
      %v666 = vld [vmem:[%s621 + $0x44] sm:$0x1]
      %v667 = vsel %vm630, %v402, %v666
      %668 = vst [vmem:[%s621 + $0x44] sm:$0x1] %v667
      %v669 = vld [vmem:[%s621 + $0x48] sm:$0xf]
      %v670 = vsel %vm624, %v409, %v669
      %671 = vst [vmem:[%s621 + $0x48] sm:$0xf] %v670
      %672 = vst.msk [vmem:[%s621 + $0x4c] sm:$0xf] %vm204, %v418
      %v673 = vld [vmem:[%s621 + $0x50] sm:$0x1]
      %v674 = vsel %vm630, %v419, %v673
      %675 = vst [vmem:[%s621 + $0x50] sm:$0x1] %v674
      %v676 = vld [vmem:[%s621 + $0x54] sm:$0xf]
      %v677 = vsel %vm624, %v426, %v676
      %678 = vst [vmem:[%s621 + $0x54] sm:$0xf] %v677
      %679 = vst.msk [vmem:[%s621 + $0x58] sm:$0xf] %vm204, %v435
      %v680 = vld [vmem:[%s621 + $0x5c] sm:$0x1]
      %v681 = vsel %vm630, %v436, %v680
      %682 = vst [vmem:[%s621 + $0x5c] sm:$0x1] %v681
      %v683 = vld [vmem:[%s621 + $0x78] sm:$0xf]
      %v684 = vsel %vm624, %v443, %v683
      %685 = vst [vmem:[%s621 + $0x78] sm:$0xf] %v684
      %686 = vst.msk [vmem:[%s621 + $0x7c] sm:$0xf] %vm204, %v452
      %v687 = vld [vmem:[%s621 + $0x80] sm:$0x1]
      %v688 = vsel %vm630, %v453, %v687
      %689 = vst [vmem:[%s621 + $0x80] sm:$0x1] %v688
      %v690 = vld [vmem:[%s621 + $0x84] sm:$0xf]
      %v691 = vsel %vm624, %v460, %v690
      %692 = vst [vmem:[%s621 + $0x84] sm:$0xf] %v691
      %693 = vst.msk [vmem:[%s621 + $0x88] sm:$0xf] %vm204, %v469
      %v694 = vld [vmem:[%s621 + $0x8c] sm:$0x1]
      %v695 = vsel %vm630, %v470, %v694
      %696 = vst [vmem:[%s621 + $0x8c] sm:$0x1] %v695
      %v697 = vld [vmem:[%s621 + $0x90] sm:$0xf]
      %v698 = vsel %vm624, %v477, %v697
      %699 = vst [vmem:[%s621 + $0x90] sm:$0xf] %v698
      %700 = vst.msk [vmem:[%s621 + $0x94] sm:$0xf] %vm204, %v486
      %v701 = vld [vmem:[%s621 + $0x98] sm:$0x1]
      %v702 = vsel %vm630, %v487, %v701
      %703 = vst [vmem:[%s621 + $0x98] sm:$0x1] %v702
      %v704 = vld [vmem:[%s621 + $0x9c] sm:$0xf]
      %v705 = vsel %vm624, %v494, %v704
      %706 = vst [vmem:[%s621 + $0x9c] sm:$0xf] %v705
      %707 = vst.msk [vmem:[%s621 + $0xa0] sm:$0xf] %vm204, %v503
      %v708 = vld [vmem:[%s621 + $0xa4] sm:$0x1]
      %v709 = vsel %vm630, %v504, %v708
      %710 = vst [vmem:[%s621 + $0xa4] sm:$0x1] %v709
      %v711 = vld [vmem:[%s621 + $0xa8] sm:$0xf]
      %v712 = vsel %vm624, %v511, %v711
      %713 = vst [vmem:[%s621 + $0xa8] sm:$0xf] %v712
      %714 = vst.msk [vmem:[%s621 + $0xac] sm:$0xf] %vm204, %v520
      %v715 = vld [vmem:[%s621 + $0xb0] sm:$0x1]
      %v716 = vsel %vm630, %v521, %v715
      %717 = vst [vmem:[%s621 + $0xb0] sm:$0x1] %v716
      %v718 = vld [vmem:[%s621 + $0xb4] sm:$0xf]
      %v719 = vsel %vm624, %v528, %v718
      %720 = vst [vmem:[%s621 + $0xb4] sm:$0xf] %v719
      %721 = vst.msk [vmem:[%s621 + $0xb8] sm:$0xf] %vm204, %v537
      %v722 = vld [vmem:[%s621 + $0xbc] sm:$0x1]
      %v723 = vsel %vm630, %v538, %v722
      %724 = vst [vmem:[%s621 + $0xbc] sm:$0x1] %v723
      %v725 = vld [vmem:[%s621 + $0xc0] sm:$0xf]
      %v726 = vsel %vm624, %v545, %v725
      %727 = vst [vmem:[%s621 + $0xc0] sm:$0xf] %v726
      %728 = vst.msk [vmem:[%s621 + $0xc4] sm:$0xf] %vm204, %v554
      %v729 = vld [vmem:[%s621 + $0xc8] sm:$0x1]
      %v730 = vsel %vm630, %v555, %v729
      %731 = vst [vmem:[%s621 + $0xc8] sm:$0x1] %v730
      %v732 = vld [vmem:[%s621 + $0xcc] sm:$0xf]
      %v733 = vsel %vm624, %v562, %v732
      %734 = vst [vmem:[%s621 + $0xcc] sm:$0xf] %v733
      %735 = vst.msk [vmem:[%s621 + $0xd0] sm:$0xf] %vm204, %v571
      %v736 = vld [vmem:[%s621 + $0xd4] sm:$0x1]
      %v737 = vsel %vm630, %v572, %v736
      %738 = vst [vmem:[%s621 + $0xd4] sm:$0x1] %v737
      %v739 = vld [vmem:[#allocation2] sm:$0xf]
      %v740 = vld [vmem:[#allocation2 + $0x4] sm:$0xf]
      %v741 = vld [vmem:[#allocation2 + $0xc] sm:$0xf]
      %v742 = vld [vmem:[#allocation2 + $0x10] sm:$0xf]
      %v743 = vld [vmem:[#allocation2 + $0x18] sm:$0xf]
      %v744 = vld [vmem:[#allocation2 + $0x1c] sm:$0xf]
      %v745 = vld [vmem:[#allocation2 + $0x24] sm:$0xf]
      %v746 = vld [vmem:[#allocation2 + $0x28] sm:$0xf]
      %v747 = vld [vmem:[#allocation2 + $0x30] sm:$0xf]
      %v748 = vld [vmem:[#allocation2 + $0x34] sm:$0xf]
      %v749 = vld [vmem:[#allocation2 + $0x3c] sm:$0xf]
      %v750 = vld [vmem:[#allocation2 + $0x40] sm:$0xf]
      %v751 = vld [vmem:[#allocation2 + $0x48] sm:$0xf]
      %v752 = vld [vmem:[#allocation2 + $0x4c] sm:$0xf]
      %v753 = vld [vmem:[#allocation2 + $0x54] sm:$0xf]
      %v754 = vld [vmem:[#allocation2 + $0x58] sm:$0xf]
      %v755 = vld [vmem:[#allocation2 + $0x78] sm:$0xf]
      %v756 = vld [vmem:[#allocation2 + $0x7c] sm:$0xf]
      %v757 = vld [vmem:[#allocation2 + $0x84] sm:$0xf]
      %v758 = vld [vmem:[#allocation2 + $0x88] sm:$0xf]
      %v759 = vld [vmem:[#allocation2 + $0x90] sm:$0xf]
      %v760 = vld [vmem:[#allocation2 + $0x94] sm:$0xf]
      %v761 = vld [vmem:[#allocation2 + $0x9c] sm:$0xf]
      %v762 = vld [vmem:[#allocation2 + $0xa0] sm:$0xf]
      %v763 = vld [vmem:[#allocation2 + $0xa8] sm:$0xf]
      %v764 = vld [vmem:[#allocation2 + $0xac] sm:$0xf]
      %v765 = vld [vmem:[#allocation2 + $0xb4] sm:$0xf]
      %v766 = vld [vmem:[#allocation2 + $0xb8] sm:$0xf]
      %v767 = vld [vmem:[#allocation2 + $0xc0] sm:$0xf]
      %v768 = vld [vmem:[#allocation2 + $0xc4] sm:$0xf]
      %v769 = vld [vmem:[#allocation2 + $0xcc] sm:$0xf]
      %v770 = vld [vmem:[#allocation2 + $0xd0] sm:$0xf]
      %v771 = vld [vmem:[%s1] sm:$0xff]
      %v772 = vld [vmem:[%s1 + $0x8] sm:$0xff]
      %v773 = vld [vmem:[%s1 + $0x10] sm:$0xff]
      %v774 = vld [vmem:[%s1 + $0x18] sm:$0xff]
      %v775 = vld [vmem:[%s1 + $0x20] sm:$0xff]
      %v776 = vld [vmem:[%s1 + $0x28] sm:$0xff]
      %v777 = vld [vmem:[%s1 + $0x30] sm:$0xff]
      %v778 = vld [vmem:[%s1 + $0x38] sm:$0xff]
      %v779 = vld [vmem:[%s1 + $0x40] sm:$0xff]
      %v780 = vld [vmem:[#allocation2 + $0x8] sm:$0x1]
      %v781 = vld [vmem:[#allocation2 + $0x14] sm:$0x1]
      %v782 = vld [vmem:[#allocation2 + $0x20] sm:$0x1]
      %v783 = vld [vmem:[#allocation2 + $0x2c] sm:$0x1]
      %v784 = vld [vmem:[#allocation2 + $0x38] sm:$0x1]
      %v785 = vld [vmem:[#allocation2 + $0x44] sm:$0x1]
      %v786 = vld [vmem:[#allocation2 + $0x50] sm:$0x1]
      %v787 = vld [vmem:[#allocation2 + $0x5c] sm:$0x1]
      %v788 = vld [vmem:[#allocation2 + $0x80] sm:$0x1]
      %v789 = vld [vmem:[#allocation2 + $0x8c] sm:$0x1]
      %v790 = vld [vmem:[#allocation2 + $0x98] sm:$0x1]
      %v791 = vld [vmem:[#allocation2 + $0xa4] sm:$0x1]
      %v792 = vld [vmem:[#allocation2 + $0xb0] sm:$0x1]
      %v793 = vld [vmem:[#allocation2 + $0xbc] sm:$0x1]
      %v794 = vld [vmem:[#allocation2 + $0xc8] sm:$0x1]
      %v795 = vld [vmem:[#allocation2 + $0xd4] sm:$0x1]
      %vm796 = vsmask.f32 3328
      %vm797 = vsmask.f32 7440
      %vm798 = vmor %vm796, %vm797
      %v800 = vshrl.u32 %v739, 16
      %v802 = vrot.slane %v800, 4
      %v803 = vshll.u32 %v739, 16
      %v805 = vrot.slane %v803, 5
      %v806 = vor.u32 %v802, %v805
      %v807 = vrot.slane %v806, 4
      %v809 = vshll.u32 %v740, 16
      %v811 = vrot.slane %v809, 5
      %v812 = vsel %vm798, %v807, %v811
      %v813 = vshrl.u32 %v740, 16
      %v815 = vrot.slane %v813, 4
      %v816 = vor.u32 %v815, %v811
      %v817 = vrot.slane %v816, 4
      %v819 = vshll.u32 %v780, 16
      %v821 = vrot.slane %v819, 5
      %v822 = vsel %vm798, %v817, %v821
      %v824 = vshrl.u32 %v741, 16
      %v826 = vrot.slane %v824, 4
      %v827 = vshll.u32 %v741, 16
      %v829 = vrot.slane %v827, 5
      %v830 = vor.u32 %v826, %v829
      %v831 = vrot.slane %v830, 4
      %v833 = vshll.u32 %v742, 16
      %v835 = vrot.slane %v833, 5
      %v836 = vsel %vm798, %v831, %v835
      %v837 = vshrl.u32 %v742, 16
      %v839 = vrot.slane %v837, 4
      %v840 = vor.u32 %v839, %v835
      %v841 = vrot.slane %v840, 4
      %v843 = vshll.u32 %v781, 16
      %v845 = vrot.slane %v843, 5
      %v846 = vsel %vm798, %v841, %v845
      %v848 = vshrl.u32 %v743, 16
      %v850 = vrot.slane %v848, 4
      %v851 = vshll.u32 %v743, 16
      %v853 = vrot.slane %v851, 5
      %v854 = vor.u32 %v850, %v853
      %v855 = vrot.slane %v854, 4
      %v857 = vshll.u32 %v744, 16
      %v859 = vrot.slane %v857, 5
      %v860 = vsel %vm798, %v855, %v859
      %v861 = vshrl.u32 %v744, 16
      %v863 = vrot.slane %v861, 4
      %v864 = vor.u32 %v863, %v859
      %v865 = vrot.slane %v864, 4
      %v867 = vshll.u32 %v782, 16
      %v869 = vrot.slane %v867, 5
      %v870 = vsel %vm798, %v865, %v869
      %v872 = vshrl.u32 %v745, 16
      %v874 = vrot.slane %v872, 4
      %v875 = vshll.u32 %v745, 16
      %v877 = vrot.slane %v875, 5
      %v878 = vor.u32 %v874, %v877
      %v879 = vrot.slane %v878, 4
      %v881 = vshll.u32 %v746, 16
      %v883 = vrot.slane %v881, 5
      %v884 = vsel %vm798, %v879, %v883
      %v885 = vshrl.u32 %v746, 16
      %v887 = vrot.slane %v885, 4
      %v888 = vor.u32 %v887, %v883
      %v889 = vrot.slane %v888, 4
      %v891 = vshll.u32 %v783, 16
      %v893 = vrot.slane %v891, 5
      %v894 = vsel %vm798, %v889, %v893
      %v896 = vshrl.u32 %v747, 16
      %v898 = vrot.slane %v896, 4
      %v899 = vshll.u32 %v747, 16
      %v901 = vrot.slane %v899, 5
      %v902 = vor.u32 %v898, %v901
      %v903 = vrot.slane %v902, 4
      %v905 = vshll.u32 %v748, 16
      %v907 = vrot.slane %v905, 5
      %v908 = vsel %vm798, %v903, %v907
      %v909 = vshrl.u32 %v748, 16
      %v911 = vrot.slane %v909, 4
      %v912 = vor.u32 %v911, %v907
      %v913 = vrot.slane %v912, 4
      %v915 = vshll.u32 %v784, 16
      %v917 = vrot.slane %v915, 5
      %v918 = vsel %vm798, %v913, %v917
      %v920 = vshrl.u32 %v749, 16
      %v922 = vrot.slane %v920, 4
      %v923 = vshll.u32 %v749, 16
      %v925 = vrot.slane %v923, 5
      %v926 = vor.u32 %v922, %v925
      %v927 = vrot.slane %v926, 4
      %v929 = vshll.u32 %v750, 16
      %v931 = vrot.slane %v929, 5
      %v932 = vsel %vm798, %v927, %v931
      %v933 = vshrl.u32 %v750, 16
      %v935 = vrot.slane %v933, 4
      %v936 = vor.u32 %v935, %v931
      %v937 = vrot.slane %v936, 4
      %v939 = vshll.u32 %v785, 16
      %v941 = vrot.slane %v939, 5
      %v942 = vsel %vm798, %v937, %v941
      %v944 = vshrl.u32 %v751, 16
      %v946 = vrot.slane %v944, 4
      %v947 = vshll.u32 %v751, 16
      %v949 = vrot.slane %v947, 5
      %v950 = vor.u32 %v946, %v949
      %v951 = vrot.slane %v950, 4
      %v953 = vshll.u32 %v752, 16
      %v955 = vrot.slane %v953, 5
      %v956 = vsel %vm798, %v951, %v955
      %v957 = vshrl.u32 %v752, 16
      %v959 = vrot.slane %v957, 4
      %v960 = vor.u32 %v959, %v955
      %v961 = vrot.slane %v960, 4
      %v963 = vshll.u32 %v786, 16
      %v965 = vrot.slane %v963, 5
      %v966 = vsel %vm798, %v961, %v965
      %v968 = vshrl.u32 %v753, 16
      %v970 = vrot.slane %v968, 4
      %v971 = vshll.u32 %v753, 16
      %v973 = vrot.slane %v971, 5
      %v974 = vor.u32 %v970, %v973
      %v975 = vrot.slane %v974, 4
      %v977 = vshll.u32 %v754, 16
      %v979 = vrot.slane %v977, 5
      %v980 = vsel %vm798, %v975, %v979
      %v981 = vshrl.u32 %v754, 16
      %v983 = vrot.slane %v981, 4
      %v984 = vor.u32 %v983, %v979
      %v985 = vrot.slane %v984, 4
      %v987 = vshll.u32 %v787, 16
      %v989 = vrot.slane %v987, 5
      %v990 = vsel %vm798, %v985, %v989
      %v992 = vshrl.u32 %v755, 16
      %v994 = vrot.slane %v992, 4
      %v995 = vshll.u32 %v755, 16
      %v997 = vrot.slane %v995, 5
      %v998 = vor.u32 %v994, %v997
      %v999 = vrot.slane %v998, 4
      %v1001 = vshll.u32 %v756, 16
      %v1003 = vrot.slane %v1001, 5
      %v1004 = vsel %vm798, %v999, %v1003
      %v1005 = vshrl.u32 %v756, 16
      %v1007 = vrot.slane %v1005, 4
      %v1008 = vor.u32 %v1007, %v1003
      %v1009 = vrot.slane %v1008, 4
      %v1011 = vshll.u32 %v788, 16
      %v1013 = vrot.slane %v1011, 5
      %v1014 = vsel %vm798, %v1009, %v1013
      %v1016 = vshrl.u32 %v757, 16
      %v1018 = vrot.slane %v1016, 4
      %v1019 = vshll.u32 %v757, 16
      %v1021 = vrot.slane %v1019, 5
      %v1022 = vor.u32 %v1018, %v1021
      %v1023 = vrot.slane %v1022, 4
      %v1025 = vshll.u32 %v758, 16
      %v1027 = vrot.slane %v1025, 5
      %v1028 = vsel %vm798, %v1023, %v1027
      %v1029 = vshrl.u32 %v758, 16
      %v1031 = vrot.slane %v1029, 4
      %v1032 = vor.u32 %v1031, %v1027
      %v1033 = vrot.slane %v1032, 4
      %v1035 = vshll.u32 %v789, 16
      %v1037 = vrot.slane %v1035, 5
      %v1038 = vsel %vm798, %v1033, %v1037
      %v1040 = vshrl.u32 %v759, 16
      %v1042 = vrot.slane %v1040, 4
      %v1043 = vshll.u32 %v759, 16
      %v1045 = vrot.slane %v1043, 5
      %v1046 = vor.u32 %v1042, %v1045
      %v1047 = vrot.slane %v1046, 4
      %v1049 = vshll.u32 %v760, 16
      %v1051 = vrot.slane %v1049, 5
      %v1052 = vsel %vm798, %v1047, %v1051
      %v1053 = vshrl.u32 %v760, 16
      %v1055 = vrot.slane %v1053, 4
      %v1056 = vor.u32 %v1055, %v1051
      %v1057 = vrot.slane %v1056, 4
      %v1059 = vshll.u32 %v790, 16
      %v1061 = vrot.slane %v1059, 5
      %v1062 = vsel %vm798, %v1057, %v1061
      %v1064 = vshrl.u32 %v761, 16
      %v1066 = vrot.slane %v1064, 4
      %v1067 = vshll.u32 %v761, 16
      %v1069 = vrot.slane %v1067, 5
      %v1070 = vor.u32 %v1066, %v1069
      %v1071 = vrot.slane %v1070, 4
      %v1073 = vshll.u32 %v762, 16
      %v1075 = vrot.slane %v1073, 5
      %v1076 = vsel %vm798, %v1071, %v1075
      %v1077 = vshrl.u32 %v762, 16
      %v1079 = vrot.slane %v1077, 4
      %v1080 = vor.u32 %v1079, %v1075
      %v1081 = vrot.slane %v1080, 4
      %v1083 = vshll.u32 %v791, 16
      %v1085 = vrot.slane %v1083, 5
      %v1086 = vsel %vm798, %v1081, %v1085
      %v1088 = vshrl.u32 %v763, 16
      %v1090 = vrot.slane %v1088, 4
      %v1091 = vshll.u32 %v763, 16
      %v1093 = vrot.slane %v1091, 5
      %v1094 = vor.u32 %v1090, %v1093
      %v1095 = vrot.slane %v1094, 4
      %v1097 = vshll.u32 %v764, 16
      %v1099 = vrot.slane %v1097, 5
      %v1100 = vsel %vm798, %v1095, %v1099
      %v1101 = vshrl.u32 %v764, 16
      %v1103 = vrot.slane %v1101, 4
      %v1104 = vor.u32 %v1103, %v1099
      %v1105 = vrot.slane %v1104, 4
      %v1107 = vshll.u32 %v792, 16
      %v1109 = vrot.slane %v1107, 5
      %v1110 = vsel %vm798, %v1105, %v1109
      %v1112 = vshrl.u32 %v765, 16
      %v1114 = vrot.slane %v1112, 4
      %v1115 = vshll.u32 %v765, 16
      %v1117 = vrot.slane %v1115, 5
      %v1118 = vor.u32 %v1114, %v1117
      %v1119 = vrot.slane %v1118, 4
      %v1121 = vshll.u32 %v766, 16
      %v1123 = vrot.slane %v1121, 5
      %v1124 = vsel %vm798, %v1119, %v1123
      %v1125 = vshrl.u32 %v766, 16
      %v1127 = vrot.slane %v1125, 4
      %v1128 = vor.u32 %v1127, %v1123
      %v1129 = vrot.slane %v1128, 4
      %v1131 = vshll.u32 %v793, 16
      %v1133 = vrot.slane %v1131, 5
      %v1134 = vsel %vm798, %v1129, %v1133
      %v1136 = vshrl.u32 %v767, 16
      %v1138 = vrot.slane %v1136, 4
      %v1139 = vshll.u32 %v767, 16
      %v1141 = vrot.slane %v1139, 5
      %v1142 = vor.u32 %v1138, %v1141
      %v1143 = vrot.slane %v1142, 4
      %v1145 = vshll.u32 %v768, 16
      %v1147 = vrot.slane %v1145, 5
      %v1148 = vsel %vm798, %v1143, %v1147
      %v1149 = vshrl.u32 %v768, 16
      %v1151 = vrot.slane %v1149, 4
      %v1152 = vor.u32 %v1151, %v1147
      %v1153 = vrot.slane %v1152, 4
      %v1155 = vshll.u32 %v794, 16
      %v1157 = vrot.slane %v1155, 5
      %v1158 = vsel %vm798, %v1153, %v1157
      %v1160 = vshrl.u32 %v769, 16
      %v1162 = vrot.slane %v1160, 4
      %v1163 = vshll.u32 %v769, 16
      %v1165 = vrot.slane %v1163, 5
      %v1166 = vor.u32 %v1162, %v1165
      %v1167 = vrot.slane %v1166, 4
      %v1169 = vshll.u32 %v770, 16
      %v1171 = vrot.slane %v1169, 5
      %v1172 = vsel %vm798, %v1167, %v1171
      %v1173 = vshrl.u32 %v770, 16
      %v1175 = vrot.slane %v1173, 4
      %v1176 = vor.u32 %v1175, %v1171
      %v1177 = vrot.slane %v1176, 4
      %v1179 = vshll.u32 %v795, 16
      %v1181 = vrot.slane %v1179, 5
      %v1182 = vsel %vm798, %v1177, %v1181
      %s1183 = scalar_lea.vmem %s1, 72
      %v1184 = vld [vmem:[%s1183] sm:$0xff]
      %v1185 = vld [vmem:[%s1183 + $0x8] sm:$0xff]
      %v1186 = vld [vmem:[%s1183 + $0x10] sm:$0xff]
      %v1187 = vld [vmem:[%s1183 + $0x18] sm:$0xff]
      %v1188 = vld [vmem:[%s1183 + $0x20] sm:$0xff]
      %v1189 = vld [vmem:[%s1183 + $0x28] sm:$0xff]
      %v1190 = vld [vmem:[%s1183 + $0x30] sm:$0xff]
      %v1191 = vld [vmem:[%s1183 + $0x38] sm:$0xff]
      %v1192 = vld [vmem:[%s1183 + $0x40] sm:$0xff]
      %v1193 = vunpack.c.l.b16 %v812
      %v1194 = vunpack.c.l.b16 %v822
      %v1195 = vunpack.c.l.b16 %v836
      %v1196 = vunpack.c.l.b16 %v846
      %v1197 = vunpack.c.l.b16 %v860
      %v1198 = vunpack.c.l.b16 %v870
      %v1199 = vunpack.c.l.b16 %v884
      %v1200 = vunpack.c.l.b16 %v894
      %v1201 = vunpack.c.l.b16 %v908
      %v1202 = vunpack.c.l.b16 %v918
      %v1203 = vunpack.c.l.b16 %v932
      %v1204 = vunpack.c.l.b16 %v942
      %v1205 = vunpack.c.l.b16 %v956
      %v1206 = vunpack.c.l.b16 %v966
      %v1207 = vunpack.c.l.b16 %v980
      %v1208 = vunpack.c.l.b16 %v990
      %v1209 = vunpack.c.l.b16 %v1004
      %v1210 = vunpack.c.l.b16 %v1014
      %v1211 = vunpack.c.l.b16 %v1028
      %v1212 = vunpack.c.l.b16 %v1038
      %v1213 = vunpack.c.l.b16 %v1052
      %v1214 = vunpack.c.l.b16 %v1062
      %v1215 = vunpack.c.l.b16 %v1076
      %v1216 = vunpack.c.l.b16 %v1086
      %v1217 = vunpack.c.l.b16 %v1100
      %v1218 = vunpack.c.l.b16 %v1110
      %v1219 = vunpack.c.l.b16 %v1124
      %v1220 = vunpack.c.l.b16 %v1134
      %v1221 = vunpack.c.l.b16 %v1148
      %v1222 = vunpack.c.l.b16 %v1158
      %v1223 = vunpack.c.l.b16 %v1172
      %v1224 = vunpack.c.l.b16 %v1182
      %v1225 = vpack.c.b16 %v1194, %v1193
      %v1226 = vpack.c.b16 %v1196, %v1195
      %v1227 = vpack.c.b16 %v1198, %v1197
      %v1228 = vpack.c.b16 %v1200, %v1199
      %v1229 = vpack.c.b16 %v1202, %v1201
      %v1230 = vpack.c.b16 %v1204, %v1203
      %v1231 = vpack.c.b16 %v1206, %v1205
      %v1232 = vpack.c.b16 %v1208, %v1207
      %v1233 = vpack.c.b16 %v1210, %v1209
      %v1234 = vpack.c.b16 %v1212, %v1211
      %v1235 = vpack.c.b16 %v1214, %v1213
      %v1236 = vpack.c.b16 %v1216, %v1215
      %v1237 = vpack.c.b16 %v1218, %v1217
      %v1238 = vpack.c.b16 %v1220, %v1219
      %v1239 = vpack.c.b16 %v1222, %v1221
      %v1240 = vpack.c.b16 %v1224, %v1223
      %v1250 = vunpack.c.l.b16 %v1184
      %v1251 = vunpack.c.h.b16 %v1184
      %v1252 = vunpack.c.l.b16 %v1185
      %v1253 = vunpack.c.h.b16 %v1185
      %v1254 = vunpack.c.l.b16 %v1186
      %v1255 = vunpack.c.h.b16 %v1186
      %v1256 = vunpack.c.l.b16 %v1187
      %v1257 = vunpack.c.h.b16 %v1187
      %v1258 = vunpack.c.l.b16 %v1188
      %v1259 = vunpack.c.h.b16 %v1188
      %v1260 = vunpack.c.l.b16 %v1189
      %v1261 = vunpack.c.h.b16 %v1189
      %v1262 = vunpack.c.l.b16 %v1190
      %v1263 = vunpack.c.h.b16 %v1190
      %v1264 = vunpack.c.l.b16 %v1191
      %v1265 = vunpack.c.h.b16 %v1191
      %v1266 = vunpack.c.l.b16 %v1192
      %v1267 = vunpack.c.h.b16 %v1192
      %v1268 = vpack.c.b16 %v1252, %v1250
      %v1269 = vpack.c.b16 %v1253, %v1251
      %v1270 = vpack.c.b16 %v1256, %v1254
      %v1271 = vpack.c.b16 %v1257, %v1255
      %v1272 = vpack.c.b16 %v1260, %v1258
      %v1273 = vpack.c.b16 %v1261, %v1259
      %v1274 = vpack.c.b16 %v1264, %v1262
      %v1275 = vpack.c.b16 %v1265, %v1263
      %v1276 = vpack.c.b16 %v1266, %v1266
      %v1277 = vpack.c.b16 %v1267, %v1267
      %vm1286 = vcmask 588800
      %v1288 = vsel %vm1286, %v1225, 0
      %v1291 = vsel %vm1286, %v1226, 0
      %v1294 = vsel %vm1286, %v1227, 0
      %v1297 = vsel %vm1286, %v1228, 0
      %v1300 = vsel %vm1286, %v1229, 0
      %v1303 = vsel %vm1286, %v1230, 0
      %v1306 = vsel %vm1286, %v1231, 0
      %v1309 = vsel %vm1286, %v1232, 0
      %v1312 = vsel %vm1286, %v1233, 0
      %v1315 = vsel %vm1286, %v1234, 0
      %v1318 = vsel %vm1286, %v1235, 0
      %v1321 = vsel %vm1286, %v1236, 0
      %v1324 = vsel %vm1286, %v1237, 0
      %v1327 = vsel %vm1286, %v1238, 0
      %v1330 = vsel %vm1286, %v1239, 0
      %v1333 = vsel %vm1286, %v1240, 0
      %vm1335 = vcmask 1043456
      %v1337 = vsel %vm1335, %v1276, 0
      %v1340 = vsel %vm1335, %v1277, 0
      %1342 = vmatprep.subr.bf16.mxu0 %v1269
      %1343 = vmatpush1.bf16.msra.mxu0 %v1268
      %1344 = vmatprep.subr.bf16.mxu0 %v1271
      %1345 = vmatpush1.bf16.msra.mxu0 %v1270
      %1346 = vmatprep.subr.bf16.mxu0 %v1273
      %1347 = vmatpush1.bf16.msra.mxu0 %v1272
      %1348 = vmatprep.subr.bf16.mxu0 %v1275
      %1349 = vmatpush1.bf16.msra.mxu0 %v1274
      %1350 = vmatprep.subr.bf16.mxu0 %v1340
      %1351 = vmatpush1.bf16.msra.mxu0 %v1337
      %1352 = vmatprep.subr.bf16.mxu0 0
      %1353 = vmatpush1.bf16.msra.mxu0 0
      %1354 = vmatprep.subr.bf16.mxu0 0
      %1355 = vmatpush1.bf16.msra.mxu0 0
      %1356 = vmatprep.subr.bf16.mxu0 0
      %1357 = vmatpush1.bf16.msra.mxu0 0
      %1358 = vmatprep.subr.bf16.mxu0 0
      %1359 = vmatpush1.bf16.msra.mxu0 0
      %1360 = vmatprep.subr.bf16.mxu0 0
      %1361 = vmatpush1.bf16.msra.mxu0 0
      %1362 = vmatprep.subr.bf16.mxu0 0
      %1363 = vmatpush1.bf16.msra.mxu0 0
      %1364 = vmatprep.subr.bf16.mxu0 0
      %1365 = vmatpush1.bf16.msra.mxu0 0
      %1366 = vmatprep.subr.bf16.mxu0 0
      %1367 = vmatpush1.bf16.msra.mxu0 0
      %1368 = vmatprep.subr.bf16.mxu0 0
      %1369 = vmatpush1.bf16.msra.mxu0 0
      %1370 = vmatprep.subr.bf16.mxu0 0
      %1371 = vmatpush1.bf16.msra.mxu0 0
      %1372 = vmatprep.subr.bf16.mxu0 0
      %1373 = vmatpush1.bf16.msra.mxu0 0
      %1374 = vmatprep.mubr.bf16.mxu0 0
      %1375 = vmatmul.mubr.bf16.gmra.mrb[0].mxu0 %v1288
      %v1376 = vpop.f32.mrb[0].mxu0
      %v1377 = vadd.f32 0.0, %v1376
      %v1378 = vpop.f32.mrb[0].mxu0
      %v1379 = vadd.f32 0.0, %v1378
      %v1380 = vpop.f32.mrb[0].mxu0
      %v1381 = vadd.f32 0.0, %v1380
      %v1382 = vpop.f32.mrb[0].mxu0
      %v1383 = vadd.f32 0.0, %v1382
      %1384 = vmatprep.mubr.bf16.mxu0 0
      %1385 = vmatmul.mubr.bf16.gmra.mrb[0].mxu0 %v1291
      %v1386 = vpop.f32.mrb[0].mxu0
      %v1387 = vadd.f32 0.0, %v1386
      %v1388 = vpop.f32.mrb[0].mxu0
      %v1389 = vadd.f32 0.0, %v1388
      %v1390 = vpop.f32.mrb[0].mxu0
      %v1391 = vadd.f32 0.0, %v1390
      %v1392 = vpop.f32.mrb[0].mxu0
      %v1393 = vadd.f32 0.0, %v1392
      %1394 = vmatprep.mubr.bf16.mxu0 0
      %1395 = vmatmul.mubr.bf16.gmra.mrb[0].mxu0 %v1294
      %v1396 = vpop.f32.mrb[0].mxu0
      %v1397 = vadd.f32 0.0, %v1396
      %v1398 = vpop.f32.mrb[0].mxu0
      %v1399 = vadd.f32 0.0, %v1398
      %v1400 = vpop.f32.mrb[0].mxu0
      %v1401 = vadd.f32 0.0, %v1400
      %v1402 = vpop.f32.mrb[0].mxu0
      %v1403 = vadd.f32 0.0, %v1402
      %1404 = vmatprep.mubr.bf16.mxu0 0
      %1405 = vmatmul.mubr.bf16.gmra.mrb[0].mxu0 %v1297
      %v1406 = vpop.f32.mrb[0].mxu0
      %v1407 = vadd.f32 0.0, %v1406
      %v1408 = vpop.f32.mrb[0].mxu0
      %v1409 = vadd.f32 0.0, %v1408
      %v1410 = vpop.f32.mrb[0].mxu0
      %v1411 = vadd.f32 0.0, %v1410
      %v1412 = vpop.f32.mrb[0].mxu0
      %v1413 = vadd.f32 0.0, %v1412
      %1414 = vmatprep.mubr.bf16.mxu0 0
      %1415 = vmatmul.mubr.bf16.gmra.mrb[0].mxu0 %v1300
      %v1416 = vpop.f32.mrb[0].mxu0
      %v1417 = vadd.f32 0.0, %v1416
      %v1418 = vpop.f32.mrb[0].mxu0
      %v1419 = vadd.f32 0.0, %v1418
      %v1420 = vpop.f32.mrb[0].mxu0
      %v1421 = vadd.f32 0.0, %v1420
      %v1422 = vpop.f32.mrb[0].mxu0
      %v1423 = vadd.f32 0.0, %v1422
      %1424 = vmatprep.mubr.bf16.mxu0 0
      %1425 = vmatmul.mubr.bf16.gmra.mrb[0].mxu0 %v1303
      %v1426 = vpop.f32.mrb[0].mxu0
      %v1427 = vadd.f32 0.0, %v1426
      %v1428 = vpop.f32.mrb[0].mxu0
      %v1429 = vadd.f32 0.0, %v1428
      %v1430 = vpop.f32.mrb[0].mxu0
      %v1431 = vadd.f32 0.0, %v1430
      %v1432 = vpop.f32.mrb[0].mxu0
      %v1433 = vadd.f32 0.0, %v1432
      %1434 = vmatprep.mubr.bf16.mxu0 0
      %1435 = vmatmul.mubr.bf16.gmra.mrb[0].mxu0 %v1306
      %v1436 = vpop.f32.mrb[0].mxu0
      %v1437 = vadd.f32 0.0, %v1436
      %v1438 = vpop.f32.mrb[0].mxu0
      %v1439 = vadd.f32 0.0, %v1438
      %v1440 = vpop.f32.mrb[0].mxu0
      %v1441 = vadd.f32 0.0, %v1440
      %v1442 = vpop.f32.mrb[0].mxu0
      %v1443 = vadd.f32 0.0, %v1442
      %1444 = vmatprep.mubr.bf16.mxu0 0
      %1445 = vmatmul.mubr.bf16.gmra.mrb[0].mxu0 %v1309
      %v1446 = vpop.f32.mrb[0].mxu0
      %v1447 = vadd.f32 0.0, %v1446
      %v1448 = vpop.f32.mrb[0].mxu0
      %v1449 = vadd.f32 0.0, %v1448
      %v1450 = vpop.f32.mrb[0].mxu0
      %v1451 = vadd.f32 0.0, %v1450
      %v1452 = vpop.f32.mrb[0].mxu0
      %v1453 = vadd.f32 0.0, %v1452
      %1454 = vmatprep.mubr.bf16.mxu0 0
      %1455 = vmatmul.mubr.bf16.gmra.mrb[0].mxu0 %v1312
      %v1456 = vpop.f32.mrb[0].mxu0
      %v1457 = vadd.f32 0.0, %v1456
      %v1458 = vpop.f32.mrb[0].mxu0
      %v1459 = vadd.f32 0.0, %v1458
      %v1460 = vpop.f32.mrb[0].mxu0
      %v1461 = vadd.f32 0.0, %v1460
      %v1462 = vpop.f32.mrb[0].mxu0
      %v1463 = vadd.f32 0.0, %v1462
      %1464 = vmatprep.mubr.bf16.mxu0 0
      %1465 = vmatmul.mubr.bf16.gmra.mrb[0].mxu0 %v1315
      %v1466 = vpop.f32.mrb[0].mxu0
      %v1467 = vadd.f32 0.0, %v1466
      %v1468 = vpop.f32.mrb[0].mxu0
      %v1469 = vadd.f32 0.0, %v1468
      %v1470 = vpop.f32.mrb[0].mxu0
      %v1471 = vadd.f32 0.0, %v1470
      %v1472 = vpop.f32.mrb[0].mxu0
      %v1473 = vadd.f32 0.0, %v1472
      %1474 = vmatprep.mubr.bf16.mxu0 0
      %1475 = vmatmul.mubr.bf16.gmra.mrb[0].mxu0 %v1318
      %v1476 = vpop.f32.mrb[0].mxu0
      %v1477 = vadd.f32 0.0, %v1476
      %v1478 = vpop.f32.mrb[0].mxu0
      %v1479 = vadd.f32 0.0, %v1478
      %v1480 = vpop.f32.mrb[0].mxu0
      %v1481 = vadd.f32 0.0, %v1480
      %v1482 = vpop.f32.mrb[0].mxu0
      %v1483 = vadd.f32 0.0, %v1482
      %1484 = vmatprep.mubr.bf16.mxu0 0
      %1485 = vmatmul.mubr.bf16.gmra.mrb[0].mxu0 %v1321
      %v1486 = vpop.f32.mrb[0].mxu0
      %v1487 = vadd.f32 0.0, %v1486
      %v1488 = vpop.f32.mrb[0].mxu0
      %v1489 = vadd.f32 0.0, %v1488
      %v1490 = vpop.f32.mrb[0].mxu0
      %v1491 = vadd.f32 0.0, %v1490
      %v1492 = vpop.f32.mrb[0].mxu0
      %v1493 = vadd.f32 0.0, %v1492
      %1494 = vmatprep.mubr.bf16.mxu0 0
      %1495 = vmatmul.mubr.bf16.gmra.mrb[0].mxu0 %v1324
      %v1496 = vpop.f32.mrb[0].mxu0
      %v1497 = vadd.f32 0.0, %v1496
      %v1498 = vpop.f32.mrb[0].mxu0
      %v1499 = vadd.f32 0.0, %v1498
      %v1500 = vpop.f32.mrb[0].mxu0
      %v1501 = vadd.f32 0.0, %v1500
      %v1502 = vpop.f32.mrb[0].mxu0
      %v1503 = vadd.f32 0.0, %v1502
      %1504 = vmatprep.mubr.bf16.mxu0 0
      %1505 = vmatmul.mubr.bf16.gmra.mrb[0].mxu0 %v1327
      %v1506 = vpop.f32.mrb[0].mxu0
      %v1507 = vadd.f32 0.0, %v1506
      %v1508 = vpop.f32.mrb[0].mxu0
      %v1509 = vadd.f32 0.0, %v1508
      %v1510 = vpop.f32.mrb[0].mxu0
      %v1511 = vadd.f32 0.0, %v1510
      %v1512 = vpop.f32.mrb[0].mxu0
      %v1513 = vadd.f32 0.0, %v1512
      %1514 = vmatprep.mubr.bf16.mxu0 0
      %1515 = vmatmul.mubr.bf16.gmra.mrb[0].mxu0 %v1330
      %v1516 = vpop.f32.mrb[0].mxu0
      %v1517 = vadd.f32 0.0, %v1516
      %v1518 = vpop.f32.mrb[0].mxu0
      %v1519 = vadd.f32 0.0, %v1518
      %v1520 = vpop.f32.mrb[0].mxu0
      %v1521 = vadd.f32 0.0, %v1520
      %v1522 = vpop.f32.mrb[0].mxu0
      %v1523 = vadd.f32 0.0, %v1522
      %1524 = vmatprep.mubr.bf16.mxu0 0
      %1525 = vmatmul.mubr.bf16.gmra.mrb[0].mxu0 %v1333
      %v1526 = vpop.f32.mrb[0].mxu0
      %v1527 = vadd.f32 0.0, %v1526
      %v1528 = vpop.f32.mrb[0].mxu0
      %v1529 = vadd.f32 0.0, %v1528
      %v1530 = vpop.f32.mrb[0].mxu0
      %v1531 = vadd.f32 0.0, %v1530
      %v1532 = vpop.f32.mrb[0].mxu0
      %v1533 = vadd.f32 0.0, %v1532
      %1534 = vdwg.mxu0
      %v1567 = vunpack.c.l.b16 %v739
      %v1568 = vunpack.c.l.b16 %v740
      %v1569 = vunpack.c.l.b16 %v741
      %v1570 = vunpack.c.l.b16 %v742
      %v1571 = vunpack.c.l.b16 %v743
      %v1572 = vunpack.c.l.b16 %v744
      %v1573 = vunpack.c.l.b16 %v745
      %v1574 = vunpack.c.l.b16 %v746
      %v1575 = vunpack.c.l.b16 %v747
      %v1576 = vunpack.c.l.b16 %v748
      %v1577 = vunpack.c.l.b16 %v749
      %v1578 = vunpack.c.l.b16 %v750
      %v1579 = vunpack.c.l.b16 %v751
      %v1580 = vunpack.c.l.b16 %v752
      %v1581 = vunpack.c.l.b16 %v753
      %v1582 = vunpack.c.l.b16 %v754
      %v1583 = vunpack.c.l.b16 %v755
      %v1584 = vunpack.c.l.b16 %v756
      %v1585 = vunpack.c.l.b16 %v757
      %v1586 = vunpack.c.l.b16 %v758
      %v1587 = vunpack.c.l.b16 %v759
      %v1588 = vunpack.c.l.b16 %v760
      %v1589 = vunpack.c.l.b16 %v761
      %v1590 = vunpack.c.l.b16 %v762
      %v1591 = vunpack.c.l.b16 %v763
      %v1592 = vunpack.c.l.b16 %v764
      %v1593 = vunpack.c.l.b16 %v765
      %v1594 = vunpack.c.l.b16 %v766
      %v1595 = vunpack.c.l.b16 %v767
      %v1596 = vunpack.c.l.b16 %v768
      %v1597 = vunpack.c.l.b16 %v769
      %v1598 = vunpack.c.l.b16 %v770
      %v1599 = vpack.c.b16 %v1568, %v1567
      %v1600 = vpack.c.b16 %v1570, %v1569
      %v1601 = vpack.c.b16 %v1572, %v1571
      %v1602 = vpack.c.b16 %v1574, %v1573
      %v1603 = vpack.c.b16 %v1576, %v1575
      %v1604 = vpack.c.b16 %v1578, %v1577
      %v1605 = vpack.c.b16 %v1580, %v1579
      %v1606 = vpack.c.b16 %v1582, %v1581
      %v1607 = vpack.c.b16 %v1584, %v1583
      %v1608 = vpack.c.b16 %v1586, %v1585
      %v1609 = vpack.c.b16 %v1588, %v1587
      %v1610 = vpack.c.b16 %v1590, %v1589
      %v1611 = vpack.c.b16 %v1592, %v1591
      %v1612 = vpack.c.b16 %v1594, %v1593
      %v1613 = vpack.c.b16 %v1596, %v1595
      %v1614 = vpack.c.b16 %v1598, %v1597
      %v1624 = vunpack.c.l.b16 %v771
      %v1625 = vunpack.c.h.b16 %v771
      %v1626 = vunpack.c.l.b16 %v772
      %v1627 = vunpack.c.h.b16 %v772
      %v1628 = vunpack.c.l.b16 %v773
      %v1629 = vunpack.c.h.b16 %v773
      %v1630 = vunpack.c.l.b16 %v774
      %v1631 = vunpack.c.h.b16 %v774
      %v1632 = vunpack.c.l.b16 %v775
      %v1633 = vunpack.c.h.b16 %v775
      %v1634 = vunpack.c.l.b16 %v776
      %v1635 = vunpack.c.h.b16 %v776
      %v1636 = vunpack.c.l.b16 %v777
      %v1637 = vunpack.c.h.b16 %v777
      %v1638 = vunpack.c.l.b16 %v778
      %v1639 = vunpack.c.h.b16 %v778
      %v1640 = vunpack.c.l.b16 %v779
      %v1641 = vunpack.c.h.b16 %v779
      %v1642 = vpack.c.b16 %v1626, %v1624
      %v1643 = vpack.c.b16 %v1627, %v1625
      %v1644 = vpack.c.b16 %v1630, %v1628
      %v1645 = vpack.c.b16 %v1631, %v1629
      %v1646 = vpack.c.b16 %v1634, %v1632
      %v1647 = vpack.c.b16 %v1635, %v1633
      %v1648 = vpack.c.b16 %v1638, %v1636
      %v1649 = vpack.c.b16 %v1639, %v1637
      %v1650 = vpack.c.b16 %v1640, %v1640
      %v1651 = vpack.c.b16 %v1641, %v1641
      %v1661 = vsel %vm1286, %v1599, 0
      %v1664 = vsel %vm1286, %v1600, 0
      %v1667 = vsel %vm1286, %v1601, 0
      %v1670 = vsel %vm1286, %v1602, 0
      %v1673 = vsel %vm1286, %v1603, 0
      %v1676 = vsel %vm1286, %v1604, 0
      %v1679 = vsel %vm1286, %v1605, 0
      %v1682 = vsel %vm1286, %v1606, 0
      %v1685 = vsel %vm1286, %v1607, 0
      %v1688 = vsel %vm1286, %v1608, 0
      %v1691 = vsel %vm1286, %v1609, 0
      %v1694 = vsel %vm1286, %v1610, 0
      %v1697 = vsel %vm1286, %v1611, 0
      %v1700 = vsel %vm1286, %v1612, 0
      %v1703 = vsel %vm1286, %v1613, 0
      %v1706 = vsel %vm1286, %v1614, 0
      %v1709 = vsel %vm1335, %v1650, 0
      %v1712 = vsel %vm1335, %v1651, 0
      %1714 = vmatprep.subr.bf16.mxu0 %v1643
      %1715 = vmatpush1.bf16.msra.mxu0 %v1642
      %1716 = vmatprep.subr.bf16.mxu0 %v1645
      %1717 = vmatpush1.bf16.msra.mxu0 %v1644
      %1718 = vmatprep.subr.bf16.mxu0 %v1647
      %1719 = vmatpush1.bf16.msra.mxu0 %v1646
      %1720 = vmatprep.subr.bf16.mxu0 %v1649
      %1721 = vmatpush1.bf16.msra.mxu0 %v1648
      %1722 = vmatprep.subr.bf16.mxu0 %v1712
      %1723 = vmatpush1.bf16.msra.mxu0 %v1709
      %1724 = vmatprep.subr.bf16.mxu0 0
      %1725 = vmatpush1.bf16.msra.mxu0 0
      %1726 = vmatprep.subr.bf16.mxu0 0
      %1727 = vmatpush1.bf16.msra.mxu0 0
      %1728 = vmatprep.subr.bf16.mxu0 0
      %1729 = vmatpush1.bf16.msra.mxu0 0
      %1730 = vmatprep.subr.bf16.mxu0 0
      %1731 = vmatpush1.bf16.msra.mxu0 0
      %1732 = vmatprep.subr.bf16.mxu0 0
      %1733 = vmatpush1.bf16.msra.mxu0 0
      %1734 = vmatprep.subr.bf16.mxu0 0
      %1735 = vmatpush1.bf16.msra.mxu0 0
      %1736 = vmatprep.subr.bf16.mxu0 0
      %1737 = vmatpush1.bf16.msra.mxu0 0
      %1738 = vmatprep.subr.bf16.mxu0 0
      %1739 = vmatpush1.bf16.msra.mxu0 0
      %1740 = vmatprep.subr.bf16.mxu0 0
      %1741 = vmatpush1.bf16.msra.mxu0 0
      %1742 = vmatprep.subr.bf16.mxu0 0
      %1743 = vmatpush1.bf16.msra.mxu0 0
      %1744 = vmatprep.subr.bf16.mxu0 0
      %1745 = vmatpush1.bf16.msra.mxu0 0
      %1746 = vmatprep.mubr.bf16.mxu0 0
      %1747 = vmatmul.mubr.bf16.gmra.mrb[0].mxu0 %v1661
      %v1748 = vpop.f32.mrb[0].mxu0
      %v1749 = vadd.f32 %v1377, %v1748
      %v1750 = vpop.f32.mrb[0].mxu0
      %v1751 = vadd.f32 %v1379, %v1750
      %v1752 = vpop.f32.mrb[0].mxu0
      %v1753 = vadd.f32 %v1381, %v1752
      %v1754 = vpop.f32.mrb[0].mxu0
      %v1755 = vadd.f32 %v1383, %v1754
      %1756 = vmatprep.mubr.bf16.mxu0 0
      %1757 = vmatmul.mubr.bf16.gmra.mrb[0].mxu0 %v1664
      %v1758 = vpop.f32.mrb[0].mxu0
      %v1759 = vadd.f32 %v1387, %v1758
      %v1760 = vpop.f32.mrb[0].mxu0
      %v1761 = vadd.f32 %v1389, %v1760
      %v1762 = vpop.f32.mrb[0].mxu0
      %v1763 = vadd.f32 %v1391, %v1762
      %v1764 = vpop.f32.mrb[0].mxu0
      %v1765 = vadd.f32 %v1393, %v1764
      %1766 = vmatprep.mubr.bf16.mxu0 0
      %1767 = vmatmul.mubr.bf16.gmra.mrb[0].mxu0 %v1667
      %v1768 = vpop.f32.mrb[0].mxu0
      %v1769 = vadd.f32 %v1397, %v1768
      %v1770 = vpop.f32.mrb[0].mxu0
      %v1771 = vadd.f32 %v1399, %v1770
      %v1772 = vpop.f32.mrb[0].mxu0
      %v1773 = vadd.f32 %v1401, %v1772
      %v1774 = vpop.f32.mrb[0].mxu0
      %v1775 = vadd.f32 %v1403, %v1774
      %1776 = vmatprep.mubr.bf16.mxu0 0
      %1777 = vmatmul.mubr.bf16.gmra.mrb[0].mxu0 %v1670
      %v1778 = vpop.f32.mrb[0].mxu0
      %v1779 = vadd.f32 %v1407, %v1778
      %v1780 = vpop.f32.mrb[0].mxu0
      %v1781 = vadd.f32 %v1409, %v1780
      %v1782 = vpop.f32.mrb[0].mxu0
      %v1783 = vadd.f32 %v1411, %v1782
      %v1784 = vpop.f32.mrb[0].mxu0
      %v1785 = vadd.f32 %v1413, %v1784
      %1786 = vmatprep.mubr.bf16.mxu0 0
      %1787 = vmatmul.mubr.bf16.gmra.mrb[0].mxu0 %v1673
      %v1788 = vpop.f32.mrb[0].mxu0
      %v1789 = vadd.f32 %v1417, %v1788
      %v1790 = vpop.f32.mrb[0].mxu0
      %v1791 = vadd.f32 %v1419, %v1790
      %v1792 = vpop.f32.mrb[0].mxu0
      %v1793 = vadd.f32 %v1421, %v1792
      %v1794 = vpop.f32.mrb[0].mxu0
      %v1795 = vadd.f32 %v1423, %v1794
      %1796 = vmatprep.mubr.bf16.mxu0 0
      %1797 = vmatmul.mubr.bf16.gmra.mrb[0].mxu0 %v1676
      %v1798 = vpop.f32.mrb[0].mxu0
      %v1799 = vadd.f32 %v1427, %v1798
      %v1800 = vpop.f32.mrb[0].mxu0
      %v1801 = vadd.f32 %v1429, %v1800
      %v1802 = vpop.f32.mrb[0].mxu0
      %v1803 = vadd.f32 %v1431, %v1802
      %v1804 = vpop.f32.mrb[0].mxu0
      %v1805 = vadd.f32 %v1433, %v1804
      %1806 = vmatprep.mubr.bf16.mxu0 0
      %1807 = vmatmul.mubr.bf16.gmra.mrb[0].mxu0 %v1679
      %v1808 = vpop.f32.mrb[0].mxu0
      %v1809 = vadd.f32 %v1437, %v1808
      %v1810 = vpop.f32.mrb[0].mxu0
      %v1811 = vadd.f32 %v1439, %v1810
      %v1812 = vpop.f32.mrb[0].mxu0
      %v1813 = vadd.f32 %v1441, %v1812
      %v1814 = vpop.f32.mrb[0].mxu0
      %v1815 = vadd.f32 %v1443, %v1814
      %1816 = vmatprep.mubr.bf16.mxu0 0
      %1817 = vmatmul.mubr.bf16.gmra.mrb[0].mxu0 %v1682
      %v1818 = vpop.f32.mrb[0].mxu0
      %v1819 = vadd.f32 %v1447, %v1818
      %v1820 = vpop.f32.mrb[0].mxu0
      %v1821 = vadd.f32 %v1449, %v1820
      %v1822 = vpop.f32.mrb[0].mxu0
      %v1823 = vadd.f32 %v1451, %v1822
      %v1824 = vpop.f32.mrb[0].mxu0
      %v1825 = vadd.f32 %v1453, %v1824
      %1826 = vmatprep.mubr.bf16.mxu0 0
      %1827 = vmatmul.mubr.bf16.gmra.mrb[0].mxu0 %v1685
      %v1828 = vpop.f32.mrb[0].mxu0
      %v1829 = vadd.f32 %v1457, %v1828
      %v1830 = vpop.f32.mrb[0].mxu0
      %v1831 = vadd.f32 %v1459, %v1830
      %v1832 = vpop.f32.mrb[0].mxu0
      %v1833 = vadd.f32 %v1461, %v1832
      %v1834 = vpop.f32.mrb[0].mxu0
      %v1835 = vadd.f32 %v1463, %v1834
      %1836 = vmatprep.mubr.bf16.mxu0 0
      %1837 = vmatmul.mubr.bf16.gmra.mrb[0].mxu0 %v1688
      %v1838 = vpop.f32.mrb[0].mxu0
      %v1839 = vadd.f32 %v1467, %v1838
      %v1840 = vpop.f32.mrb[0].mxu0
      %v1841 = vadd.f32 %v1469, %v1840
      %v1842 = vpop.f32.mrb[0].mxu0
      %v1843 = vadd.f32 %v1471, %v1842
      %v1844 = vpop.f32.mrb[0].mxu0
      %v1845 = vadd.f32 %v1473, %v1844
      %1846 = vmatprep.mubr.bf16.mxu0 0
      %1847 = vmatmul.mubr.bf16.gmra.mrb[0].mxu0 %v1691
      %v1848 = vpop.f32.mrb[0].mxu0
      %v1849 = vadd.f32 %v1477, %v1848
      %v1850 = vpop.f32.mrb[0].mxu0
      %v1851 = vadd.f32 %v1479, %v1850
      %v1852 = vpop.f32.mrb[0].mxu0
      %v1853 = vadd.f32 %v1481, %v1852
      %v1854 = vpop.f32.mrb[0].mxu0
      %v1855 = vadd.f32 %v1483, %v1854
      %1856 = vmatprep.mubr.bf16.mxu0 0
      %1857 = vmatmul.mubr.bf16.gmra.mrb[0].mxu0 %v1694
      %v1858 = vpop.f32.mrb[0].mxu0
      %v1859 = vadd.f32 %v1487, %v1858
      %v1860 = vpop.f32.mrb[0].mxu0
      %v1861 = vadd.f32 %v1489, %v1860
      %v1862 = vpop.f32.mrb[0].mxu0
      %v1863 = vadd.f32 %v1491, %v1862
      %v1864 = vpop.f32.mrb[0].mxu0
      %v1865 = vadd.f32 %v1493, %v1864
      %1866 = vmatprep.mubr.bf16.mxu0 0
      %1867 = vmatmul.mubr.bf16.gmra.mrb[0].mxu0 %v1697
      %v1868 = vpop.f32.mrb[0].mxu0
      %v1869 = vadd.f32 %v1497, %v1868
      %v1870 = vpop.f32.mrb[0].mxu0
      %v1871 = vadd.f32 %v1499, %v1870
      %v1872 = vpop.f32.mrb[0].mxu0
      %v1873 = vadd.f32 %v1501, %v1872
      %v1874 = vpop.f32.mrb[0].mxu0
      %v1875 = vadd.f32 %v1503, %v1874
      %1876 = vmatprep.mubr.bf16.mxu0 0
      %1877 = vmatmul.mubr.bf16.gmra.mrb[0].mxu0 %v1700
      %v1878 = vpop.f32.mrb[0].mxu0
      %v1879 = vadd.f32 %v1507, %v1878
      %v1880 = vpop.f32.mrb[0].mxu0
      %v1881 = vadd.f32 %v1509, %v1880
      %v1882 = vpop.f32.mrb[0].mxu0
      %v1883 = vadd.f32 %v1511, %v1882
      %v1884 = vpop.f32.mrb[0].mxu0
      %v1885 = vadd.f32 %v1513, %v1884
      %1886 = vmatprep.mubr.bf16.mxu0 0
      %1887 = vmatmul.mubr.bf16.gmra.mrb[0].mxu0 %v1703
      %v1888 = vpop.f32.mrb[0].mxu0
      %v1889 = vadd.f32 %v1517, %v1888
      %v1890 = vpop.f32.mrb[0].mxu0
      %v1891 = vadd.f32 %v1519, %v1890
      %v1892 = vpop.f32.mrb[0].mxu0
      %v1893 = vadd.f32 %v1521, %v1892
      %v1894 = vpop.f32.mrb[0].mxu0
      %v1895 = vadd.f32 %v1523, %v1894
      %1896 = vmatprep.mubr.bf16.mxu0 0
      %1897 = vmatmul.mubr.bf16.gmra.mrb[0].mxu0 %v1706
      %v1898 = vpop.f32.mrb[0].mxu0
      %v1899 = vadd.f32 %v1527, %v1898
      %v1900 = vpop.f32.mrb[0].mxu0
      %v1901 = vadd.f32 %v1529, %v1900
      %v1902 = vpop.f32.mrb[0].mxu0
      %v1903 = vadd.f32 %v1531, %v1902
      %v1904 = vpop.f32.mrb[0].mxu0
      %v1905 = vadd.f32 %v1533, %v1904
      %1906 = vdwg.mxu0
      %v1907 = vld [vmem:[#allocation2] sm:$0xe]
      %v1908 = vld [vmem:[#allocation2 + $0xc] sm:$0xe]
      %v1909 = vld [vmem:[#allocation2 + $0x18] sm:$0xe]
      %v1910 = vld [vmem:[#allocation2 + $0x24] sm:$0xe]
      %v1911 = vld [vmem:[#allocation2 + $0x30] sm:$0xe]
      %v1912 = vld [vmem:[#allocation2 + $0x3c] sm:$0xe]
      %v1913 = vld [vmem:[#allocation2 + $0x48] sm:$0xe]
      %v1914 = vld [vmem:[#allocation2 + $0x54] sm:$0xe]
      %v1915 = vld [vmem:[#allocation2 + $0x78] sm:$0xe]
      %v1916 = vld [vmem:[#allocation2 + $0x84] sm:$0xe]
      %v1917 = vld [vmem:[#allocation2 + $0x90] sm:$0xe]
      %v1918 = vld [vmem:[#allocation2 + $0x9c] sm:$0xe]
      %v1919 = vld [vmem:[#allocation2 + $0xa8] sm:$0xe]
      %v1920 = vld [vmem:[#allocation2 + $0xb4] sm:$0xe]
      %v1921 = vld [vmem:[#allocation2 + $0xc0] sm:$0xe]
      %v1922 = vld [vmem:[#allocation2 + $0xcc] sm:$0xe]
      %vm1955 = vcmask 1042432
      %vm1956 = vcmask 1046532
      %vm1957 = vmor %vm1955, %vm1956
      %v1958 = vrot.slane %v1907, 5
      %v1959 = vrot.slane %v1958, 4
      %v1960 = vrot.slane %v740, 5
      %v1961 = vsel %vm1957, %v1959, %v1960
      %v1962 = vrot.slane %v1960, 4
      %v1963 = vrot.slane %v780, 5
      %v1964 = vsel %vm1957, %v1962, %v1963
      %v1965 = vrot.slane %v1908, 5
      %v1966 = vrot.slane %v1965, 4
      %v1967 = vrot.slane %v742, 5
      %v1968 = vsel %vm1957, %v1966, %v1967
      %v1969 = vrot.slane %v1967, 4
      %v1970 = vrot.slane %v781, 5
      %v1971 = vsel %vm1957, %v1969, %v1970
      %v1972 = vrot.slane %v1909, 5
      %v1973 = vrot.slane %v1972, 4
      %v1974 = vrot.slane %v744, 5
      %v1975 = vsel %vm1957, %v1973, %v1974
      %v1976 = vrot.slane %v1974, 4
      %v1977 = vrot.slane %v782, 5
      %v1978 = vsel %vm1957, %v1976, %v1977
      %v1979 = vrot.slane %v1910, 5
      %v1980 = vrot.slane %v1979, 4
      %v1981 = vrot.slane %v746, 5
      %v1982 = vsel %vm1957, %v1980, %v1981
      %v1983 = vrot.slane %v1981, 4
      %v1984 = vrot.slane %v783, 5
      %v1985 = vsel %vm1957, %v1983, %v1984
      %v1986 = vrot.slane %v1911, 5
      %v1987 = vrot.slane %v1986, 4
      %v1988 = vrot.slane %v748, 5
      %v1989 = vsel %vm1957, %v1987, %v1988
      %v1990 = vrot.slane %v1988, 4
      %v1991 = vrot.slane %v784, 5
      %v1992 = vsel %vm1957, %v1990, %v1991
      %v1993 = vrot.slane %v1912, 5
      %v1994 = vrot.slane %v1993, 4
      %v1995 = vrot.slane %v750, 5
      %v1996 = vsel %vm1957, %v1994, %v1995
      %v1997 = vrot.slane %v1995, 4
      %v1998 = vrot.slane %v785, 5
      %v1999 = vsel %vm1957, %v1997, %v1998
      %v2000 = vrot.slane %v1913, 5
      %v2001 = vrot.slane %v2000, 4
      %v2002 = vrot.slane %v752, 5
      %v2003 = vsel %vm1957, %v2001, %v2002
      %v2004 = vrot.slane %v2002, 4
      %v2005 = vrot.slane %v786, 5
      %v2006 = vsel %vm1957, %v2004, %v2005
      %v2007 = vrot.slane %v1914, 5
      %v2008 = vrot.slane %v2007, 4
      %v2009 = vrot.slane %v754, 5
      %v2010 = vsel %vm1957, %v2008, %v2009
      %v2011 = vrot.slane %v2009, 4
      %v2012 = vrot.slane %v787, 5
      %v2013 = vsel %vm1957, %v2011, %v2012
      %v2014 = vrot.slane %v1915, 5
      %v2015 = vrot.slane %v2014, 4
      %v2016 = vrot.slane %v756, 5
      %v2017 = vsel %vm1957, %v2015, %v2016
      %v2018 = vrot.slane %v2016, 4
      %v2019 = vrot.slane %v788, 5
      %v2020 = vsel %vm1957, %v2018, %v2019
      %v2021 = vrot.slane %v1916, 5
      %v2022 = vrot.slane %v2021, 4
      %v2023 = vrot.slane %v758, 5
      %v2024 = vsel %vm1957, %v2022, %v2023
      %v2025 = vrot.slane %v2023, 4
      %v2026 = vrot.slane %v789, 5
      %v2027 = vsel %vm1957, %v2025, %v2026
      %v2028 = vrot.slane %v1917, 5
      %v2029 = vrot.slane %v2028, 4
      %v2030 = vrot.slane %v760, 5
      %v2031 = vsel %vm1957, %v2029, %v2030
      %v2032 = vrot.slane %v2030, 4
      %v2033 = vrot.slane %v790, 5
      %v2034 = vsel %vm1957, %v2032, %v2033
      %v2035 = vrot.slane %v1918, 5
      %v2036 = vrot.slane %v2035, 4
      %v2037 = vrot.slane %v762, 5
      %v2038 = vsel %vm1957, %v2036, %v2037
      %v2039 = vrot.slane %v2037, 4
      %v2040 = vrot.slane %v791, 5
      %v2041 = vsel %vm1957, %v2039, %v2040
      %v2042 = vrot.slane %v1919, 5
      %v2043 = vrot.slane %v2042, 4
      %v2044 = vrot.slane %v764, 5
      %v2045 = vsel %vm1957, %v2043, %v2044
      %v2046 = vrot.slane %v2044, 4
      %v2047 = vrot.slane %v792, 5
      %v2048 = vsel %vm1957, %v2046, %v2047
      %v2049 = vrot.slane %v1920, 5
      %v2050 = vrot.slane %v2049, 4
      %v2051 = vrot.slane %v766, 5
      %v2052 = vsel %vm1957, %v2050, %v2051
      %v2053 = vrot.slane %v2051, 4
      %v2054 = vrot.slane %v793, 5
      %v2055 = vsel %vm1957, %v2053, %v2054
      %v2056 = vrot.slane %v1921, 5
      %v2057 = vrot.slane %v2056, 4
      %v2058 = vrot.slane %v768, 5
      %v2059 = vsel %vm1957, %v2057, %v2058
      %v2060 = vrot.slane %v2058, 4
      %v2061 = vrot.slane %v794, 5
      %v2062 = vsel %vm1957, %v2060, %v2061
      %v2063 = vrot.slane %v1922, 5
      %v2064 = vrot.slane %v2063, 4
      %v2065 = vrot.slane %v770, 5
      %v2066 = vsel %vm1957, %v2064, %v2065
      %v2067 = vrot.slane %v2065, 4
      %v2068 = vrot.slane %v795, 5
      %v2069 = vsel %vm1957, %v2067, %v2068
      %s2070 = scalar_lea.vmem %s1, 144
      %v2071 = vld [vmem:[%s2070] sm:$0xff]
      %v2072 = vld [vmem:[%s2070 + $0x8] sm:$0xff]
      %v2073 = vld [vmem:[%s2070 + $0x10] sm:$0xff]
      %v2074 = vld [vmem:[%s2070 + $0x18] sm:$0xff]
      %v2075 = vld [vmem:[%s2070 + $0x20] sm:$0xff]
      %v2076 = vld [vmem:[%s2070 + $0x28] sm:$0xff]
      %v2077 = vld [vmem:[%s2070 + $0x30] sm:$0xff]
      %v2078 = vld [vmem:[%s2070 + $0x38] sm:$0xff]
      %v2079 = vld [vmem:[%s2070 + $0x40] sm:$0xff]
      %v2080 = vunpack.c.l.b16 %v1961
      %v2081 = vunpack.c.l.b16 %v1964
      %v2082 = vunpack.c.l.b16 %v1968
      %v2083 = vunpack.c.l.b16 %v1971
      %v2084 = vunpack.c.l.b16 %v1975
      %v2085 = vunpack.c.l.b16 %v1978
      %v2086 = vunpack.c.l.b16 %v1982
      %v2087 = vunpack.c.l.b16 %v1985
      %v2088 = vunpack.c.l.b16 %v1989
      %v2089 = vunpack.c.l.b16 %v1992
      %v2090 = vunpack.c.l.b16 %v1996
      %v2091 = vunpack.c.l.b16 %v1999
      %v2092 = vunpack.c.l.b16 %v2003
      %v2093 = vunpack.c.l.b16 %v2006
      %v2094 = vunpack.c.l.b16 %v2010
      %v2095 = vunpack.c.l.b16 %v2013
      %v2096 = vunpack.c.l.b16 %v2017
      %v2097 = vunpack.c.l.b16 %v2020
      %v2098 = vunpack.c.l.b16 %v2024
      %v2099 = vunpack.c.l.b16 %v2027
      %v2100 = vunpack.c.l.b16 %v2031
      %v2101 = vunpack.c.l.b16 %v2034
      %v2102 = vunpack.c.l.b16 %v2038
      %v2103 = vunpack.c.l.b16 %v2041
      %v2104 = vunpack.c.l.b16 %v2045
      %v2105 = vunpack.c.l.b16 %v2048
      %v2106 = vunpack.c.l.b16 %v2052
      %v2107 = vunpack.c.l.b16 %v2055
      %v2108 = vunpack.c.l.b16 %v2059
      %v2109 = vunpack.c.l.b16 %v2062
      %v2110 = vunpack.c.l.b16 %v2066
      %v2111 = vunpack.c.l.b16 %v2069
      %v2112 = vpack.c.b16 %v2081, %v2080
      %v2113 = vpack.c.b16 %v2083, %v2082
      %v2114 = vpack.c.b16 %v2085, %v2084
      %v2115 = vpack.c.b16 %v2087, %v2086
      %v2116 = vpack.c.b16 %v2089, %v2088
      %v2117 = vpack.c.b16 %v2091, %v2090
      %v2118 = vpack.c.b16 %v2093, %v2092
      %v2119 = vpack.c.b16 %v2095, %v2094
      %v2120 = vpack.c.b16 %v2097, %v2096
      %v2121 = vpack.c.b16 %v2099, %v2098
      %v2122 = vpack.c.b16 %v2101, %v2100
      %v2123 = vpack.c.b16 %v2103, %v2102
      %v2124 = vpack.c.b16 %v2105, %v2104
      %v2125 = vpack.c.b16 %v2107, %v2106
      %v2126 = vpack.c.b16 %v2109, %v2108
      %v2127 = vpack.c.b16 %v2111, %v2110
      %v2137 = vunpack.c.l.b16 %v2071
      %v2138 = vunpack.c.h.b16 %v2071
      %v2139 = vunpack.c.l.b16 %v2072
      %v2140 = vunpack.c.h.b16 %v2072
      %v2141 = vunpack.c.l.b16 %v2073
      %v2142 = vunpack.c.h.b16 %v2073
      %v2143 = vunpack.c.l.b16 %v2074
      %v2144 = vunpack.c.h.b16 %v2074
      %v2145 = vunpack.c.l.b16 %v2075
      %v2146 = vunpack.c.h.b16 %v2075
      %v2147 = vunpack.c.l.b16 %v2076
      %v2148 = vunpack.c.h.b16 %v2076
      %v2149 = vunpack.c.l.b16 %v2077
      %v2150 = vunpack.c.h.b16 %v2077
      %v2151 = vunpack.c.l.b16 %v2078
      %v2152 = vunpack.c.h.b16 %v2078
      %v2153 = vunpack.c.l.b16 %v2079
      %v2154 = vunpack.c.h.b16 %v2079
      %v2155 = vpack.c.b16 %v2139, %v2137
      %v2156 = vpack.c.b16 %v2140, %v2138
      %v2157 = vpack.c.b16 %v2143, %v2141
      %v2158 = vpack.c.b16 %v2144, %v2142
      %v2159 = vpack.c.b16 %v2147, %v2145
      %v2160 = vpack.c.b16 %v2148, %v2146
      %v2161 = vpack.c.b16 %v2151, %v2149
      %v2162 = vpack.c.b16 %v2152, %v2150
      %v2163 = vpack.c.b16 %v2153, %v2153
      %v2164 = vpack.c.b16 %v2154, %v2154
      %v2174 = vsel %vm1286, %v2112, 0
      %v2177 = vsel %vm1286, %v2113, 0
      %v2180 = vsel %vm1286, %v2114, 0
      %v2183 = vsel %vm1286, %v2115, 0
      %v2186 = vsel %vm1286, %v2116, 0
      %v2189 = vsel %vm1286, %v2117, 0
      %v2192 = vsel %vm1286, %v2118, 0
      %v2195 = vsel %vm1286, %v2119, 0
      %v2198 = vsel %vm1286, %v2120, 0
      %v2201 = vsel %vm1286, %v2121, 0
      %v2204 = vsel %vm1286, %v2122, 0
      %v2207 = vsel %vm1286, %v2123, 0
      %v2210 = vsel %vm1286, %v2124, 0
      %v2213 = vsel %vm1286, %v2125, 0
      %v2216 = vsel %vm1286, %v2126, 0
      %v2219 = vsel %vm1286, %v2127, 0
      %v2222 = vsel %vm1335, %v2163, 0
      %v2225 = vsel %vm1335, %v2164, 0
      %2227 = vmatprep.subr.bf16.mxu0 %v2156
      %2228 = vmatpush1.bf16.msra.mxu0 %v2155
      %2229 = vmatprep.subr.bf16.mxu0 %v2158
      %2230 = vmatpush1.bf16.msra.mxu0 %v2157
      %2231 = vmatprep.subr.bf16.mxu0 %v2160
      %2232 = vmatpush1.bf16.msra.mxu0 %v2159
      %2233 = vmatprep.subr.bf16.mxu0 %v2162
      %2234 = vmatpush1.bf16.msra.mxu0 %v2161
      %2235 = vmatprep.subr.bf16.mxu0 %v2225
      %2236 = vmatpush1.bf16.msra.mxu0 %v2222
      %2237 = vmatprep.subr.bf16.mxu0 0
      %2238 = vmatpush1.bf16.msra.mxu0 0
      %2239 = vmatprep.subr.bf16.mxu0 0
      %2240 = vmatpush1.bf16.msra.mxu0 0
      %2241 = vmatprep.subr.bf16.mxu0 0
      %2242 = vmatpush1.bf16.msra.mxu0 0
      %2243 = vmatprep.subr.bf16.mxu0 0
      %2244 = vmatpush1.bf16.msra.mxu0 0
      %2245 = vmatprep.subr.bf16.mxu0 0
      %2246 = vmatpush1.bf16.msra.mxu0 0
      %2247 = vmatprep.subr.bf16.mxu0 0
      %2248 = vmatpush1.bf16.msra.mxu0 0
      %2249 = vmatprep.subr.bf16.mxu0 0
      %2250 = vmatpush1.bf16.msra.mxu0 0
      %2251 = vmatprep.subr.bf16.mxu0 0
      %2252 = vmatpush1.bf16.msra.mxu0 0
      %2253 = vmatprep.subr.bf16.mxu0 0
      %2254 = vmatpush1.bf16.msra.mxu0 0
      %2255 = vmatprep.subr.bf16.mxu0 0
      %2256 = vmatpush1.bf16.msra.mxu0 0
      %2257 = vmatprep.subr.bf16.mxu0 0
      %2258 = vmatpush1.bf16.msra.mxu0 0
      %2259 = vmatprep.mubr.bf16.mxu0 0
      %2260 = vmatmul.mubr.bf16.gmra.mrb[0].mxu0 %v2174
      %v2261 = vpop.f32.mrb[0].mxu0
      %v2262 = vadd.f32 0.0, %v2261
      %v2263 = vpop.f32.mrb[0].mxu0
      %v2264 = vadd.f32 0.0, %v2263
      %v2265 = vpop.f32.mrb[0].mxu0
      %v2266 = vadd.f32 0.0, %v2265
      %v2267 = vpop.f32.mrb[0].mxu0
      %v2268 = vadd.f32 0.0, %v2267
      %2269 = vmatprep.mubr.bf16.mxu0 0
      %2270 = vmatmul.mubr.bf16.gmra.mrb[0].mxu0 %v2177
      %v2271 = vpop.f32.mrb[0].mxu0
      %v2272 = vadd.f32 0.0, %v2271
      %v2273 = vpop.f32.mrb[0].mxu0
      %v2274 = vadd.f32 0.0, %v2273
      %v2275 = vpop.f32.mrb[0].mxu0
      %v2276 = vadd.f32 0.0, %v2275
      %v2277 = vpop.f32.mrb[0].mxu0
      %v2278 = vadd.f32 0.0, %v2277
      %2279 = vmatprep.mubr.bf16.mxu0 0
      %2280 = vmatmul.mubr.bf16.gmra.mrb[0].mxu0 %v2180
      %v2281 = vpop.f32.mrb[0].mxu0
      %v2282 = vadd.f32 0.0, %v2281
      %v2283 = vpop.f32.mrb[0].mxu0
      %v2284 = vadd.f32 0.0, %v2283
      %v2285 = vpop.f32.mrb[0].mxu0
      %v2286 = vadd.f32 0.0, %v2285
      %v2287 = vpop.f32.mrb[0].mxu0
      %v2288 = vadd.f32 0.0, %v2287
      %2289 = vmatprep.mubr.bf16.mxu0 0
      %2290 = vmatmul.mubr.bf16.gmra.mrb[0].mxu0 %v2183
      %v2291 = vpop.f32.mrb[0].mxu0
      %v2292 = vadd.f32 0.0, %v2291
      %v2293 = vpop.f32.mrb[0].mxu0
      %v2294 = vadd.f32 0.0, %v2293
      %v2295 = vpop.f32.mrb[0].mxu0
      %v2296 = vadd.f32 0.0, %v2295
      %v2297 = vpop.f32.mrb[0].mxu0
      %v2298 = vadd.f32 0.0, %v2297
      %2299 = vmatprep.mubr.bf16.mxu0 0
      %2300 = vmatmul.mubr.bf16.gmra.mrb[0].mxu0 %v2186
      %v2301 = vpop.f32.mrb[0].mxu0
      %v2302 = vadd.f32 0.0, %v2301
      %v2303 = vpop.f32.mrb[0].mxu0
      %v2304 = vadd.f32 0.0, %v2303
      %v2305 = vpop.f32.mrb[0].mxu0
      %v2306 = vadd.f32 0.0, %v2305
      %v2307 = vpop.f32.mrb[0].mxu0
      %v2308 = vadd.f32 0.0, %v2307
      %2309 = vmatprep.mubr.bf16.mxu0 0
      %2310 = vmatmul.mubr.bf16.gmra.mrb[0].mxu0 %v2189
      %v2311 = vpop.f32.mrb[0].mxu0
      %v2312 = vadd.f32 0.0, %v2311
      %v2313 = vpop.f32.mrb[0].mxu0
      %v2314 = vadd.f32 0.0, %v2313
      %v2315 = vpop.f32.mrb[0].mxu0
      %v2316 = vadd.f32 0.0, %v2315
      %v2317 = vpop.f32.mrb[0].mxu0
      %v2318 = vadd.f32 0.0, %v2317
      %2319 = vmatprep.mubr.bf16.mxu0 0
      %2320 = vmatmul.mubr.bf16.gmra.mrb[0].mxu0 %v2192
      %v2321 = vpop.f32.mrb[0].mxu0
      %v2322 = vadd.f32 0.0, %v2321
      %v2323 = vpop.f32.mrb[0].mxu0
      %v2324 = vadd.f32 0.0, %v2323
      %v2325 = vpop.f32.mrb[0].mxu0
      %v2326 = vadd.f32 0.0, %v2325
      %v2327 = vpop.f32.mrb[0].mxu0
      %v2328 = vadd.f32 0.0, %v2327
      %2329 = vmatprep.mubr.bf16.mxu0 0
      %2330 = vmatmul.mubr.bf16.gmra.mrb[0].mxu0 %v2195
      %v2331 = vpop.f32.mrb[0].mxu0
      %v2332 = vadd.f32 0.0, %v2331
      %v2333 = vpop.f32.mrb[0].mxu0
      %v2334 = vadd.f32 0.0, %v2333
      %v2335 = vpop.f32.mrb[0].mxu0
      %v2336 = vadd.f32 0.0, %v2335
      %v2337 = vpop.f32.mrb[0].mxu0
      %v2338 = vadd.f32 0.0, %v2337
      %2339 = vmatprep.mubr.bf16.mxu0 0
      %2340 = vmatmul.mubr.bf16.gmra.mrb[0].mxu0 %v2198
      %v2341 = vpop.f32.mrb[0].mxu0
      %v2342 = vadd.f32 0.0, %v2341
      %v2343 = vpop.f32.mrb[0].mxu0
      %v2344 = vadd.f32 0.0, %v2343
      %v2345 = vpop.f32.mrb[0].mxu0
      %v2346 = vadd.f32 0.0, %v2345
      %v2347 = vpop.f32.mrb[0].mxu0
      %v2348 = vadd.f32 0.0, %v2347
      %2349 = vmatprep.mubr.bf16.mxu0 0
      %2350 = vmatmul.mubr.bf16.gmra.mrb[0].mxu0 %v2201
      %v2351 = vpop.f32.mrb[0].mxu0
      %v2352 = vadd.f32 0.0, %v2351
      %v2353 = vpop.f32.mrb[0].mxu0
      %v2354 = vadd.f32 0.0, %v2353
      %v2355 = vpop.f32.mrb[0].mxu0
      %v2356 = vadd.f32 0.0, %v2355
      %v2357 = vpop.f32.mrb[0].mxu0
      %v2358 = vadd.f32 0.0, %v2357
      %2359 = vmatprep.mubr.bf16.mxu0 0
      %2360 = vmatmul.mubr.bf16.gmra.mrb[0].mxu0 %v2204
      %v2361 = vpop.f32.mrb[0].mxu0
      %v2362 = vadd.f32 0.0, %v2361
      %v2363 = vpop.f32.mrb[0].mxu0
      %v2364 = vadd.f32 0.0, %v2363
      %v2365 = vpop.f32.mrb[0].mxu0
      %v2366 = vadd.f32 0.0, %v2365
      %v2367 = vpop.f32.mrb[0].mxu0
      %v2368 = vadd.f32 0.0, %v2367
      %2369 = vmatprep.mubr.bf16.mxu0 0
      %2370 = vmatmul.mubr.bf16.gmra.mrb[0].mxu0 %v2207
      %v2371 = vpop.f32.mrb[0].mxu0
      %v2372 = vadd.f32 0.0, %v2371
      %v2373 = vpop.f32.mrb[0].mxu0
      %v2374 = vadd.f32 0.0, %v2373
      %v2375 = vpop.f32.mrb[0].mxu0
      %v2376 = vadd.f32 0.0, %v2375
      %v2377 = vpop.f32.mrb[0].mxu0
      %v2378 = vadd.f32 0.0, %v2377
      %2379 = vmatprep.mubr.bf16.mxu0 0
      %2380 = vmatmul.mubr.bf16.gmra.mrb[0].mxu0 %v2210
      %v2381 = vpop.f32.mrb[0].mxu0
      %v2382 = vadd.f32 0.0, %v2381
      %v2383 = vpop.f32.mrb[0].mxu0
      %v2384 = vadd.f32 0.0, %v2383
      %v2385 = vpop.f32.mrb[0].mxu0
      %v2386 = vadd.f32 0.0, %v2385
      %v2387 = vpop.f32.mrb[0].mxu0
      %v2388 = vadd.f32 0.0, %v2387
      %2389 = vmatprep.mubr.bf16.mxu0 0
      %2390 = vmatmul.mubr.bf16.gmra.mrb[0].mxu0 %v2213
      %v2391 = vpop.f32.mrb[0].mxu0
      %v2392 = vadd.f32 0.0, %v2391
      %v2393 = vpop.f32.mrb[0].mxu0
      %v2394 = vadd.f32 0.0, %v2393
      %v2395 = vpop.f32.mrb[0].mxu0
      %v2396 = vadd.f32 0.0, %v2395
      %v2397 = vpop.f32.mrb[0].mxu0
      %v2398 = vadd.f32 0.0, %v2397
      %2399 = vmatprep.mubr.bf16.mxu0 0
      %2400 = vmatmul.mubr.bf16.gmra.mrb[0].mxu0 %v2216
      %v2401 = vpop.f32.mrb[0].mxu0
      %v2402 = vadd.f32 0.0, %v2401
      %v2403 = vpop.f32.mrb[0].mxu0
      %v2404 = vadd.f32 0.0, %v2403
      %v2405 = vpop.f32.mrb[0].mxu0
      %v2406 = vadd.f32 0.0, %v2405
      %v2407 = vpop.f32.mrb[0].mxu0
      %v2408 = vadd.f32 0.0, %v2407
      %2409 = vmatprep.mubr.bf16.mxu0 0
      %2410 = vmatmul.mubr.bf16.gmra.mrb[0].mxu0 %v2219
      %v2411 = vpop.f32.mrb[0].mxu0
      %v2412 = vadd.f32 0.0, %v2411
      %v2413 = vpop.f32.mrb[0].mxu0
      %v2414 = vadd.f32 0.0, %v2413
      %v2415 = vpop.f32.mrb[0].mxu0
      %v2416 = vadd.f32 0.0, %v2415
      %v2417 = vpop.f32.mrb[0].mxu0
      %v2418 = vadd.f32 0.0, %v2417
      %2419 = vdwg.mxu0
      %v2420 = vadd.f32 %v1749, %v2262
      %v2421 = vadd.f32 %v1751, %v2264
      %v2422 = vadd.f32 %v1753, %v2266
      %v2423 = vadd.f32 %v1755, %v2268
      %v2424 = vadd.f32 %v1759, %v2272
      %v2425 = vadd.f32 %v1761, %v2274
      %v2426 = vadd.f32 %v1763, %v2276
      %v2427 = vadd.f32 %v1765, %v2278
      %v2428 = vadd.f32 %v1769, %v2282
      %v2429 = vadd.f32 %v1771, %v2284
      %v2430 = vadd.f32 %v1773, %v2286
      %v2431 = vadd.f32 %v1775, %v2288
      %v2432 = vadd.f32 %v1779, %v2292
      %v2433 = vadd.f32 %v1781, %v2294
      %v2434 = vadd.f32 %v1783, %v2296
      %v2435 = vadd.f32 %v1785, %v2298
      %v2436 = vadd.f32 %v1789, %v2302
      %v2437 = vadd.f32 %v1791, %v2304
      %v2438 = vadd.f32 %v1793, %v2306
      %v2439 = vadd.f32 %v1795, %v2308
      %v2440 = vadd.f32 %v1799, %v2312
      %v2441 = vadd.f32 %v1801, %v2314
      %v2442 = vadd.f32 %v1803, %v2316
      %v2443 = vadd.f32 %v1805, %v2318
      %v2444 = vadd.f32 %v1809, %v2322
      %v2445 = vadd.f32 %v1811, %v2324
      %v2446 = vadd.f32 %v1813, %v2326
      %v2447 = vadd.f32 %v1815, %v2328
      %v2448 = vadd.f32 %v1819, %v2332
      %v2449 = vadd.f32 %v1821, %v2334
      %v2450 = vadd.f32 %v1823, %v2336
      %v2451 = vadd.f32 %v1825, %v2338
      %v2452 = vadd.f32 %v1829, %v2342
      %v2453 = vadd.f32 %v1831, %v2344
      %v2454 = vadd.f32 %v1833, %v2346
      %v2455 = vadd.f32 %v1835, %v2348
      %v2456 = vadd.f32 %v1839, %v2352
      %v2457 = vadd.f32 %v1841, %v2354
      %v2458 = vadd.f32 %v1843, %v2356
      %v2459 = vadd.f32 %v1845, %v2358
      %v2460 = vadd.f32 %v1849, %v2362
      %v2461 = vadd.f32 %v1851, %v2364
      %v2462 = vadd.f32 %v1853, %v2366
      %v2463 = vadd.f32 %v1855, %v2368
      %v2464 = vadd.f32 %v1859, %v2372
      %v2465 = vadd.f32 %v1861, %v2374
      %v2466 = vadd.f32 %v1863, %v2376
      %v2467 = vadd.f32 %v1865, %v2378
      %v2468 = vadd.f32 %v1869, %v2382
      %v2469 = vadd.f32 %v1871, %v2384
      %v2470 = vadd.f32 %v1873, %v2386
      %v2471 = vadd.f32 %v1875, %v2388
      %v2472 = vadd.f32 %v1879, %v2392
      %v2473 = vadd.f32 %v1881, %v2394
      %v2474 = vadd.f32 %v1883, %v2396
      %v2475 = vadd.f32 %v1885, %v2398
      %v2476 = vadd.f32 %v1889, %v2402
      %v2477 = vadd.f32 %v1891, %v2404
      %v2478 = vadd.f32 %v1893, %v2406
      %v2479 = vadd.f32 %v1895, %v2408
      %v2480 = vadd.f32 %v1899, %v2412
      %v2481 = vadd.f32 %v1901, %v2414
      %v2482 = vadd.f32 %v1903, %v2416
      %v2483 = vadd.f32 %v1905, %v2418
      %v2484 = vld [vmem:[%s621] sm:$0xf]
      %v2485 = vld [vmem:[%s621 + $0x4] sm:$0xf]
      %v2486 = vld [vmem:[%s621 + $0xc] sm:$0xf]
      %v2487 = vld [vmem:[%s621 + $0x10] sm:$0xf]
      %v2488 = vld [vmem:[%s621 + $0x18] sm:$0xf]
      %v2489 = vld [vmem:[%s621 + $0x1c] sm:$0xf]
      %v2490 = vld [vmem:[%s621 + $0x24] sm:$0xf]
      %v2491 = vld [vmem:[%s621 + $0x28] sm:$0xf]
      %v2492 = vld [vmem:[%s621 + $0x30] sm:$0xf]
      %v2493 = vld [vmem:[%s621 + $0x34] sm:$0xf]
      %v2494 = vld [vmem:[%s621 + $0x3c] sm:$0xf]
      %v2495 = vld [vmem:[%s621 + $0x40] sm:$0xf]
      %v2496 = vld [vmem:[%s621 + $0x48] sm:$0xf]
      %v2497 = vld [vmem:[%s621 + $0x4c] sm:$0xf]
      %v2498 = vld [vmem:[%s621 + $0x54] sm:$0xf]
      %v2499 = vld [vmem:[%s621 + $0x58] sm:$0xf]
      %v2500 = vld [vmem:[%s621 + $0x78] sm:$0xf]
      %v2501 = vld [vmem:[%s621 + $0x7c] sm:$0xf]
      %v2502 = vld [vmem:[%s621 + $0x84] sm:$0xf]
      %v2503 = vld [vmem:[%s621 + $0x88] sm:$0xf]
      %v2504 = vld [vmem:[%s621 + $0x90] sm:$0xf]
      %v2505 = vld [vmem:[%s621 + $0x94] sm:$0xf]
      %v2506 = vld [vmem:[%s621 + $0x9c] sm:$0xf]
      %v2507 = vld [vmem:[%s621 + $0xa0] sm:$0xf]
      %v2508 = vld [vmem:[%s621 + $0xa8] sm:$0xf]
      %v2509 = vld [vmem:[%s621 + $0xac] sm:$0xf]
      %v2510 = vld [vmem:[%s621 + $0xb4] sm:$0xf]
      %v2511 = vld [vmem:[%s621 + $0xb8] sm:$0xf]
      %v2512 = vld [vmem:[%s621 + $0xc0] sm:$0xf]
      %v2513 = vld [vmem:[%s621 + $0xc4] sm:$0xf]
      %v2514 = vld [vmem:[%s621 + $0xcc] sm:$0xf]
      %v2515 = vld [vmem:[%s621 + $0xd0] sm:$0xf]
      %s2516 = scalar_lea.vmem %s1, 216
      %v2517 = vld [vmem:[%s2516] sm:$0xff]
      %v2518 = vld [vmem:[%s2516 + $0x8] sm:$0xff]
      %v2519 = vld [vmem:[%s2516 + $0x10] sm:$0xff]
      %v2520 = vld [vmem:[%s2516 + $0x18] sm:$0xff]
      %v2521 = vld [vmem:[%s2516 + $0x20] sm:$0xff]
      %v2522 = vld [vmem:[%s2516 + $0x28] sm:$0xff]
      %v2523 = vld [vmem:[%s2516 + $0x30] sm:$0xff]
      %v2524 = vld [vmem:[%s2516 + $0x38] sm:$0xff]
      %v2525 = vld [vmem:[%s2516 + $0x40] sm:$0xff]
      %v2558 = vunpack.c.l.b16 %v2484
      %v2559 = vunpack.c.l.b16 %v2485
      %v2560 = vunpack.c.l.b16 %v2486
      %v2561 = vunpack.c.l.b16 %v2487
      %v2562 = vunpack.c.l.b16 %v2488
      %v2563 = vunpack.c.l.b16 %v2489
      %v2564 = vunpack.c.l.b16 %v2490
      %v2565 = vunpack.c.l.b16 %v2491
      %v2566 = vunpack.c.l.b16 %v2492
      %v2567 = vunpack.c.l.b16 %v2493
      %v2568 = vunpack.c.l.b16 %v2494
      %v2569 = vunpack.c.l.b16 %v2495
      %v2570 = vunpack.c.l.b16 %v2496
      %v2571 = vunpack.c.l.b16 %v2497
      %v2572 = vunpack.c.l.b16 %v2498
      %v2573 = vunpack.c.l.b16 %v2499
      %v2574 = vunpack.c.l.b16 %v2500
      %v2575 = vunpack.c.l.b16 %v2501
      %v2576 = vunpack.c.l.b16 %v2502
      %v2577 = vunpack.c.l.b16 %v2503
      %v2578 = vunpack.c.l.b16 %v2504
      %v2579 = vunpack.c.l.b16 %v2505
      %v2580 = vunpack.c.l.b16 %v2506
      %v2581 = vunpack.c.l.b16 %v2507
      %v2582 = vunpack.c.l.b16 %v2508
      %v2583 = vunpack.c.l.b16 %v2509
      %v2584 = vunpack.c.l.b16 %v2510
      %v2585 = vunpack.c.l.b16 %v2511
      %v2586 = vunpack.c.l.b16 %v2512
      %v2587 = vunpack.c.l.b16 %v2513
      %v2588 = vunpack.c.l.b16 %v2514
      %v2589 = vunpack.c.l.b16 %v2515
      %v2590 = vpack.c.b16 %v2559, %v2558
      %v2591 = vpack.c.b16 %v2561, %v2560
      %v2592 = vpack.c.b16 %v2563, %v2562
      %v2593 = vpack.c.b16 %v2565, %v2564
      %v2594 = vpack.c.b16 %v2567, %v2566
      %v2595 = vpack.c.b16 %v2569, %v2568
      %v2596 = vpack.c.b16 %v2571, %v2570
      %v2597 = vpack.c.b16 %v2573, %v2572
      %v2598 = vpack.c.b16 %v2575, %v2574
      %v2599 = vpack.c.b16 %v2577, %v2576
      %v2600 = vpack.c.b16 %v2579, %v2578
      %v2601 = vpack.c.b16 %v2581, %v2580
      %v2602 = vpack.c.b16 %v2583, %v2582
      %v2603 = vpack.c.b16 %v2585, %v2584
      %v2604 = vpack.c.b16 %v2587, %v2586
      %v2605 = vpack.c.b16 %v2589, %v2588
      %v2615 = vunpack.c.l.b16 %v2517
      %v2616 = vunpack.c.h.b16 %v2517
      %v2617 = vunpack.c.l.b16 %v2518
      %v2618 = vunpack.c.h.b16 %v2518
      %v2619 = vunpack.c.l.b16 %v2519
      %v2620 = vunpack.c.h.b16 %v2519
      %v2621 = vunpack.c.l.b16 %v2520
      %v2622 = vunpack.c.h.b16 %v2520
      %v2623 = vunpack.c.l.b16 %v2521
      %v2624 = vunpack.c.h.b16 %v2521
      %v2625 = vunpack.c.l.b16 %v2522
      %v2626 = vunpack.c.h.b16 %v2522
      %v2627 = vunpack.c.l.b16 %v2523
      %v2628 = vunpack.c.h.b16 %v2523
      %v2629 = vunpack.c.l.b16 %v2524
      %v2630 = vunpack.c.h.b16 %v2524
      %v2631 = vunpack.c.l.b16 %v2525
      %v2632 = vunpack.c.h.b16 %v2525
      %v2633 = vpack.c.b16 %v2617, %v2615
      %v2634 = vpack.c.b16 %v2618, %v2616
      %v2635 = vpack.c.b16 %v2621, %v2619
      %v2636 = vpack.c.b16 %v2622, %v2620
      %v2637 = vpack.c.b16 %v2625, %v2623
      %v2638 = vpack.c.b16 %v2626, %v2624
      %v2639 = vpack.c.b16 %v2629, %v2627
      %v2640 = vpack.c.b16 %v2630, %v2628
      %v2641 = vpack.c.b16 %v2631, %v2631
      %v2642 = vpack.c.b16 %v2632, %v2632
      %v2652 = vsel %vm1286, %v2590, 0
      %v2655 = vsel %vm1286, %v2591, 0
      %v2658 = vsel %vm1286, %v2592, 0
      %v2661 = vsel %vm1286, %v2593, 0
      %v2664 = vsel %vm1286, %v2594, 0
      %v2667 = vsel %vm1286, %v2595, 0
      %v2670 = vsel %vm1286, %v2596, 0
      %v2673 = vsel %vm1286, %v2597, 0
      %v2676 = vsel %vm1286, %v2598, 0
      %v2679 = vsel %vm1286, %v2599, 0
      %v2682 = vsel %vm1286, %v2600, 0
      %v2685 = vsel %vm1286, %v2601, 0
      %v2688 = vsel %vm1286, %v2602, 0
      %v2691 = vsel %vm1286, %v2603, 0
      %v2694 = vsel %vm1286, %v2604, 0
      %v2697 = vsel %vm1286, %v2605, 0
      %v2700 = vsel %vm1335, %v2641, 0
      %v2703 = vsel %vm1335, %v2642, 0
      %2705 = vmatprep.subr.bf16.mxu0 %v2634
      %2706 = vmatpush1.bf16.msra.mxu0 %v2633
      %2707 = vmatprep.subr.bf16.mxu0 %v2636
      %2708 = vmatpush1.bf16.msra.mxu0 %v2635
      %2709 = vmatprep.subr.bf16.mxu0 %v2638
      %2710 = vmatpush1.bf16.msra.mxu0 %v2637
      %2711 = vmatprep.subr.bf16.mxu0 %v2640
      %2712 = vmatpush1.bf16.msra.mxu0 %v2639
      %2713 = vmatprep.subr.bf16.mxu0 %v2703
      %2714 = vmatpush1.bf16.msra.mxu0 %v2700
      %2715 = vmatprep.subr.bf16.mxu0 0
      %2716 = vmatpush1.bf16.msra.mxu0 0
      %2717 = vmatprep.subr.bf16.mxu0 0
      %2718 = vmatpush1.bf16.msra.mxu0 0
      %2719 = vmatprep.subr.bf16.mxu0 0
      %2720 = vmatpush1.bf16.msra.mxu0 0
      %2721 = vmatprep.subr.bf16.mxu0 0
      %2722 = vmatpush1.bf16.msra.mxu0 0
      %2723 = vmatprep.subr.bf16.mxu0 0
      %2724 = vmatpush1.bf16.msra.mxu0 0
      %2725 = vmatprep.subr.bf16.mxu0 0
      %2726 = vmatpush1.bf16.msra.mxu0 0
      %2727 = vmatprep.subr.bf16.mxu0 0
      %2728 = vmatpush1.bf16.msra.mxu0 0
      %2729 = vmatprep.subr.bf16.mxu0 0
      %2730 = vmatpush1.bf16.msra.mxu0 0
      %2731 = vmatprep.subr.bf16.mxu0 0
      %2732 = vmatpush1.bf16.msra.mxu0 0
      %2733 = vmatprep.subr.bf16.mxu0 0
      %2734 = vmatpush1.bf16.msra.mxu0 0
      %2735 = vmatprep.subr.bf16.mxu0 0
      %2736 = vmatpush1.bf16.msra.mxu0 0
      %2737 = vmatprep.mubr.bf16.mxu0 0
      %2738 = vmatmul.mubr.bf16.gmra.mrb[0].mxu0 %v2652
      %v2739 = vpop.f32.mrb[0].mxu0
      %v2740 = vadd.f32 0.0, %v2739
      %v2741 = vpop.f32.mrb[0].mxu0
      %v2742 = vadd.f32 0.0, %v2741
      %v2743 = vpop.f32.mrb[0].mxu0
      %v2744 = vadd.f32 0.0, %v2743
      %v2745 = vpop.f32.mrb[0].mxu0
      %v2746 = vadd.f32 0.0, %v2745
      %2747 = vmatprep.mubr.bf16.mxu0 0
      %2748 = vmatmul.mubr.bf16.gmra.mrb[0].mxu0 %v2655
      %v2749 = vpop.f32.mrb[0].mxu0
      %v2750 = vadd.f32 0.0, %v2749
      %v2751 = vpop.f32.mrb[0].mxu0
      %v2752 = vadd.f32 0.0, %v2751
      %v2753 = vpop.f32.mrb[0].mxu0
      %v2754 = vadd.f32 0.0, %v2753
      %v2755 = vpop.f32.mrb[0].mxu0
      %v2756 = vadd.f32 0.0, %v2755
      %2757 = vmatprep.mubr.bf16.mxu0 0
      %2758 = vmatmul.mubr.bf16.gmra.mrb[0].mxu0 %v2658
      %v2759 = vpop.f32.mrb[0].mxu0
      %v2760 = vadd.f32 0.0, %v2759
      %v2761 = vpop.f32.mrb[0].mxu0
      %v2762 = vadd.f32 0.0, %v2761
      %v2763 = vpop.f32.mrb[0].mxu0
      %v2764 = vadd.f32 0.0, %v2763
      %v2765 = vpop.f32.mrb[0].mxu0
      %v2766 = vadd.f32 0.0, %v2765
      %2767 = vmatprep.mubr.bf16.mxu0 0
      %2768 = vmatmul.mubr.bf16.gmra.mrb[0].mxu0 %v2661
      %v2769 = vpop.f32.mrb[0].mxu0
      %v2770 = vadd.f32 0.0, %v2769
      %v2771 = vpop.f32.mrb[0].mxu0
      %v2772 = vadd.f32 0.0, %v2771
      %v2773 = vpop.f32.mrb[0].mxu0
      %v2774 = vadd.f32 0.0, %v2773
      %v2775 = vpop.f32.mrb[0].mxu0
      %v2776 = vadd.f32 0.0, %v2775
      %2777 = vmatprep.mubr.bf16.mxu0 0
      %2778 = vmatmul.mubr.bf16.gmra.mrb[0].mxu0 %v2664
      %v2779 = vpop.f32.mrb[0].mxu0
      %v2780 = vadd.f32 0.0, %v2779
      %v2781 = vpop.f32.mrb[0].mxu0
      %v2782 = vadd.f32 0.0, %v2781
      %v2783 = vpop.f32.mrb[0].mxu0
      %v2784 = vadd.f32 0.0, %v2783
      %v2785 = vpop.f32.mrb[0].mxu0
      %v2786 = vadd.f32 0.0, %v2785
      %2787 = vmatprep.mubr.bf16.mxu0 0
      %2788 = vmatmul.mubr.bf16.gmra.mrb[0].mxu0 %v2667
      %v2789 = vpop.f32.mrb[0].mxu0
      %v2790 = vadd.f32 0.0, %v2789
      %v2791 = vpop.f32.mrb[0].mxu0
      %v2792 = vadd.f32 0.0, %v2791
      %v2793 = vpop.f32.mrb[0].mxu0
      %v2794 = vadd.f32 0.0, %v2793
      %v2795 = vpop.f32.mrb[0].mxu0
      %v2796 = vadd.f32 0.0, %v2795
      %2797 = vmatprep.mubr.bf16.mxu0 0
      %2798 = vmatmul.mubr.bf16.gmra.mrb[0].mxu0 %v2670
      %v2799 = vpop.f32.mrb[0].mxu0
      %v2800 = vadd.f32 0.0, %v2799
      %v2801 = vpop.f32.mrb[0].mxu0
      %v2802 = vadd.f32 0.0, %v2801
      %v2803 = vpop.f32.mrb[0].mxu0
      %v2804 = vadd.f32 0.0, %v2803
      %v2805 = vpop.f32.mrb[0].mxu0
      %v2806 = vadd.f32 0.0, %v2805
      %2807 = vmatprep.mubr.bf16.mxu0 0
      %2808 = vmatmul.mubr.bf16.gmra.mrb[0].mxu0 %v2673
      %v2809 = vpop.f32.mrb[0].mxu0
      %v2810 = vadd.f32 0.0, %v2809
      %v2811 = vpop.f32.mrb[0].mxu0
      %v2812 = vadd.f32 0.0, %v2811
      %v2813 = vpop.f32.mrb[0].mxu0
      %v2814 = vadd.f32 0.0, %v2813
      %v2815 = vpop.f32.mrb[0].mxu0
      %v2816 = vadd.f32 0.0, %v2815
      %2817 = vmatprep.mubr.bf16.mxu0 0
      %2818 = vmatmul.mubr.bf16.gmra.mrb[0].mxu0 %v2676
      %v2819 = vpop.f32.mrb[0].mxu0
      %v2820 = vadd.f32 0.0, %v2819
      %v2821 = vpop.f32.mrb[0].mxu0
      %v2822 = vadd.f32 0.0, %v2821
      %v2823 = vpop.f32.mrb[0].mxu0
      %v2824 = vadd.f32 0.0, %v2823
      %v2825 = vpop.f32.mrb[0].mxu0
      %v2826 = vadd.f32 0.0, %v2825
      %2827 = vmatprep.mubr.bf16.mxu0 0
      %2828 = vmatmul.mubr.bf16.gmra.mrb[0].mxu0 %v2679
      %v2829 = vpop.f32.mrb[0].mxu0
      %v2830 = vadd.f32 0.0, %v2829
      %v2831 = vpop.f32.mrb[0].mxu0
      %v2832 = vadd.f32 0.0, %v2831
      %v2833 = vpop.f32.mrb[0].mxu0
      %v2834 = vadd.f32 0.0, %v2833
      %v2835 = vpop.f32.mrb[0].mxu0
      %v2836 = vadd.f32 0.0, %v2835
      %2837 = vmatprep.mubr.bf16.mxu0 0
      %2838 = vmatmul.mubr.bf16.gmra.mrb[0].mxu0 %v2682
      %v2839 = vpop.f32.mrb[0].mxu0
      %v2840 = vadd.f32 0.0, %v2839
      %v2841 = vpop.f32.mrb[0].mxu0
      %v2842 = vadd.f32 0.0, %v2841
      %v2843 = vpop.f32.mrb[0].mxu0
      %v2844 = vadd.f32 0.0, %v2843
      %v2845 = vpop.f32.mrb[0].mxu0
      %v2846 = vadd.f32 0.0, %v2845
      %2847 = vmatprep.mubr.bf16.mxu0 0
      %2848 = vmatmul.mubr.bf16.gmra.mrb[0].mxu0 %v2685
      %v2849 = vpop.f32.mrb[0].mxu0
      %v2850 = vadd.f32 0.0, %v2849
      %v2851 = vpop.f32.mrb[0].mxu0
      %v2852 = vadd.f32 0.0, %v2851
      %v2853 = vpop.f32.mrb[0].mxu0
      %v2854 = vadd.f32 0.0, %v2853
      %v2855 = vpop.f32.mrb[0].mxu0
      %v2856 = vadd.f32 0.0, %v2855
      %2857 = vmatprep.mubr.bf16.mxu0 0
      %2858 = vmatmul.mubr.bf16.gmra.mrb[0].mxu0 %v2688
      %v2859 = vpop.f32.mrb[0].mxu0
      %v2860 = vadd.f32 0.0, %v2859
      %v2861 = vpop.f32.mrb[0].mxu0
      %v2862 = vadd.f32 0.0, %v2861
      %v2863 = vpop.f32.mrb[0].mxu0
      %v2864 = vadd.f32 0.0, %v2863
      %v2865 = vpop.f32.mrb[0].mxu0
      %v2866 = vadd.f32 0.0, %v2865
      %2867 = vmatprep.mubr.bf16.mxu0 0
      %2868 = vmatmul.mubr.bf16.gmra.mrb[0].mxu0 %v2691
      %v2869 = vpop.f32.mrb[0].mxu0
      %v2870 = vadd.f32 0.0, %v2869
      %v2871 = vpop.f32.mrb[0].mxu0
      %v2872 = vadd.f32 0.0, %v2871
      %v2873 = vpop.f32.mrb[0].mxu0
      %v2874 = vadd.f32 0.0, %v2873
      %v2875 = vpop.f32.mrb[0].mxu0
      %v2876 = vadd.f32 0.0, %v2875
      %2877 = vmatprep.mubr.bf16.mxu0 0
      %2878 = vmatmul.mubr.bf16.gmra.mrb[0].mxu0 %v2694
      %v2879 = vpop.f32.mrb[0].mxu0
      %v2880 = vadd.f32 0.0, %v2879
      %v2881 = vpop.f32.mrb[0].mxu0
      %v2882 = vadd.f32 0.0, %v2881
      %v2883 = vpop.f32.mrb[0].mxu0
      %v2884 = vadd.f32 0.0, %v2883
      %v2885 = vpop.f32.mrb[0].mxu0
      %v2886 = vadd.f32 0.0, %v2885
      %2887 = vmatprep.mubr.bf16.mxu0 0
      %2888 = vmatmul.mubr.bf16.gmra.mrb[0].mxu0 %v2697
      %v2889 = vpop.f32.mrb[0].mxu0
      %v2890 = vadd.f32 0.0, %v2889
      %v2891 = vpop.f32.mrb[0].mxu0
      %v2892 = vadd.f32 0.0, %v2891
      %v2893 = vpop.f32.mrb[0].mxu0
      %v2894 = vadd.f32 0.0, %v2893
      %v2895 = vpop.f32.mrb[0].mxu0
      %v2896 = vadd.f32 0.0, %v2895
      %2897 = vdwg.mxu0
      %v2898 = vadd.f32 %v2420, %v2740
      %v2899 = vadd.f32 %v2421, %v2742
      %v2900 = vadd.f32 %v2422, %v2744
      %v2901 = vadd.f32 %v2423, %v2746
      %v2902 = vadd.f32 %v2424, %v2750
      %v2903 = vadd.f32 %v2425, %v2752
      %v2904 = vadd.f32 %v2426, %v2754
      %v2905 = vadd.f32 %v2427, %v2756
      %v2906 = vadd.f32 %v2428, %v2760
      %v2907 = vadd.f32 %v2429, %v2762
      %v2908 = vadd.f32 %v2430, %v2764
      %v2909 = vadd.f32 %v2431, %v2766
      %v2910 = vadd.f32 %v2432, %v2770
      %v2911 = vadd.f32 %v2433, %v2772
      %v2912 = vadd.f32 %v2434, %v2774
      %v2913 = vadd.f32 %v2435, %v2776
      %v2914 = vadd.f32 %v2436, %v2780
      %v2915 = vadd.f32 %v2437, %v2782
      %v2916 = vadd.f32 %v2438, %v2784
      %v2917 = vadd.f32 %v2439, %v2786
      %v2918 = vadd.f32 %v2440, %v2790
      %v2919 = vadd.f32 %v2441, %v2792
      %v2920 = vadd.f32 %v2442, %v2794
      %v2921 = vadd.f32 %v2443, %v2796
      %v2922 = vadd.f32 %v2444, %v2800
      %v2923 = vadd.f32 %v2445, %v2802
      %v2924 = vadd.f32 %v2446, %v2804
      %v2925 = vadd.f32 %v2447, %v2806
      %v2926 = vadd.f32 %v2448, %v2810
      %v2927 = vadd.f32 %v2449, %v2812
      %v2928 = vadd.f32 %v2450, %v2814
      %v2929 = vadd.f32 %v2451, %v2816
      %v2930 = vadd.f32 %v2452, %v2820
      %v2931 = vadd.f32 %v2453, %v2822
      %v2932 = vadd.f32 %v2454, %v2824
      %v2933 = vadd.f32 %v2455, %v2826
      %v2934 = vadd.f32 %v2456, %v2830
      %v2935 = vadd.f32 %v2457, %v2832
      %v2936 = vadd.f32 %v2458, %v2834
      %v2937 = vadd.f32 %v2459, %v2836
      %v2938 = vadd.f32 %v2460, %v2840
      %v2939 = vadd.f32 %v2461, %v2842
      %v2940 = vadd.f32 %v2462, %v2844
      %v2941 = vadd.f32 %v2463, %v2846
      %v2942 = vadd.f32 %v2464, %v2850
      %v2943 = vadd.f32 %v2465, %v2852
      %v2944 = vadd.f32 %v2466, %v2854
      %v2945 = vadd.f32 %v2467, %v2856
      %v2946 = vadd.f32 %v2468, %v2860
      %v2947 = vadd.f32 %v2469, %v2862
      %v2948 = vadd.f32 %v2470, %v2864
      %v2949 = vadd.f32 %v2471, %v2866
      %v2950 = vadd.f32 %v2472, %v2870
      %v2951 = vadd.f32 %v2473, %v2872
      %v2952 = vadd.f32 %v2474, %v2874
      %v2953 = vadd.f32 %v2475, %v2876
      %v2954 = vadd.f32 %v2476, %v2880
      %v2955 = vadd.f32 %v2477, %v2882
      %v2956 = vadd.f32 %v2478, %v2884
      %v2957 = vadd.f32 %v2479, %v2886
      %v2958 = vadd.f32 %v2480, %v2890
      %v2959 = vadd.f32 %v2481, %v2892
      %v2960 = vadd.f32 %v2482, %v2894
      %v2961 = vadd.f32 %v2483, %v2896
      %v2962 = vld [vmem:[%s621] sm:$0xf]
      %v2963 = vld [vmem:[%s621 + $0x4] sm:$0xf]
      %v2964 = vld [vmem:[%s621 + $0x8] sm:$0x1]
      %v2965 = vld [vmem:[%s621 + $0xc] sm:$0xf]
      %v2966 = vld [vmem:[%s621 + $0x10] sm:$0xf]
      %v2967 = vld [vmem:[%s621 + $0x14] sm:$0x1]
      %v2968 = vld [vmem:[%s621 + $0x18] sm:$0xf]
      %v2969 = vld [vmem:[%s621 + $0x1c] sm:$0xf]
      %v2970 = vld [vmem:[%s621 + $0x20] sm:$0x1]
      %v2971 = vld [vmem:[%s621 + $0x24] sm:$0xf]
      %v2972 = vld [vmem:[%s621 + $0x28] sm:$0xf]
      %v2973 = vld [vmem:[%s621 + $0x2c] sm:$0x1]
      %v2974 = vld [vmem:[%s621 + $0x30] sm:$0xf]
      %v2975 = vld [vmem:[%s621 + $0x34] sm:$0xf]
      %v2976 = vld [vmem:[%s621 + $0x38] sm:$0x1]
      %v2977 = vld [vmem:[%s621 + $0x3c] sm:$0xf]
      %v2978 = vld [vmem:[%s621 + $0x40] sm:$0xf]
      %v2979 = vld [vmem:[%s621 + $0x44] sm:$0x1]
      %v2980 = vld [vmem:[%s621 + $0x48] sm:$0xf]
      %v2981 = vld [vmem:[%s621 + $0x4c] sm:$0xf]
      %v2982 = vld [vmem:[%s621 + $0x50] sm:$0x1]
      %v2983 = vld [vmem:[%s621 + $0x54] sm:$0xf]
      %v2984 = vld [vmem:[%s621 + $0x58] sm:$0xf]
      %v2985 = vld [vmem:[%s621 + $0x5c] sm:$0x1]
      %v2986 = vld [vmem:[%s621 + $0x78] sm:$0xf]
      %v2987 = vld [vmem:[%s621 + $0x7c] sm:$0xf]
      %v2988 = vld [vmem:[%s621 + $0x80] sm:$0x1]
      %v2989 = vld [vmem:[%s621 + $0x84] sm:$0xf]
      %v2990 = vld [vmem:[%s621 + $0x88] sm:$0xf]
      %v2991 = vld [vmem:[%s621 + $0x8c] sm:$0x1]
      %v2992 = vld [vmem:[%s621 + $0x90] sm:$0xf]
      %v2993 = vld [vmem:[%s621 + $0x94] sm:$0xf]
      %v2994 = vld [vmem:[%s621 + $0x98] sm:$0x1]
      %v2995 = vld [vmem:[%s621 + $0x9c] sm:$0xf]
      %v2996 = vld [vmem:[%s621 + $0xa0] sm:$0xf]
      %v2997 = vld [vmem:[%s621 + $0xa4] sm:$0x1]
      %v2998 = vld [vmem:[%s621 + $0xa8] sm:$0xf]
      %v2999 = vld [vmem:[%s621 + $0xac] sm:$0xf]
      %v3000 = vld [vmem:[%s621 + $0xb0] sm:$0x1]
      %v3001 = vld [vmem:[%s621 + $0xb4] sm:$0xf]
      %v3002 = vld [vmem:[%s621 + $0xb8] sm:$0xf]
      %v3003 = vld [vmem:[%s621 + $0xbc] sm:$0x1]
      %v3004 = vld [vmem:[%s621 + $0xc0] sm:$0xf]
      %v3005 = vld [vmem:[%s621 + $0xc4] sm:$0xf]
      %v3006 = vld [vmem:[%s621 + $0xc8] sm:$0x1]
      %v3007 = vld [vmem:[%s621 + $0xcc] sm:$0xf]
      %v3008 = vld [vmem:[%s621 + $0xd0] sm:$0xf]
      %v3009 = vld [vmem:[%s621 + $0xd4] sm:$0x1]
      %v3011 = vshrl.u32 %v2962, 16
      %v3013 = vrot.slane %v3011, 4
      %v3014 = vshll.u32 %v2962, 16
      %v3016 = vrot.slane %v3014, 5
      %v3017 = vor.u32 %v3013, %v3016
      %v3018 = vrot.slane %v3017, 4
      %v3020 = vshll.u32 %v2963, 16
      %v3022 = vrot.slane %v3020, 5
      %v3023 = vsel %vm798, %v3018, %v3022
      %v3024 = vshrl.u32 %v2963, 16
      %v3026 = vrot.slane %v3024, 4
      %v3027 = vor.u32 %v3026, %v3022
      %v3028 = vrot.slane %v3027, 4
      %v3030 = vshll.u32 %v2964, 16
      %v3032 = vrot.slane %v3030, 5
      %v3033 = vsel %vm798, %v3028, %v3032
      %v3035 = vshrl.u32 %v2965, 16
      %v3037 = vrot.slane %v3035, 4
      %v3038 = vshll.u32 %v2965, 16
      %v3040 = vrot.slane %v3038, 5
      %v3041 = vor.u32 %v3037, %v3040
      %v3042 = vrot.slane %v3041, 4
      %v3044 = vshll.u32 %v2966, 16
      %v3046 = vrot.slane %v3044, 5
      %v3047 = vsel %vm798, %v3042, %v3046
      %v3048 = vshrl.u32 %v2966, 16
      %v3050 = vrot.slane %v3048, 4
      %v3051 = vor.u32 %v3050, %v3046
      %v3052 = vrot.slane %v3051, 4
      %v3054 = vshll.u32 %v2967, 16
      %v3056 = vrot.slane %v3054, 5
      %v3057 = vsel %vm798, %v3052, %v3056
      %v3059 = vshrl.u32 %v2968, 16
      %v3061 = vrot.slane %v3059, 4
      %v3062 = vshll.u32 %v2968, 16
      %v3064 = vrot.slane %v3062, 5
      %v3065 = vor.u32 %v3061, %v3064
      %v3066 = vrot.slane %v3065, 4
      %v3068 = vshll.u32 %v2969, 16
      %v3070 = vrot.slane %v3068, 5
      %v3071 = vsel %vm798, %v3066, %v3070
      %v3072 = vshrl.u32 %v2969, 16
      %v3074 = vrot.slane %v3072, 4
      %v3075 = vor.u32 %v3074, %v3070
      %v3076 = vrot.slane %v3075, 4
      %v3078 = vshll.u32 %v2970, 16
      %v3080 = vrot.slane %v3078, 5
      %v3081 = vsel %vm798, %v3076, %v3080
      %v3083 = vshrl.u32 %v2971, 16
      %v3085 = vrot.slane %v3083, 4
      %v3086 = vshll.u32 %v2971, 16
      %v3088 = vrot.slane %v3086, 5
      %v3089 = vor.u32 %v3085, %v3088
      %v3090 = vrot.slane %v3089, 4
      %v3092 = vshll.u32 %v2972, 16
      %v3094 = vrot.slane %v3092, 5
      %v3095 = vsel %vm798, %v3090, %v3094
      %v3096 = vshrl.u32 %v2972, 16
      %v3098 = vrot.slane %v3096, 4
      %v3099 = vor.u32 %v3098, %v3094
      %v3100 = vrot.slane %v3099, 4
      %v3102 = vshll.u32 %v2973, 16
      %v3104 = vrot.slane %v3102, 5
      %v3105 = vsel %vm798, %v3100, %v3104
      %v3107 = vshrl.u32 %v2974, 16
      %v3109 = vrot.slane %v3107, 4
      %v3110 = vshll.u32 %v2974, 16
      %v3112 = vrot.slane %v3110, 5
      %v3113 = vor.u32 %v3109, %v3112
      %v3114 = vrot.slane %v3113, 4
      %v3116 = vshll.u32 %v2975, 16
      %v3118 = vrot.slane %v3116, 5
      %v3119 = vsel %vm798, %v3114, %v3118
      %v3120 = vshrl.u32 %v2975, 16
      %v3122 = vrot.slane %v3120, 4
      %v3123 = vor.u32 %v3122, %v3118
      %v3124 = vrot.slane %v3123, 4
      %v3126 = vshll.u32 %v2976, 16
      %v3128 = vrot.slane %v3126, 5
      %v3129 = vsel %vm798, %v3124, %v3128
      %v3131 = vshrl.u32 %v2977, 16
      %v3133 = vrot.slane %v3131, 4
      %v3134 = vshll.u32 %v2977, 16
      %v3136 = vrot.slane %v3134, 5
      %v3137 = vor.u32 %v3133, %v3136
      %v3138 = vrot.slane %v3137, 4
      %v3140 = vshll.u32 %v2978, 16
      %v3142 = vrot.slane %v3140, 5
      %v3143 = vsel %vm798, %v3138, %v3142
      %v3144 = vshrl.u32 %v2978, 16
      %v3146 = vrot.slane %v3144, 4
      %v3147 = vor.u32 %v3146, %v3142
      %v3148 = vrot.slane %v3147, 4
      %v3150 = vshll.u32 %v2979, 16
      %v3152 = vrot.slane %v3150, 5
      %v3153 = vsel %vm798, %v3148, %v3152
      %v3155 = vshrl.u32 %v2980, 16
      %v3157 = vrot.slane %v3155, 4
      %v3158 = vshll.u32 %v2980, 16
      %v3160 = vrot.slane %v3158, 5
      %v3161 = vor.u32 %v3157, %v3160
      %v3162 = vrot.slane %v3161, 4
      %v3164 = vshll.u32 %v2981, 16
      %v3166 = vrot.slane %v3164, 5
      %v3167 = vsel %vm798, %v3162, %v3166
      %v3168 = vshrl.u32 %v2981, 16
      %v3170 = vrot.slane %v3168, 4
      %v3171 = vor.u32 %v3170, %v3166
      %v3172 = vrot.slane %v3171, 4
      %v3174 = vshll.u32 %v2982, 16
      %v3176 = vrot.slane %v3174, 5
      %v3177 = vsel %vm798, %v3172, %v3176
      %v3179 = vshrl.u32 %v2983, 16
      %v3181 = vrot.slane %v3179, 4
      %v3182 = vshll.u32 %v2983, 16
      %v3184 = vrot.slane %v3182, 5
      %v3185 = vor.u32 %v3181, %v3184
      %v3186 = vrot.slane %v3185, 4
      %v3188 = vshll.u32 %v2984, 16
      %v3190 = vrot.slane %v3188, 5
      %v3191 = vsel %vm798, %v3186, %v3190
      %v3192 = vshrl.u32 %v2984, 16
      %v3194 = vrot.slane %v3192, 4
      %v3195 = vor.u32 %v3194, %v3190
      %v3196 = vrot.slane %v3195, 4
      %v3198 = vshll.u32 %v2985, 16
      %v3200 = vrot.slane %v3198, 5
      %v3201 = vsel %vm798, %v3196, %v3200
      %v3203 = vshrl.u32 %v2986, 16
      %v3205 = vrot.slane %v3203, 4
      %v3206 = vshll.u32 %v2986, 16
      %v3208 = vrot.slane %v3206, 5
      %v3209 = vor.u32 %v3205, %v3208
      %v3210 = vrot.slane %v3209, 4
      %v3212 = vshll.u32 %v2987, 16
      %v3214 = vrot.slane %v3212, 5
      %v3215 = vsel %vm798, %v3210, %v3214
      %v3216 = vshrl.u32 %v2987, 16
      %v3218 = vrot.slane %v3216, 4
      %v3219 = vor.u32 %v3218, %v3214
      %v3220 = vrot.slane %v3219, 4
      %v3222 = vshll.u32 %v2988, 16
      %v3224 = vrot.slane %v3222, 5
      %v3225 = vsel %vm798, %v3220, %v3224
      %v3227 = vshrl.u32 %v2989, 16
      %v3229 = vrot.slane %v3227, 4
      %v3230 = vshll.u32 %v2989, 16
      %v3232 = vrot.slane %v3230, 5
      %v3233 = vor.u32 %v3229, %v3232
      %v3234 = vrot.slane %v3233, 4
      %v3236 = vshll.u32 %v2990, 16
      %v3238 = vrot.slane %v3236, 5
      %v3239 = vsel %vm798, %v3234, %v3238
      %v3240 = vshrl.u32 %v2990, 16
      %v3242 = vrot.slane %v3240, 4
      %v3243 = vor.u32 %v3242, %v3238
      %v3244 = vrot.slane %v3243, 4
      %v3246 = vshll.u32 %v2991, 16
      %v3248 = vrot.slane %v3246, 5
      %v3249 = vsel %vm798, %v3244, %v3248
      %v3251 = vshrl.u32 %v2992, 16
      %v3253 = vrot.slane %v3251, 4
      %v3254 = vshll.u32 %v2992, 16
      %v3256 = vrot.slane %v3254, 5
      %v3257 = vor.u32 %v3253, %v3256
      %v3258 = vrot.slane %v3257, 4
      %v3260 = vshll.u32 %v2993, 16
      %v3262 = vrot.slane %v3260, 5
      %v3263 = vsel %vm798, %v3258, %v3262
      %v3264 = vshrl.u32 %v2993, 16
      %v3266 = vrot.slane %v3264, 4
      %v3267 = vor.u32 %v3266, %v3262
      %v3268 = vrot.slane %v3267, 4
      %v3270 = vshll.u32 %v2994, 16
      %v3272 = vrot.slane %v3270, 5
      %v3273 = vsel %vm798, %v3268, %v3272
      %v3275 = vshrl.u32 %v2995, 16
      %v3277 = vrot.slane %v3275, 4
      %v3278 = vshll.u32 %v2995, 16
      %v3280 = vrot.slane %v3278, 5
      %v3281 = vor.u32 %v3277, %v3280
      %v3282 = vrot.slane %v3281, 4
      %v3284 = vshll.u32 %v2996, 16
      %v3286 = vrot.slane %v3284, 5
      %v3287 = vsel %vm798, %v3282, %v3286
      %v3288 = vshrl.u32 %v2996, 16
      %v3290 = vrot.slane %v3288, 4
      %v3291 = vor.u32 %v3290, %v3286
      %v3292 = vrot.slane %v3291, 4
      %v3294 = vshll.u32 %v2997, 16
      %v3296 = vrot.slane %v3294, 5
      %v3297 = vsel %vm798, %v3292, %v3296
      %v3299 = vshrl.u32 %v2998, 16
      %v3301 = vrot.slane %v3299, 4
      %v3302 = vshll.u32 %v2998, 16
      %v3304 = vrot.slane %v3302, 5
      %v3305 = vor.u32 %v3301, %v3304
      %v3306 = vrot.slane %v3305, 4
      %v3308 = vshll.u32 %v2999, 16
      %v3310 = vrot.slane %v3308, 5
      %v3311 = vsel %vm798, %v3306, %v3310
      %v3312 = vshrl.u32 %v2999, 16
      %v3314 = vrot.slane %v3312, 4
      %v3315 = vor.u32 %v3314, %v3310
      %v3316 = vrot.slane %v3315, 4
      %v3318 = vshll.u32 %v3000, 16
      %v3320 = vrot.slane %v3318, 5
      %v3321 = vsel %vm798, %v3316, %v3320
      %v3323 = vshrl.u32 %v3001, 16
      %v3325 = vrot.slane %v3323, 4
      %v3326 = vshll.u32 %v3001, 16
      %v3328 = vrot.slane %v3326, 5
      %v3329 = vor.u32 %v3325, %v3328
      %v3330 = vrot.slane %v3329, 4
      %v3332 = vshll.u32 %v3002, 16
      %v3334 = vrot.slane %v3332, 5
      %v3335 = vsel %vm798, %v3330, %v3334
      %v3336 = vshrl.u32 %v3002, 16
      %v3338 = vrot.slane %v3336, 4
      %v3339 = vor.u32 %v3338, %v3334
      %v3340 = vrot.slane %v3339, 4
      %v3342 = vshll.u32 %v3003, 16
      %v3344 = vrot.slane %v3342, 5
      %v3345 = vsel %vm798, %v3340, %v3344
      %v3347 = vshrl.u32 %v3004, 16
      %v3349 = vrot.slane %v3347, 4
      %v3350 = vshll.u32 %v3004, 16
      %v3352 = vrot.slane %v3350, 5
      %v3353 = vor.u32 %v3349, %v3352
      %v3354 = vrot.slane %v3353, 4
      %v3356 = vshll.u32 %v3005, 16
      %v3358 = vrot.slane %v3356, 5
      %v3359 = vsel %vm798, %v3354, %v3358
      %v3360 = vshrl.u32 %v3005, 16
      %v3362 = vrot.slane %v3360, 4
      %v3363 = vor.u32 %v3362, %v3358
      %v3364 = vrot.slane %v3363, 4
      %v3366 = vshll.u32 %v3006, 16
      %v3368 = vrot.slane %v3366, 5
      %v3369 = vsel %vm798, %v3364, %v3368
      %v3371 = vshrl.u32 %v3007, 16
      %v3373 = vrot.slane %v3371, 4
      %v3374 = vshll.u32 %v3007, 16
      %v3376 = vrot.slane %v3374, 5
      %v3377 = vor.u32 %v3373, %v3376
      %v3378 = vrot.slane %v3377, 4
      %v3380 = vshll.u32 %v3008, 16
      %v3382 = vrot.slane %v3380, 5
      %v3383 = vsel %vm798, %v3378, %v3382
      %v3384 = vshrl.u32 %v3008, 16
      %v3386 = vrot.slane %v3384, 4
      %v3387 = vor.u32 %v3386, %v3382
      %v3388 = vrot.slane %v3387, 4
      %v3390 = vshll.u32 %v3009, 16
      %v3392 = vrot.slane %v3390, 5
      %v3393 = vsel %vm798, %v3388, %v3392
      %s3394 = scalar_lea.vmem %s1, 288
      %v3395 = vld [vmem:[%s3394] sm:$0xff]
      %v3396 = vld [vmem:[%s3394 + $0x8] sm:$0xff]
      %v3397 = vld [vmem:[%s3394 + $0x10] sm:$0xff]
      %v3398 = vld [vmem:[%s3394 + $0x18] sm:$0xff]
      %v3399 = vld [vmem:[%s3394 + $0x20] sm:$0xff]
      %v3400 = vld [vmem:[%s3394 + $0x28] sm:$0xff]
      %v3401 = vld [vmem:[%s3394 + $0x30] sm:$0xff]
      %v3402 = vld [vmem:[%s3394 + $0x38] sm:$0xff]
      %v3403 = vld [vmem:[%s3394 + $0x40] sm:$0xff]
      %v3404 = vunpack.c.l.b16 %v3023
      %v3405 = vunpack.c.l.b16 %v3033
      %v3406 = vunpack.c.l.b16 %v3047
      %v3407 = vunpack.c.l.b16 %v3057
      %v3408 = vunpack.c.l.b16 %v3071
      %v3409 = vunpack.c.l.b16 %v3081
      %v3410 = vunpack.c.l.b16 %v3095
      %v3411 = vunpack.c.l.b16 %v3105
      %v3412 = vunpack.c.l.b16 %v3119
      %v3413 = vunpack.c.l.b16 %v3129
      %v3414 = vunpack.c.l.b16 %v3143
      %v3415 = vunpack.c.l.b16 %v3153
      %v3416 = vunpack.c.l.b16 %v3167
      %v3417 = vunpack.c.l.b16 %v3177
      %v3418 = vunpack.c.l.b16 %v3191
      %v3419 = vunpack.c.l.b16 %v3201
      %v3420 = vunpack.c.l.b16 %v3215
      %v3421 = vunpack.c.l.b16 %v3225
      %v3422 = vunpack.c.l.b16 %v3239
      %v3423 = vunpack.c.l.b16 %v3249
      %v3424 = vunpack.c.l.b16 %v3263
      %v3425 = vunpack.c.l.b16 %v3273
      %v3426 = vunpack.c.l.b16 %v3287
      %v3427 = vunpack.c.l.b16 %v3297
      %v3428 = vunpack.c.l.b16 %v3311
      %v3429 = vunpack.c.l.b16 %v3321
      %v3430 = vunpack.c.l.b16 %v3335
      %v3431 = vunpack.c.l.b16 %v3345
      %v3432 = vunpack.c.l.b16 %v3359
      %v3433 = vunpack.c.l.b16 %v3369
      %v3434 = vunpack.c.l.b16 %v3383
      %v3435 = vunpack.c.l.b16 %v3393
      %v3436 = vpack.c.b16 %v3405, %v3404
      %v3437 = vpack.c.b16 %v3407, %v3406
      %v3438 = vpack.c.b16 %v3409, %v3408
      %v3439 = vpack.c.b16 %v3411, %v3410
      %v3440 = vpack.c.b16 %v3413, %v3412
      %v3441 = vpack.c.b16 %v3415, %v3414
      %v3442 = vpack.c.b16 %v3417, %v3416
      %v3443 = vpack.c.b16 %v3419, %v3418
      %v3444 = vpack.c.b16 %v3421, %v3420
      %v3445 = vpack.c.b16 %v3423, %v3422
      %v3446 = vpack.c.b16 %v3425, %v3424
      %v3447 = vpack.c.b16 %v3427, %v3426
      %v3448 = vpack.c.b16 %v3429, %v3428
      %v3449 = vpack.c.b16 %v3431, %v3430
      %v3450 = vpack.c.b16 %v3433, %v3432
      %v3451 = vpack.c.b16 %v3435, %v3434
      %v3461 = vunpack.c.l.b16 %v3395
      %v3462 = vunpack.c.h.b16 %v3395
      %v3463 = vunpack.c.l.b16 %v3396
      %v3464 = vunpack.c.h.b16 %v3396
      %v3465 = vunpack.c.l.b16 %v3397
      %v3466 = vunpack.c.h.b16 %v3397
      %v3467 = vunpack.c.l.b16 %v3398
      %v3468 = vunpack.c.h.b16 %v3398
      %v3469 = vunpack.c.l.b16 %v3399
      %v3470 = vunpack.c.h.b16 %v3399
      %v3471 = vunpack.c.l.b16 %v3400
      %v3472 = vunpack.c.h.b16 %v3400
      %v3473 = vunpack.c.l.b16 %v3401
      %v3474 = vunpack.c.h.b16 %v3401
      %v3475 = vunpack.c.l.b16 %v3402
      %v3476 = vunpack.c.h.b16 %v3402
      %v3477 = vunpack.c.l.b16 %v3403
      %v3478 = vunpack.c.h.b16 %v3403
      %v3479 = vpack.c.b16 %v3463, %v3461
      %v3480 = vpack.c.b16 %v3464, %v3462
      %v3481 = vpack.c.b16 %v3467, %v3465
      %v3482 = vpack.c.b16 %v3468, %v3466
      %v3483 = vpack.c.b16 %v3471, %v3469
      %v3484 = vpack.c.b16 %v3472, %v3470
      %v3485 = vpack.c.b16 %v3475, %v3473
      %v3486 = vpack.c.b16 %v3476, %v3474
      %v3487 = vpack.c.b16 %v3477, %v3477
      %v3488 = vpack.c.b16 %v3478, %v3478
      %v3498 = vsel %vm1286, %v3436, 0
      %v3501 = vsel %vm1286, %v3437, 0
      %v3504 = vsel %vm1286, %v3438, 0
      %v3507 = vsel %vm1286, %v3439, 0
      %v3510 = vsel %vm1286, %v3440, 0
      %v3513 = vsel %vm1286, %v3441, 0
      %v3516 = vsel %vm1286, %v3442, 0
      %v3519 = vsel %vm1286, %v3443, 0
      %v3522 = vsel %vm1286, %v3444, 0
      %v3525 = vsel %vm1286, %v3445, 0
      %v3528 = vsel %vm1286, %v3446, 0
      %v3531 = vsel %vm1286, %v3447, 0
      %v3534 = vsel %vm1286, %v3448, 0
      %v3537 = vsel %vm1286, %v3449, 0
      %v3540 = vsel %vm1286, %v3450, 0
      %v3543 = vsel %vm1286, %v3451, 0
      %v3546 = vsel %vm1335, %v3487, 0
      %v3549 = vsel %vm1335, %v3488, 0
      %3551 = vmatprep.subr.bf16.mxu0 %v3480
      %3552 = vmatpush1.bf16.msra.mxu0 %v3479
      %3553 = vmatprep.subr.bf16.mxu0 %v3482
      %3554 = vmatpush1.bf16.msra.mxu0 %v3481
      %3555 = vmatprep.subr.bf16.mxu0 %v3484
      %3556 = vmatpush1.bf16.msra.mxu0 %v3483
      %3557 = vmatprep.subr.bf16.mxu0 %v3486
      %3558 = vmatpush1.bf16.msra.mxu0 %v3485
      %3559 = vmatprep.subr.bf16.mxu0 %v3549
      %3560 = vmatpush1.bf16.msra.mxu0 %v3546
      %3561 = vmatprep.subr.bf16.mxu0 0
      %3562 = vmatpush1.bf16.msra.mxu0 0
      %3563 = vmatprep.subr.bf16.mxu0 0
      %3564 = vmatpush1.bf16.msra.mxu0 0
      %3565 = vmatprep.subr.bf16.mxu0 0
      %3566 = vmatpush1.bf16.msra.mxu0 0
      %3567 = vmatprep.subr.bf16.mxu0 0
      %3568 = vmatpush1.bf16.msra.mxu0 0
      %3569 = vmatprep.subr.bf16.mxu0 0
      %3570 = vmatpush1.bf16.msra.mxu0 0
      %3571 = vmatprep.subr.bf16.mxu0 0
      %3572 = vmatpush1.bf16.msra.mxu0 0
      %3573 = vmatprep.subr.bf16.mxu0 0
      %3574 = vmatpush1.bf16.msra.mxu0 0
      %3575 = vmatprep.subr.bf16.mxu0 0
      %3576 = vmatpush1.bf16.msra.mxu0 0
      %3577 = vmatprep.subr.bf16.mxu0 0
      %3578 = vmatpush1.bf16.msra.mxu0 0
      %3579 = vmatprep.subr.bf16.mxu0 0
      %3580 = vmatpush1.bf16.msra.mxu0 0
      %3581 = vmatprep.subr.bf16.mxu0 0
      %3582 = vmatpush1.bf16.msra.mxu0 0
      %3583 = vmatprep.mubr.bf16.mxu0 0
      %3584 = vmatmul.mubr.bf16.gmra.mrb[0].mxu0 %v3498
      %v3585 = vpop.f32.mrb[0].mxu0
      %v3586 = vadd.f32 0.0, %v3585
      %v3587 = vpop.f32.mrb[0].mxu0
      %v3588 = vadd.f32 0.0, %v3587
      %v3589 = vpop.f32.mrb[0].mxu0
      %v3590 = vadd.f32 0.0, %v3589
      %v3591 = vpop.f32.mrb[0].mxu0
      %v3592 = vadd.f32 0.0, %v3591
      %3593 = vmatprep.mubr.bf16.mxu0 0
      %3594 = vmatmul.mubr.bf16.gmra.mrb[0].mxu0 %v3501
      %v3595 = vpop.f32.mrb[0].mxu0
      %v3596 = vadd.f32 0.0, %v3595
      %v3597 = vpop.f32.mrb[0].mxu0
      %v3598 = vadd.f32 0.0, %v3597
      %v3599 = vpop.f32.mrb[0].mxu0
      %v3600 = vadd.f32 0.0, %v3599
      %v3601 = vpop.f32.mrb[0].mxu0
      %v3602 = vadd.f32 0.0, %v3601
      %3603 = vmatprep.mubr.bf16.mxu0 0
      %3604 = vmatmul.mubr.bf16.gmra.mrb[0].mxu0 %v3504
      %v3605 = vpop.f32.mrb[0].mxu0
      %v3606 = vadd.f32 0.0, %v3605
      %v3607 = vpop.f32.mrb[0].mxu0
      %v3608 = vadd.f32 0.0, %v3607
      %v3609 = vpop.f32.mrb[0].mxu0
      %v3610 = vadd.f32 0.0, %v3609
      %v3611 = vpop.f32.mrb[0].mxu0
      %v3612 = vadd.f32 0.0, %v3611
      %3613 = vmatprep.mubr.bf16.mxu0 0
      %3614 = vmatmul.mubr.bf16.gmra.mrb[0].mxu0 %v3507
      %v3615 = vpop.f32.mrb[0].mxu0
      %v3616 = vadd.f32 0.0, %v3615
      %v3617 = vpop.f32.mrb[0].mxu0
      %v3618 = vadd.f32 0.0, %v3617
      %v3619 = vpop.f32.mrb[0].mxu0
      %v3620 = vadd.f32 0.0, %v3619
      %v3621 = vpop.f32.mrb[0].mxu0
      %v3622 = vadd.f32 0.0, %v3621
      %3623 = vmatprep.mubr.bf16.mxu0 0
      %3624 = vmatmul.mubr.bf16.gmra.mrb[0].mxu0 %v3510
      %v3625 = vpop.f32.mrb[0].mxu0
      %v3626 = vadd.f32 0.0, %v3625
      %v3627 = vpop.f32.mrb[0].mxu0
      %v3628 = vadd.f32 0.0, %v3627
      %v3629 = vpop.f32.mrb[0].mxu0
      %v3630 = vadd.f32 0.0, %v3629
      %v3631 = vpop.f32.mrb[0].mxu0
      %v3632 = vadd.f32 0.0, %v3631
      %3633 = vmatprep.mubr.bf16.mxu0 0
      %3634 = vmatmul.mubr.bf16.gmra.mrb[0].mxu0 %v3513
      %v3635 = vpop.f32.mrb[0].mxu0
      %v3636 = vadd.f32 0.0, %v3635
      %v3637 = vpop.f32.mrb[0].mxu0
      %v3638 = vadd.f32 0.0, %v3637
      %v3639 = vpop.f32.mrb[0].mxu0
      %v3640 = vadd.f32 0.0, %v3639
      %v3641 = vpop.f32.mrb[0].mxu0
      %v3642 = vadd.f32 0.0, %v3641
      %3643 = vmatprep.mubr.bf16.mxu0 0
      %3644 = vmatmul.mubr.bf16.gmra.mrb[0].mxu0 %v3516
      %v3645 = vpop.f32.mrb[0].mxu0
      %v3646 = vadd.f32 0.0, %v3645
      %v3647 = vpop.f32.mrb[0].mxu0
      %v3648 = vadd.f32 0.0, %v3647
      %v3649 = vpop.f32.mrb[0].mxu0
      %v3650 = vadd.f32 0.0, %v3649
      %v3651 = vpop.f32.mrb[0].mxu0
      %v3652 = vadd.f32 0.0, %v3651
      %3653 = vmatprep.mubr.bf16.mxu0 0
      %3654 = vmatmul.mubr.bf16.gmra.mrb[0].mxu0 %v3519
      %v3655 = vpop.f32.mrb[0].mxu0
      %v3656 = vadd.f32 0.0, %v3655
      %v3657 = vpop.f32.mrb[0].mxu0
      %v3658 = vadd.f32 0.0, %v3657
      %v3659 = vpop.f32.mrb[0].mxu0
      %v3660 = vadd.f32 0.0, %v3659
      %v3661 = vpop.f32.mrb[0].mxu0
      %v3662 = vadd.f32 0.0, %v3661
      %3663 = vmatprep.mubr.bf16.mxu0 0
      %3664 = vmatmul.mubr.bf16.gmra.mrb[0].mxu0 %v3522
      %v3665 = vpop.f32.mrb[0].mxu0
      %v3666 = vadd.f32 0.0, %v3665
      %v3667 = vpop.f32.mrb[0].mxu0
      %v3668 = vadd.f32 0.0, %v3667
      %v3669 = vpop.f32.mrb[0].mxu0
      %v3670 = vadd.f32 0.0, %v3669
      %v3671 = vpop.f32.mrb[0].mxu0
      %v3672 = vadd.f32 0.0, %v3671
      %3673 = vmatprep.mubr.bf16.mxu0 0
      %3674 = vmatmul.mubr.bf16.gmra.mrb[0].mxu0 %v3525
      %v3675 = vpop.f32.mrb[0].mxu0
      %v3676 = vadd.f32 0.0, %v3675
      %v3677 = vpop.f32.mrb[0].mxu0
      %v3678 = vadd.f32 0.0, %v3677
      %v3679 = vpop.f32.mrb[0].mxu0
      %v3680 = vadd.f32 0.0, %v3679
      %v3681 = vpop.f32.mrb[0].mxu0
      %v3682 = vadd.f32 0.0, %v3681
      %3683 = vmatprep.mubr.bf16.mxu0 0
      %3684 = vmatmul.mubr.bf16.gmra.mrb[0].mxu0 %v3528
      %v3685 = vpop.f32.mrb[0].mxu0
      %v3686 = vadd.f32 0.0, %v3685
      %v3687 = vpop.f32.mrb[0].mxu0
      %v3688 = vadd.f32 0.0, %v3687
      %v3689 = vpop.f32.mrb[0].mxu0
      %v3690 = vadd.f32 0.0, %v3689
      %v3691 = vpop.f32.mrb[0].mxu0
      %v3692 = vadd.f32 0.0, %v3691
      %3693 = vmatprep.mubr.bf16.mxu0 0
      %3694 = vmatmul.mubr.bf16.gmra.mrb[0].mxu0 %v3531
      %v3695 = vpop.f32.mrb[0].mxu0
      %v3696 = vadd.f32 0.0, %v3695
      %v3697 = vpop.f32.mrb[0].mxu0
      %v3698 = vadd.f32 0.0, %v3697
      %v3699 = vpop.f32.mrb[0].mxu0
      %v3700 = vadd.f32 0.0, %v3699
      %v3701 = vpop.f32.mrb[0].mxu0
      %v3702 = vadd.f32 0.0, %v3701
      %3703 = vmatprep.mubr.bf16.mxu0 0
      %3704 = vmatmul.mubr.bf16.gmra.mrb[0].mxu0 %v3534
      %v3705 = vpop.f32.mrb[0].mxu0
      %v3706 = vadd.f32 0.0, %v3705
      %v3707 = vpop.f32.mrb[0].mxu0
      %v3708 = vadd.f32 0.0, %v3707
      %v3709 = vpop.f32.mrb[0].mxu0
      %v3710 = vadd.f32 0.0, %v3709
      %v3711 = vpop.f32.mrb[0].mxu0
      %v3712 = vadd.f32 0.0, %v3711
      %3713 = vmatprep.mubr.bf16.mxu0 0
      %3714 = vmatmul.mubr.bf16.gmra.mrb[0].mxu0 %v3537
      %v3715 = vpop.f32.mrb[0].mxu0
      %v3716 = vadd.f32 0.0, %v3715
      %v3717 = vpop.f32.mrb[0].mxu0
      %v3718 = vadd.f32 0.0, %v3717
      %v3719 = vpop.f32.mrb[0].mxu0
      %v3720 = vadd.f32 0.0, %v3719
      %v3721 = vpop.f32.mrb[0].mxu0
      %v3722 = vadd.f32 0.0, %v3721
      %3723 = vmatprep.mubr.bf16.mxu0 0
      %3724 = vmatmul.mubr.bf16.gmra.mrb[0].mxu0 %v3540
      %v3725 = vpop.f32.mrb[0].mxu0
      %v3726 = vadd.f32 0.0, %v3725
      %v3727 = vpop.f32.mrb[0].mxu0
      %v3728 = vadd.f32 0.0, %v3727
      %v3729 = vpop.f32.mrb[0].mxu0
      %v3730 = vadd.f32 0.0, %v3729
      %v3731 = vpop.f32.mrb[0].mxu0
      %v3732 = vadd.f32 0.0, %v3731
      %3733 = vmatprep.mubr.bf16.mxu0 0
      %3734 = vmatmul.mubr.bf16.gmra.mrb[0].mxu0 %v3543
      %v3735 = vpop.f32.mrb[0].mxu0
      %v3736 = vadd.f32 0.0, %v3735
      %v3737 = vpop.f32.mrb[0].mxu0
      %v3738 = vadd.f32 0.0, %v3737
      %v3739 = vpop.f32.mrb[0].mxu0
      %v3740 = vadd.f32 0.0, %v3739
      %v3741 = vpop.f32.mrb[0].mxu0
      %v3742 = vadd.f32 0.0, %v3741
      %3743 = vdwg.mxu0
      %v3744 = vadd.f32 %v2898, %v3586
      %v3745 = vadd.f32 %v2899, %v3588
      %v3746 = vadd.f32 %v2900, %v3590
      %v3747 = vadd.f32 %v2901, %v3592
      %v3748 = vadd.f32 %v2902, %v3596
      %v3749 = vadd.f32 %v2903, %v3598
      %v3750 = vadd.f32 %v2904, %v3600
      %v3751 = vadd.f32 %v2905, %v3602
      %v3752 = vadd.f32 %v2906, %v3606
      %v3753 = vadd.f32 %v2907, %v3608
      %v3754 = vadd.f32 %v2908, %v3610
      %v3755 = vadd.f32 %v2909, %v3612
      %v3756 = vadd.f32 %v2910, %v3616
      %v3757 = vadd.f32 %v2911, %v3618
      %v3758 = vadd.f32 %v2912, %v3620
      %v3759 = vadd.f32 %v2913, %v3622
      %v3760 = vadd.f32 %v2914, %v3626
      %v3761 = vadd.f32 %v2915, %v3628
      %v3762 = vadd.f32 %v2916, %v3630
      %v3763 = vadd.f32 %v2917, %v3632
      %v3764 = vadd.f32 %v2918, %v3636
      %v3765 = vadd.f32 %v2919, %v3638
      %v3766 = vadd.f32 %v2920, %v3640
      %v3767 = vadd.f32 %v2921, %v3642
      %v3768 = vadd.f32 %v2922, %v3646
      %v3769 = vadd.f32 %v2923, %v3648
      %v3770 = vadd.f32 %v2924, %v3650
      %v3771 = vadd.f32 %v2925, %v3652
      %v3772 = vadd.f32 %v2926, %v3656
      %v3773 = vadd.f32 %v2927, %v3658
      %v3774 = vadd.f32 %v2928, %v3660
      %v3775 = vadd.f32 %v2929, %v3662
      %v3776 = vadd.f32 %v2930, %v3666
      %v3777 = vadd.f32 %v2931, %v3668
      %v3778 = vadd.f32 %v2932, %v3670
      %v3779 = vadd.f32 %v2933, %v3672
      %v3780 = vadd.f32 %v2934, %v3676
      %v3781 = vadd.f32 %v2935, %v3678
      %v3782 = vadd.f32 %v2936, %v3680
      %v3783 = vadd.f32 %v2937, %v3682
      %v3784 = vadd.f32 %v2938, %v3686
      %v3785 = vadd.f32 %v2939, %v3688
      %v3786 = vadd.f32 %v2940, %v3690
      %v3787 = vadd.f32 %v2941, %v3692
      %v3788 = vadd.f32 %v2942, %v3696
      %v3789 = vadd.f32 %v2943, %v3698
      %v3790 = vadd.f32 %v2944, %v3700
      %v3791 = vadd.f32 %v2945, %v3702
      %v3792 = vadd.f32 %v2946, %v3706
      %v3793 = vadd.f32 %v2947, %v3708
      %v3794 = vadd.f32 %v2948, %v3710
      %v3795 = vadd.f32 %v2949, %v3712
      %v3796 = vadd.f32 %v2950, %v3716
      %v3797 = vadd.f32 %v2951, %v3718
      %v3798 = vadd.f32 %v2952, %v3720
      %v3799 = vadd.f32 %v2953, %v3722
      %v3800 = vadd.f32 %v2954, %v3726
      %v3801 = vadd.f32 %v2955, %v3728
      %v3802 = vadd.f32 %v2956, %v3730
      %v3803 = vadd.f32 %v2957, %v3732
      %v3804 = vadd.f32 %v2958, %v3736
      %v3805 = vadd.f32 %v2959, %v3738
      %v3806 = vadd.f32 %v2960, %v3740
      %v3807 = vadd.f32 %v2961, %v3742
      %v3808 = vld [vmem:[%s621] sm:$0xe]
      %v3809 = vld [vmem:[%s621 + $0xc] sm:$0xe]
      %v3810 = vld [vmem:[%s621 + $0x18] sm:$0xe]
      %v3811 = vld [vmem:[%s621 + $0x24] sm:$0xe]
      %v3812 = vld [vmem:[%s621 + $0x30] sm:$0xe]
      %v3813 = vld [vmem:[%s621 + $0x3c] sm:$0xe]
      %v3814 = vld [vmem:[%s621 + $0x48] sm:$0xe]
      %v3815 = vld [vmem:[%s621 + $0x54] sm:$0xe]
      %v3816 = vld [vmem:[%s621 + $0x78] sm:$0xe]
      %v3817 = vld [vmem:[%s621 + $0x84] sm:$0xe]
      %v3818 = vld [vmem:[%s621 + $0x90] sm:$0xe]
      %v3819 = vld [vmem:[%s621 + $0x9c] sm:$0xe]
      %v3820 = vld [vmem:[%s621 + $0xa8] sm:$0xe]
      %v3821 = vld [vmem:[%s621 + $0xb4] sm:$0xe]
      %v3822 = vld [vmem:[%s621 + $0xc0] sm:$0xe]
      %v3823 = vld [vmem:[%s621 + $0xcc] sm:$0xe]
      %v3872 = vrot.slane %v3808, 5
      %v3873 = vrot.slane %v3872, 4
      %v3874 = vrot.slane %v2963, 5
      %v3875 = vsel %vm1957, %v3873, %v3874
      %v3876 = vrot.slane %v3874, 4
      %v3877 = vrot.slane %v2964, 5
      %v3878 = vsel %vm1957, %v3876, %v3877
      %v3879 = vrot.slane %v3809, 5
      %v3880 = vrot.slane %v3879, 4
      %v3881 = vrot.slane %v2966, 5
      %v3882 = vsel %vm1957, %v3880, %v3881
      %v3883 = vrot.slane %v3881, 4
      %v3884 = vrot.slane %v2967, 5
      %v3885 = vsel %vm1957, %v3883, %v3884
      %v3886 = vrot.slane %v3810, 5
      %v3887 = vrot.slane %v3886, 4
      %v3888 = vrot.slane %v2969, 5
      %v3889 = vsel %vm1957, %v3887, %v3888
      %v3890 = vrot.slane %v3888, 4
      %v3891 = vrot.slane %v2970, 5
      %v3892 = vsel %vm1957, %v3890, %v3891
      %v3893 = vrot.slane %v3811, 5
      %v3894 = vrot.slane %v3893, 4
      %v3895 = vrot.slane %v2972, 5
      %v3896 = vsel %vm1957, %v3894, %v3895
      %v3897 = vrot.slane %v3895, 4
      %v3898 = vrot.slane %v2973, 5
      %v3899 = vsel %vm1957, %v3897, %v3898
      %v3900 = vrot.slane %v3812, 5
      %v3901 = vrot.slane %v3900, 4
      %v3902 = vrot.slane %v2975, 5
      %v3903 = vsel %vm1957, %v3901, %v3902
      %v3904 = vrot.slane %v3902, 4
      %v3905 = vrot.slane %v2976, 5
      %v3906 = vsel %vm1957, %v3904, %v3905
      %v3907 = vrot.slane %v3813, 5
      %v3908 = vrot.slane %v3907, 4
      %v3909 = vrot.slane %v2978, 5
      %v3910 = vsel %vm1957, %v3908, %v3909
      %v3911 = vrot.slane %v3909, 4
      %v3912 = vrot.slane %v2979, 5
      %v3913 = vsel %vm1957, %v3911, %v3912
      %v3914 = vrot.slane %v3814, 5
      %v3915 = vrot.slane %v3914, 4
      %v3916 = vrot.slane %v2981, 5
      %v3917 = vsel %vm1957, %v3915, %v3916
      %v3918 = vrot.slane %v3916, 4
      %v3919 = vrot.slane %v2982, 5
      %v3920 = vsel %vm1957, %v3918, %v3919
      %v3921 = vrot.slane %v3815, 5
      %v3922 = vrot.slane %v3921, 4
      %v3923 = vrot.slane %v2984, 5
      %v3924 = vsel %vm1957, %v3922, %v3923
      %v3925 = vrot.slane %v3923, 4
      %v3926 = vrot.slane %v2985, 5
      %v3927 = vsel %vm1957, %v3925, %v3926
      %v3928 = vrot.slane %v3816, 5
      %v3929 = vrot.slane %v3928, 4
      %v3930 = vrot.slane %v2987, 5
      %v3931 = vsel %vm1957, %v3929, %v3930
      %v3932 = vrot.slane %v3930, 4
      %v3933 = vrot.slane %v2988, 5
      %v3934 = vsel %vm1957, %v3932, %v3933
      %v3935 = vrot.slane %v3817, 5
      %v3936 = vrot.slane %v3935, 4
      %v3937 = vrot.slane %v2990, 5
      %v3938 = vsel %vm1957, %v3936, %v3937
      %v3939 = vrot.slane %v3937, 4
      %v3940 = vrot.slane %v2991, 5
      %v3941 = vsel %vm1957, %v3939, %v3940
      %v3942 = vrot.slane %v3818, 5
      %v3943 = vrot.slane %v3942, 4
      %v3944 = vrot.slane %v2993, 5
      %v3945 = vsel %vm1957, %v3943, %v3944
      %v3946 = vrot.slane %v3944, 4
      %v3947 = vrot.slane %v2994, 5
      %v3948 = vsel %vm1957, %v3946, %v3947
      %v3949 = vrot.slane %v3819, 5
      %v3950 = vrot.slane %v3949, 4
      %v3951 = vrot.slane %v2996, 5
      %v3952 = vsel %vm1957, %v3950, %v3951
      %v3953 = vrot.slane %v3951, 4
      %v3954 = vrot.slane %v2997, 5
      %v3955 = vsel %vm1957, %v3953, %v3954
      %v3956 = vrot.slane %v3820, 5
      %v3957 = vrot.slane %v3956, 4
      %v3958 = vrot.slane %v2999, 5
      %v3959 = vsel %vm1957, %v3957, %v3958
      %v3960 = vrot.slane %v3958, 4
      %v3961 = vrot.slane %v3000, 5
      %v3962 = vsel %vm1957, %v3960, %v3961
      %v3963 = vrot.slane %v3821, 5
      %v3964 = vrot.slane %v3963, 4
      %v3965 = vrot.slane %v3002, 5
      %v3966 = vsel %vm1957, %v3964, %v3965
      %v3967 = vrot.slane %v3965, 4
      %v3968 = vrot.slane %v3003, 5
      %v3969 = vsel %vm1957, %v3967, %v3968
      %v3970 = vrot.slane %v3822, 5
      %v3971 = vrot.slane %v3970, 4
      %v3972 = vrot.slane %v3005, 5
      %v3973 = vsel %vm1957, %v3971, %v3972
      %v3974 = vrot.slane %v3972, 4
      %v3975 = vrot.slane %v3006, 5
      %v3976 = vsel %vm1957, %v3974, %v3975
      %v3977 = vrot.slane %v3823, 5
      %v3978 = vrot.slane %v3977, 4
      %v3979 = vrot.slane %v3008, 5
      %v3980 = vsel %vm1957, %v3978, %v3979
      %v3981 = vrot.slane %v3979, 4
      %v3982 = vrot.slane %v3009, 5
      %v3983 = vsel %vm1957, %v3981, %v3982
      %s3984 = scalar_lea.vmem %s1, 360
      %v3985 = vld [vmem:[%s3984] sm:$0xff]
      %v3986 = vld [vmem:[%s3984 + $0x8] sm:$0xff]
      %v3987 = vld [vmem:[%s3984 + $0x10] sm:$0xff]
      %v3988 = vld [vmem:[%s3984 + $0x18] sm:$0xff]
      %v3989 = vld [vmem:[%s3984 + $0x20] sm:$0xff]
      %v3990 = vld [vmem:[%s3984 + $0x28] sm:$0xff]
      %v3991 = vld [vmem:[%s3984 + $0x30] sm:$0xff]
      %v3992 = vld [vmem:[%s3984 + $0x38] sm:$0xff]
      %v3993 = vld [vmem:[%s3984 + $0x40] sm:$0xff]
      %v3994 = vunpack.c.l.b16 %v3875
      %v3995 = vunpack.c.l.b16 %v3878
      %v3996 = vunpack.c.l.b16 %v3882
      %v3997 = vunpack.c.l.b16 %v3885
      %v3998 = vunpack.c.l.b16 %v3889
      %v3999 = vunpack.c.l.b16 %v3892
      %v4000 = vunpack.c.l.b16 %v3896
      %v4001 = vunpack.c.l.b16 %v3899
      %v4002 = vunpack.c.l.b16 %v3903
      %v4003 = vunpack.c.l.b16 %v3906
      %v4004 = vunpack.c.l.b16 %v3910
      %v4005 = vunpack.c.l.b16 %v3913
      %v4006 = vunpack.c.l.b16 %v3917
      %v4007 = vunpack.c.l.b16 %v3920
      %v4008 = vunpack.c.l.b16 %v3924
      %v4009 = vunpack.c.l.b16 %v3927
      %v4010 = vunpack.c.l.b16 %v3931
      %v4011 = vunpack.c.l.b16 %v3934
      %v4012 = vunpack.c.l.b16 %v3938
      %v4013 = vunpack.c.l.b16 %v3941
      %v4014 = vunpack.c.l.b16 %v3945
      %v4015 = vunpack.c.l.b16 %v3948
      %v4016 = vunpack.c.l.b16 %v3952
      %v4017 = vunpack.c.l.b16 %v3955
      %v4018 = vunpack.c.l.b16 %v3959
      %v4019 = vunpack.c.l.b16 %v3962
      %v4020 = vunpack.c.l.b16 %v3966
      %v4021 = vunpack.c.l.b16 %v3969
      %v4022 = vunpack.c.l.b16 %v3973
      %v4023 = vunpack.c.l.b16 %v3976
      %v4024 = vunpack.c.l.b16 %v3980
      %v4025 = vunpack.c.l.b16 %v3983
      %v4026 = vpack.c.b16 %v3995, %v3994
      %v4027 = vpack.c.b16 %v3997, %v3996
      %v4028 = vpack.c.b16 %v3999, %v3998
      %v4029 = vpack.c.b16 %v4001, %v4000
      %v4030 = vpack.c.b16 %v4003, %v4002
      %v4031 = vpack.c.b16 %v4005, %v4004
      %v4032 = vpack.c.b16 %v4007, %v4006
      %v4033 = vpack.c.b16 %v4009, %v4008
      %v4034 = vpack.c.b16 %v4011, %v4010
      %v4035 = vpack.c.b16 %v4013, %v4012
      %v4036 = vpack.c.b16 %v4015, %v4014
      %v4037 = vpack.c.b16 %v4017, %v4016
      %v4038 = vpack.c.b16 %v4019, %v4018
      %v4039 = vpack.c.b16 %v4021, %v4020
      %v4040 = vpack.c.b16 %v4023, %v4022
      %v4041 = vpack.c.b16 %v4025, %v4024
      %v4051 = vunpack.c.l.b16 %v3985
      %v4052 = vunpack.c.h.b16 %v3985
      %v4053 = vunpack.c.l.b16 %v3986
      %v4054 = vunpack.c.h.b16 %v3986
      %v4055 = vunpack.c.l.b16 %v3987
      %v4056 = vunpack.c.h.b16 %v3987
      %v4057 = vunpack.c.l.b16 %v3988
      %v4058 = vunpack.c.h.b16 %v3988
      %v4059 = vunpack.c.l.b16 %v3989
      %v4060 = vunpack.c.h.b16 %v3989
      %v4061 = vunpack.c.l.b16 %v3990
      %v4062 = vunpack.c.h.b16 %v3990
      %v4063 = vunpack.c.l.b16 %v3991
      %v4064 = vunpack.c.h.b16 %v3991
      %v4065 = vunpack.c.l.b16 %v3992
      %v4066 = vunpack.c.h.b16 %v3992
      %v4067 = vunpack.c.l.b16 %v3993
      %v4068 = vunpack.c.h.b16 %v3993
      %v4069 = vpack.c.b16 %v4053, %v4051
      %v4070 = vpack.c.b16 %v4054, %v4052
      %v4071 = vpack.c.b16 %v4057, %v4055
      %v4072 = vpack.c.b16 %v4058, %v4056
      %v4073 = vpack.c.b16 %v4061, %v4059
      %v4074 = vpack.c.b16 %v4062, %v4060
      %v4075 = vpack.c.b16 %v4065, %v4063
      %v4076 = vpack.c.b16 %v4066, %v4064
      %v4077 = vpack.c.b16 %v4067, %v4067
      %v4078 = vpack.c.b16 %v4068, %v4068
      %v4088 = vsel %vm1286, %v4026, 0
      %v4091 = vsel %vm1286, %v4027, 0
      %v4094 = vsel %vm1286, %v4028, 0
      %v4097 = vsel %vm1286, %v4029, 0
      %v4100 = vsel %vm1286, %v4030, 0
      %v4103 = vsel %vm1286, %v4031, 0
      %v4106 = vsel %vm1286, %v4032, 0
      %v4109 = vsel %vm1286, %v4033, 0
      %v4112 = vsel %vm1286, %v4034, 0
      %v4115 = vsel %vm1286, %v4035, 0
      %v4118 = vsel %vm1286, %v4036, 0
      %v4121 = vsel %vm1286, %v4037, 0
      %v4124 = vsel %vm1286, %v4038, 0
      %v4127 = vsel %vm1286, %v4039, 0
      %v4130 = vsel %vm1286, %v4040, 0
      %v4133 = vsel %vm1286, %v4041, 0
      %v4136 = vsel %vm1335, %v4077, 0
      %v4139 = vsel %vm1335, %v4078, 0
      %4141 = vmatprep.subr.bf16.mxu0 %v4070
      %4142 = vmatpush1.bf16.msra.mxu0 %v4069
      %4143 = vmatprep.subr.bf16.mxu0 %v4072
      %4144 = vmatpush1.bf16.msra.mxu0 %v4071
      %4145 = vmatprep.subr.bf16.mxu0 %v4074
      %4146 = vmatpush1.bf16.msra.mxu0 %v4073
      %4147 = vmatprep.subr.bf16.mxu0 %v4076
      %4148 = vmatpush1.bf16.msra.mxu0 %v4075
      %4149 = vmatprep.subr.bf16.mxu0 %v4139
      %4150 = vmatpush1.bf16.msra.mxu0 %v4136
      %4151 = vmatprep.subr.bf16.mxu0 0
      %4152 = vmatpush1.bf16.msra.mxu0 0
      %4153 = vmatprep.subr.bf16.mxu0 0
      %4154 = vmatpush1.bf16.msra.mxu0 0
      %4155 = vmatprep.subr.bf16.mxu0 0
      %4156 = vmatpush1.bf16.msra.mxu0 0
      %4157 = vmatprep.subr.bf16.mxu0 0
      %4158 = vmatpush1.bf16.msra.mxu0 0
      %4159 = vmatprep.subr.bf16.mxu0 0
      %4160 = vmatpush1.bf16.msra.mxu0 0
      %4161 = vmatprep.subr.bf16.mxu0 0
      %4162 = vmatpush1.bf16.msra.mxu0 0
      %4163 = vmatprep.subr.bf16.mxu0 0
      %4164 = vmatpush1.bf16.msra.mxu0 0
      %4165 = vmatprep.subr.bf16.mxu0 0
      %4166 = vmatpush1.bf16.msra.mxu0 0
      %4167 = vmatprep.subr.bf16.mxu0 0
      %4168 = vmatpush1.bf16.msra.mxu0 0
      %4169 = vmatprep.subr.bf16.mxu0 0
      %4170 = vmatpush1.bf16.msra.mxu0 0
      %4171 = vmatprep.subr.bf16.mxu0 0
      %4172 = vmatpush1.bf16.msra.mxu0 0
      %4173 = vmatprep.mubr.bf16.mxu0 0
      %4174 = vmatmul.mubr.bf16.gmra.mrb[0].mxu0 %v4088
      %v4175 = vpop.f32.mrb[0].mxu0
      %v4176 = vadd.f32 0.0, %v4175
      %v4177 = vpop.f32.mrb[0].mxu0
      %v4178 = vadd.f32 0.0, %v4177
      %v4179 = vpop.f32.mrb[0].mxu0
      %v4180 = vadd.f32 0.0, %v4179
      %v4181 = vpop.f32.mrb[0].mxu0
      %v4182 = vadd.f32 0.0, %v4181
      %4183 = vmatprep.mubr.bf16.mxu0 0
      %4184 = vmatmul.mubr.bf16.gmra.mrb[0].mxu0 %v4091
      %v4185 = vpop.f32.mrb[0].mxu0
      %v4186 = vadd.f32 0.0, %v4185
      %v4187 = vpop.f32.mrb[0].mxu0
      %v4188 = vadd.f32 0.0, %v4187
      %v4189 = vpop.f32.mrb[0].mxu0
      %v4190 = vadd.f32 0.0, %v4189
      %v4191 = vpop.f32.mrb[0].mxu0
      %v4192 = vadd.f32 0.0, %v4191
      %4193 = vmatprep.mubr.bf16.mxu0 0
      %4194 = vmatmul.mubr.bf16.gmra.mrb[0].mxu0 %v4094
      %v4195 = vpop.f32.mrb[0].mxu0
      %v4196 = vadd.f32 0.0, %v4195
      %v4197 = vpop.f32.mrb[0].mxu0
      %v4198 = vadd.f32 0.0, %v4197
      %v4199 = vpop.f32.mrb[0].mxu0
      %v4200 = vadd.f32 0.0, %v4199
      %v4201 = vpop.f32.mrb[0].mxu0
      %v4202 = vadd.f32 0.0, %v4201
      %4203 = vmatprep.mubr.bf16.mxu0 0
      %4204 = vmatmul.mubr.bf16.gmra.mrb[0].mxu0 %v4097
      %v4205 = vpop.f32.mrb[0].mxu0
      %v4206 = vadd.f32 0.0, %v4205
      %v4207 = vpop.f32.mrb[0].mxu0
      %v4208 = vadd.f32 0.0, %v4207
      %v4209 = vpop.f32.mrb[0].mxu0
      %v4210 = vadd.f32 0.0, %v4209
      %v4211 = vpop.f32.mrb[0].mxu0
      %v4212 = vadd.f32 0.0, %v4211
      %4213 = vmatprep.mubr.bf16.mxu0 0
      %4214 = vmatmul.mubr.bf16.gmra.mrb[0].mxu0 %v4100
      %v4215 = vpop.f32.mrb[0].mxu0
      %v4216 = vadd.f32 0.0, %v4215
      %v4217 = vpop.f32.mrb[0].mxu0
      %v4218 = vadd.f32 0.0, %v4217
      %v4219 = vpop.f32.mrb[0].mxu0
      %v4220 = vadd.f32 0.0, %v4219
      %v4221 = vpop.f32.mrb[0].mxu0
      %v4222 = vadd.f32 0.0, %v4221
      %4223 = vmatprep.mubr.bf16.mxu0 0
      %4224 = vmatmul.mubr.bf16.gmra.mrb[0].mxu0 %v4103
      %v4225 = vpop.f32.mrb[0].mxu0
      %v4226 = vadd.f32 0.0, %v4225
      %v4227 = vpop.f32.mrb[0].mxu0
      %v4228 = vadd.f32 0.0, %v4227
      %v4229 = vpop.f32.mrb[0].mxu0
      %v4230 = vadd.f32 0.0, %v4229
      %v4231 = vpop.f32.mrb[0].mxu0
      %v4232 = vadd.f32 0.0, %v4231
      %4233 = vmatprep.mubr.bf16.mxu0 0
      %4234 = vmatmul.mubr.bf16.gmra.mrb[0].mxu0 %v4106
      %v4235 = vpop.f32.mrb[0].mxu0
      %v4236 = vadd.f32 0.0, %v4235
      %v4237 = vpop.f32.mrb[0].mxu0
      %v4238 = vadd.f32 0.0, %v4237
      %v4239 = vpop.f32.mrb[0].mxu0
      %v4240 = vadd.f32 0.0, %v4239
      %v4241 = vpop.f32.mrb[0].mxu0
      %v4242 = vadd.f32 0.0, %v4241
      %4243 = vmatprep.mubr.bf16.mxu0 0
      %4244 = vmatmul.mubr.bf16.gmra.mrb[0].mxu0 %v4109
      %v4245 = vpop.f32.mrb[0].mxu0
      %v4246 = vadd.f32 0.0, %v4245
      %v4247 = vpop.f32.mrb[0].mxu0
      %v4248 = vadd.f32 0.0, %v4247
      %v4249 = vpop.f32.mrb[0].mxu0
      %v4250 = vadd.f32 0.0, %v4249
      %v4251 = vpop.f32.mrb[0].mxu0
      %v4252 = vadd.f32 0.0, %v4251
      %4253 = vmatprep.mubr.bf16.mxu0 0
      %4254 = vmatmul.mubr.bf16.gmra.mrb[0].mxu0 %v4112
      %v4255 = vpop.f32.mrb[0].mxu0
      %v4256 = vadd.f32 0.0, %v4255
      %v4257 = vpop.f32.mrb[0].mxu0
      %v4258 = vadd.f32 0.0, %v4257
      %v4259 = vpop.f32.mrb[0].mxu0
      %v4260 = vadd.f32 0.0, %v4259
      %v4261 = vpop.f32.mrb[0].mxu0
      %v4262 = vadd.f32 0.0, %v4261
      %4263 = vmatprep.mubr.bf16.mxu0 0
      %4264 = vmatmul.mubr.bf16.gmra.mrb[0].mxu0 %v4115
      %v4265 = vpop.f32.mrb[0].mxu0
      %v4266 = vadd.f32 0.0, %v4265
      %v4267 = vpop.f32.mrb[0].mxu0
      %v4268 = vadd.f32 0.0, %v4267
      %v4269 = vpop.f32.mrb[0].mxu0
      %v4270 = vadd.f32 0.0, %v4269
      %v4271 = vpop.f32.mrb[0].mxu0
      %v4272 = vadd.f32 0.0, %v4271
      %4273 = vmatprep.mubr.bf16.mxu0 0
      %4274 = vmatmul.mubr.bf16.gmra.mrb[0].mxu0 %v4118
      %v4275 = vpop.f32.mrb[0].mxu0
      %v4276 = vadd.f32 0.0, %v4275
      %v4277 = vpop.f32.mrb[0].mxu0
      %v4278 = vadd.f32 0.0, %v4277
      %v4279 = vpop.f32.mrb[0].mxu0
      %v4280 = vadd.f32 0.0, %v4279
      %v4281 = vpop.f32.mrb[0].mxu0
      %v4282 = vadd.f32 0.0, %v4281
      %4283 = vmatprep.mubr.bf16.mxu0 0
      %4284 = vmatmul.mubr.bf16.gmra.mrb[0].mxu0 %v4121
      %v4285 = vpop.f32.mrb[0].mxu0
      %v4286 = vadd.f32 0.0, %v4285
      %v4287 = vpop.f32.mrb[0].mxu0
      %v4288 = vadd.f32 0.0, %v4287
      %v4289 = vpop.f32.mrb[0].mxu0
      %v4290 = vadd.f32 0.0, %v4289
      %v4291 = vpop.f32.mrb[0].mxu0
      %v4292 = vadd.f32 0.0, %v4291
      %4293 = vmatprep.mubr.bf16.mxu0 0
      %4294 = vmatmul.mubr.bf16.gmra.mrb[0].mxu0 %v4124
      %v4295 = vpop.f32.mrb[0].mxu0
      %v4296 = vadd.f32 0.0, %v4295
      %v4297 = vpop.f32.mrb[0].mxu0
      %v4298 = vadd.f32 0.0, %v4297
      %v4299 = vpop.f32.mrb[0].mxu0
      %v4300 = vadd.f32 0.0, %v4299
      %v4301 = vpop.f32.mrb[0].mxu0
      %v4302 = vadd.f32 0.0, %v4301
      %4303 = vmatprep.mubr.bf16.mxu0 0
      %4304 = vmatmul.mubr.bf16.gmra.mrb[0].mxu0 %v4127
      %v4305 = vpop.f32.mrb[0].mxu0
      %v4306 = vadd.f32 0.0, %v4305
      %v4307 = vpop.f32.mrb[0].mxu0
      %v4308 = vadd.f32 0.0, %v4307
      %v4309 = vpop.f32.mrb[0].mxu0
      %v4310 = vadd.f32 0.0, %v4309
      %v4311 = vpop.f32.mrb[0].mxu0
      %v4312 = vadd.f32 0.0, %v4311
      %4313 = vmatprep.mubr.bf16.mxu0 0
      %4314 = vmatmul.mubr.bf16.gmra.mrb[0].mxu0 %v4130
      %v4315 = vpop.f32.mrb[0].mxu0
      %v4316 = vadd.f32 0.0, %v4315
      %v4317 = vpop.f32.mrb[0].mxu0
      %v4318 = vadd.f32 0.0, %v4317
      %v4319 = vpop.f32.mrb[0].mxu0
      %v4320 = vadd.f32 0.0, %v4319
      %v4321 = vpop.f32.mrb[0].mxu0
      %v4322 = vadd.f32 0.0, %v4321
      %4323 = vmatprep.mubr.bf16.mxu0 0
      %4324 = vmatmul.mubr.bf16.gmra.mrb[0].mxu0 %v4133
      %v4325 = vpop.f32.mrb[0].mxu0
      %v4326 = vadd.f32 0.0, %v4325
      %v4327 = vpop.f32.mrb[0].mxu0
      %v4328 = vadd.f32 0.0, %v4327
      %v4329 = vpop.f32.mrb[0].mxu0
      %v4330 = vadd.f32 0.0, %v4329
      %v4331 = vpop.f32.mrb[0].mxu0
      %v4332 = vadd.f32 0.0, %v4331
      %4333 = vdwg.mxu0
      %v4334 = vadd.f32 %v3744, %v4176
      %v4335 = vadd.f32 %v3745, %v4178
      %v4336 = vadd.f32 %v3746, %v4180
      %v4337 = vadd.f32 %v3747, %v4182
      %v4338 = vadd.f32 %v3748, %v4186
      %v4339 = vadd.f32 %v3749, %v4188
      %v4340 = vadd.f32 %v3750, %v4190
      %v4341 = vadd.f32 %v3751, %v4192
      %v4342 = vadd.f32 %v3752, %v4196
      %v4343 = vadd.f32 %v3753, %v4198
      %v4344 = vadd.f32 %v3754, %v4200
      %v4345 = vadd.f32 %v3755, %v4202
      %v4346 = vadd.f32 %v3756, %v4206
      %v4347 = vadd.f32 %v3757, %v4208
      %v4348 = vadd.f32 %v3758, %v4210
      %v4349 = vadd.f32 %v3759, %v4212
      %v4350 = vadd.f32 %v3760, %v4216
      %v4351 = vadd.f32 %v3761, %v4218
      %v4352 = vadd.f32 %v3762, %v4220
      %v4353 = vadd.f32 %v3763, %v4222
      %v4354 = vadd.f32 %v3764, %v4226
      %v4355 = vadd.f32 %v3765, %v4228
      %v4356 = vadd.f32 %v3766, %v4230
      %v4357 = vadd.f32 %v3767, %v4232
      %v4358 = vadd.f32 %v3768, %v4236
      %v4359 = vadd.f32 %v3769, %v4238
      %v4360 = vadd.f32 %v3770, %v4240
      %v4361 = vadd.f32 %v3771, %v4242
      %v4362 = vadd.f32 %v3772, %v4246
      %v4363 = vadd.f32 %v3773, %v4248
      %v4364 = vadd.f32 %v3774, %v4250
      %v4365 = vadd.f32 %v3775, %v4252
      %v4366 = vadd.f32 %v3776, %v4256
      %v4367 = vadd.f32 %v3777, %v4258
      %v4368 = vadd.f32 %v3778, %v4260
      %v4369 = vadd.f32 %v3779, %v4262
      %v4370 = vadd.f32 %v3780, %v4266
      %v4371 = vadd.f32 %v3781, %v4268
      %v4372 = vadd.f32 %v3782, %v4270
      %v4373 = vadd.f32 %v3783, %v4272
      %v4374 = vadd.f32 %v3784, %v4276
      %v4375 = vadd.f32 %v3785, %v4278
      %v4376 = vadd.f32 %v3786, %v4280
      %v4377 = vadd.f32 %v3787, %v4282
      %v4378 = vadd.f32 %v3788, %v4286
      %v4379 = vadd.f32 %v3789, %v4288
      %v4380 = vadd.f32 %v3790, %v4290
      %v4381 = vadd.f32 %v3791, %v4292
      %v4382 = vadd.f32 %v3792, %v4296
      %v4383 = vadd.f32 %v3793, %v4298
      %v4384 = vadd.f32 %v3794, %v4300
      %v4385 = vadd.f32 %v3795, %v4302
      %v4386 = vadd.f32 %v3796, %v4306
      %v4387 = vadd.f32 %v3797, %v4308
      %v4388 = vadd.f32 %v3798, %v4310
      %v4389 = vadd.f32 %v3799, %v4312
      %v4390 = vadd.f32 %v3800, %v4316
      %v4391 = vadd.f32 %v3801, %v4318
      %v4392 = vadd.f32 %v3802, %v4320
      %v4393 = vadd.f32 %v3803, %v4322
      %v4394 = vadd.f32 %v3804, %v4326
      %v4395 = vadd.f32 %v3805, %v4328
      %v4396 = vadd.f32 %v3806, %v4330
      %v4397 = vadd.f32 %v3807, %v4332
      %s4398 = scalar_lea.vmem [#allocation2], 24
      %v4399 = vld [vmem:[%s4398] sm:$0xf]
      %v4400 = vld [vmem:[%s4398 + $0x4] sm:$0xf]
      %v4401 = vld [vmem:[%s4398 + $0xc] sm:$0xf]
      %v4402 = vld [vmem:[%s4398 + $0x10] sm:$0xf]
      %v4403 = vld [vmem:[%s4398 + $0x18] sm:$0xf]
      %v4404 = vld [vmem:[%s4398 + $0x1c] sm:$0xf]
      %v4405 = vld [vmem:[%s4398 + $0x24] sm:$0xf]
      %v4406 = vld [vmem:[%s4398 + $0x28] sm:$0xf]
      %v4407 = vld [vmem:[%s4398 + $0x30] sm:$0xf]
      %v4408 = vld [vmem:[%s4398 + $0x34] sm:$0xf]
      %v4409 = vld [vmem:[%s4398 + $0x3c] sm:$0xf]
      %v4410 = vld [vmem:[%s4398 + $0x40] sm:$0xf]
      %v4411 = vld [vmem:[%s4398 + $0x48] sm:$0xf]
      %v4412 = vld [vmem:[%s4398 + $0x4c] sm:$0xf]
      %v4413 = vld [vmem:[%s4398 + $0x54] sm:$0xf]
      %v4414 = vld [vmem:[%s4398 + $0x58] sm:$0xf]
      %v4415 = vld [vmem:[%s4398 + $0x78] sm:$0xf]
      %v4416 = vld [vmem:[%s4398 + $0x7c] sm:$0xf]
      %v4417 = vld [vmem:[%s4398 + $0x84] sm:$0xf]
      %v4418 = vld [vmem:[%s4398 + $0x88] sm:$0xf]
      %v4419 = vld [vmem:[%s4398 + $0x90] sm:$0xf]
      %v4420 = vld [vmem:[%s4398 + $0x94] sm:$0xf]
      %v4421 = vld [vmem:[%s4398 + $0x9c] sm:$0xf]
      %v4422 = vld [vmem:[%s4398 + $0xa0] sm:$0xf]
      %v4423 = vld [vmem:[%s4398 + $0xa8] sm:$0xf]
      %v4424 = vld [vmem:[%s4398 + $0xac] sm:$0xf]
      %v4425 = vld [vmem:[%s4398 + $0xb4] sm:$0xf]
      %v4426 = vld [vmem:[%s4398 + $0xb8] sm:$0xf]
      %v4427 = vld [vmem:[%s4398 + $0xc0] sm:$0xf]
      %v4428 = vld [vmem:[%s4398 + $0xc4] sm:$0xf]
      %v4429 = vld [vmem:[%s4398 + $0xcc] sm:$0xf]
      %v4430 = vld [vmem:[%s4398 + $0xd0] sm:$0xf]
      %s4431 = scalar_lea.vmem %s1, 432
      %v4432 = vld [vmem:[%s4431] sm:$0xff]
      %v4433 = vld [vmem:[%s4431 + $0x8] sm:$0xff]
      %v4434 = vld [vmem:[%s4431 + $0x10] sm:$0xff]
      %v4435 = vld [vmem:[%s4431 + $0x18] sm:$0xff]
      %v4436 = vld [vmem:[%s4431 + $0x20] sm:$0xff]
      %v4437 = vld [vmem:[%s4431 + $0x28] sm:$0xff]
      %v4438 = vld [vmem:[%s4431 + $0x30] sm:$0xff]
      %v4439 = vld [vmem:[%s4431 + $0x38] sm:$0xff]
      %v4440 = vld [vmem:[%s4431 + $0x40] sm:$0xff]
      %v4473 = vunpack.c.l.b16 %v4399
      %v4474 = vunpack.c.l.b16 %v4400
      %v4475 = vunpack.c.l.b16 %v4401
      %v4476 = vunpack.c.l.b16 %v4402
      %v4477 = vunpack.c.l.b16 %v4403
      %v4478 = vunpack.c.l.b16 %v4404
      %v4479 = vunpack.c.l.b16 %v4405
      %v4480 = vunpack.c.l.b16 %v4406
      %v4481 = vunpack.c.l.b16 %v4407
      %v4482 = vunpack.c.l.b16 %v4408
      %v4483 = vunpack.c.l.b16 %v4409
      %v4484 = vunpack.c.l.b16 %v4410
      %v4485 = vunpack.c.l.b16 %v4411
      %v4486 = vunpack.c.l.b16 %v4412
      %v4487 = vunpack.c.l.b16 %v4413
      %v4488 = vunpack.c.l.b16 %v4414
      %v4489 = vunpack.c.l.b16 %v4415
      %v4490 = vunpack.c.l.b16 %v4416
      %v4491 = vunpack.c.l.b16 %v4417
      %v4492 = vunpack.c.l.b16 %v4418
      %v4493 = vunpack.c.l.b16 %v4419
      %v4494 = vunpack.c.l.b16 %v4420
      %v4495 = vunpack.c.l.b16 %v4421
      %v4496 = vunpack.c.l.b16 %v4422
      %v4497 = vunpack.c.l.b16 %v4423
      %v4498 = vunpack.c.l.b16 %v4424
      %v4499 = vunpack.c.l.b16 %v4425
      %v4500 = vunpack.c.l.b16 %v4426
      %v4501 = vunpack.c.l.b16 %v4427
      %v4502 = vunpack.c.l.b16 %v4428
      %v4503 = vunpack.c.l.b16 %v4429
      %v4504 = vunpack.c.l.b16 %v4430
      %v4505 = vpack.c.b16 %v4474, %v4473
      %v4506 = vpack.c.b16 %v4476, %v4475
      %v4507 = vpack.c.b16 %v4478, %v4477
      %v4508 = vpack.c.b16 %v4480, %v4479
      %v4509 = vpack.c.b16 %v4482, %v4481
      %v4510 = vpack.c.b16 %v4484, %v4483
      %v4511 = vpack.c.b16 %v4486, %v4485
      %v4512 = vpack.c.b16 %v4488, %v4487
      %v4513 = vpack.c.b16 %v4490, %v4489
      %v4514 = vpack.c.b16 %v4492, %v4491
      %v4515 = vpack.c.b16 %v4494, %v4493
      %v4516 = vpack.c.b16 %v4496, %v4495
      %v4517 = vpack.c.b16 %v4498, %v4497
      %v4518 = vpack.c.b16 %v4500, %v4499
      %v4519 = vpack.c.b16 %v4502, %v4501
      %v4520 = vpack.c.b16 %v4504, %v4503
      %v4530 = vunpack.c.l.b16 %v4432
      %v4531 = vunpack.c.h.b16 %v4432
      %v4532 = vunpack.c.l.b16 %v4433
      %v4533 = vunpack.c.h.b16 %v4433
      %v4534 = vunpack.c.l.b16 %v4434
      %v4535 = vunpack.c.h.b16 %v4434
      %v4536 = vunpack.c.l.b16 %v4435
      %v4537 = vunpack.c.h.b16 %v4435
      %v4538 = vunpack.c.l.b16 %v4436
      %v4539 = vunpack.c.h.b16 %v4436
      %v4540 = vunpack.c.l.b16 %v4437
      %v4541 = vunpack.c.h.b16 %v4437
      %v4542 = vunpack.c.l.b16 %v4438
      %v4543 = vunpack.c.h.b16 %v4438
      %v4544 = vunpack.c.l.b16 %v4439
      %v4545 = vunpack.c.h.b16 %v4439
      %v4546 = vunpack.c.l.b16 %v4440
      %v4547 = vunpack.c.h.b16 %v4440
      %v4548 = vpack.c.b16 %v4532, %v4530
      %v4549 = vpack.c.b16 %v4533, %v4531
      %v4550 = vpack.c.b16 %v4536, %v4534
      %v4551 = vpack.c.b16 %v4537, %v4535
      %v4552 = vpack.c.b16 %v4540, %v4538
      %v4553 = vpack.c.b16 %v4541, %v4539
      %v4554 = vpack.c.b16 %v4544, %v4542
      %v4555 = vpack.c.b16 %v4545, %v4543
      %v4556 = vpack.c.b16 %v4546, %v4546
      %v4557 = vpack.c.b16 %v4547, %v4547
      %v4567 = vsel %vm1286, %v4505, 0
      %v4570 = vsel %vm1286, %v4506, 0
      %v4573 = vsel %vm1286, %v4507, 0
      %v4576 = vsel %vm1286, %v4508, 0
      %v4579 = vsel %vm1286, %v4509, 0
      %v4582 = vsel %vm1286, %v4510, 0
      %v4585 = vsel %vm1286, %v4511, 0
      %v4588 = vsel %vm1286, %v4512, 0
      %v4591 = vsel %vm1286, %v4513, 0
      %v4594 = vsel %vm1286, %v4514, 0
      %v4597 = vsel %vm1286, %v4515, 0
      %v4600 = vsel %vm1286, %v4516, 0
      %v4603 = vsel %vm1286, %v4517, 0
      %v4606 = vsel %vm1286, %v4518, 0
      %v4609 = vsel %vm1286, %v4519, 0
      %v4612 = vsel %vm1286, %v4520, 0
      %v4615 = vsel %vm1335, %v4556, 0
      %v4618 = vsel %vm1335, %v4557, 0
      %4620 = vmatprep.subr.bf16.mxu0 %v4549
      %4621 = vmatpush1.bf16.msra.mxu0 %v4548
      %4622 = vmatprep.subr.bf16.mxu0 %v4551
      %4623 = vmatpush1.bf16.msra.mxu0 %v4550
      %4624 = vmatprep.subr.bf16.mxu0 %v4553
      %4625 = vmatpush1.bf16.msra.mxu0 %v4552
      %4626 = vmatprep.subr.bf16.mxu0 %v4555
      %4627 = vmatpush1.bf16.msra.mxu0 %v4554
      %4628 = vmatprep.subr.bf16.mxu0 %v4618
      %4629 = vmatpush1.bf16.msra.mxu0 %v4615
      %4630 = vmatprep.subr.bf16.mxu0 0
      %4631 = vmatpush1.bf16.msra.mxu0 0
      %4632 = vmatprep.subr.bf16.mxu0 0
      %4633 = vmatpush1.bf16.msra.mxu0 0
      %4634 = vmatprep.subr.bf16.mxu0 0
      %4635 = vmatpush1.bf16.msra.mxu0 0
      %4636 = vmatprep.subr.bf16.mxu0 0
      %4637 = vmatpush1.bf16.msra.mxu0 0
      %4638 = vmatprep.subr.bf16.mxu0 0
      %4639 = vmatpush1.bf16.msra.mxu0 0
      %4640 = vmatprep.subr.bf16.mxu0 0
      %4641 = vmatpush1.bf16.msra.mxu0 0
      %4642 = vmatprep.subr.bf16.mxu0 0
      %4643 = vmatpush1.bf16.msra.mxu0 0
      %4644 = vmatprep.subr.bf16.mxu0 0
      %4645 = vmatpush1.bf16.msra.mxu0 0
      %4646 = vmatprep.subr.bf16.mxu0 0
      %4647 = vmatpush1.bf16.msra.mxu0 0
      %4648 = vmatprep.subr.bf16.mxu0 0
      %4649 = vmatpush1.bf16.msra.mxu0 0
      %4650 = vmatprep.subr.bf16.mxu0 0
      %4651 = vmatpush1.bf16.msra.mxu0 0
      %4652 = vmatprep.mubr.bf16.mxu0 0
      %4653 = vmatmul.mubr.bf16.gmra.mrb[0].mxu0 %v4567
      %v4654 = vpop.f32.mrb[0].mxu0
      %v4655 = vadd.f32 0.0, %v4654
      %v4656 = vpop.f32.mrb[0].mxu0
      %v4657 = vadd.f32 0.0, %v4656
      %v4658 = vpop.f32.mrb[0].mxu0
      %v4659 = vadd.f32 0.0, %v4658
      %v4660 = vpop.f32.mrb[0].mxu0
      %v4661 = vadd.f32 0.0, %v4660
      %4662 = vmatprep.mubr.bf16.mxu0 0
      %4663 = vmatmul.mubr.bf16.gmra.mrb[0].mxu0 %v4570
      %v4664 = vpop.f32.mrb[0].mxu0
      %v4665 = vadd.f32 0.0, %v4664
      %v4666 = vpop.f32.mrb[0].mxu0
      %v4667 = vadd.f32 0.0, %v4666
      %v4668 = vpop.f32.mrb[0].mxu0
      %v4669 = vadd.f32 0.0, %v4668
      %v4670 = vpop.f32.mrb[0].mxu0
      %v4671 = vadd.f32 0.0, %v4670
      %4672 = vmatprep.mubr.bf16.mxu0 0
      %4673 = vmatmul.mubr.bf16.gmra.mrb[0].mxu0 %v4573
      %v4674 = vpop.f32.mrb[0].mxu0
      %v4675 = vadd.f32 0.0, %v4674
      %v4676 = vpop.f32.mrb[0].mxu0
      %v4677 = vadd.f32 0.0, %v4676
      %v4678 = vpop.f32.mrb[0].mxu0
      %v4679 = vadd.f32 0.0, %v4678
      %v4680 = vpop.f32.mrb[0].mxu0
      %v4681 = vadd.f32 0.0, %v4680
      %4682 = vmatprep.mubr.bf16.mxu0 0
      %4683 = vmatmul.mubr.bf16.gmra.mrb[0].mxu0 %v4576
      %v4684 = vpop.f32.mrb[0].mxu0
      %v4685 = vadd.f32 0.0, %v4684
      %v4686 = vpop.f32.mrb[0].mxu0
      %v4687 = vadd.f32 0.0, %v4686
      %v4688 = vpop.f32.mrb[0].mxu0
      %v4689 = vadd.f32 0.0, %v4688
      %v4690 = vpop.f32.mrb[0].mxu0
      %v4691 = vadd.f32 0.0, %v4690
      %4692 = vmatprep.mubr.bf16.mxu0 0
      %4693 = vmatmul.mubr.bf16.gmra.mrb[0].mxu0 %v4579
      %v4694 = vpop.f32.mrb[0].mxu0
      %v4695 = vadd.f32 0.0, %v4694
      %v4696 = vpop.f32.mrb[0].mxu0
      %v4697 = vadd.f32 0.0, %v4696
      %v4698 = vpop.f32.mrb[0].mxu0
      %v4699 = vadd.f32 0.0, %v4698
      %v4700 = vpop.f32.mrb[0].mxu0
      %v4701 = vadd.f32 0.0, %v4700
      %4702 = vmatprep.mubr.bf16.mxu0 0
      %4703 = vmatmul.mubr.bf16.gmra.mrb[0].mxu0 %v4582
      %v4704 = vpop.f32.mrb[0].mxu0
      %v4705 = vadd.f32 0.0, %v4704
      %v4706 = vpop.f32.mrb[0].mxu0
      %v4707 = vadd.f32 0.0, %v4706
      %v4708 = vpop.f32.mrb[0].mxu0
      %v4709 = vadd.f32 0.0, %v4708
      %v4710 = vpop.f32.mrb[0].mxu0
      %v4711 = vadd.f32 0.0, %v4710
      %4712 = vmatprep.mubr.bf16.mxu0 0
      %4713 = vmatmul.mubr.bf16.gmra.mrb[0].mxu0 %v4585
      %v4714 = vpop.f32.mrb[0].mxu0
      %v4715 = vadd.f32 0.0, %v4714
      %v4716 = vpop.f32.mrb[0].mxu0
      %v4717 = vadd.f32 0.0, %v4716
      %v4718 = vpop.f32.mrb[0].mxu0
      %v4719 = vadd.f32 0.0, %v4718
      %v4720 = vpop.f32.mrb[0].mxu0
      %v4721 = vadd.f32 0.0, %v4720
      %4722 = vmatprep.mubr.bf16.mxu0 0
      %4723 = vmatmul.mubr.bf16.gmra.mrb[0].mxu0 %v4588
      %v4724 = vpop.f32.mrb[0].mxu0
      %v4725 = vadd.f32 0.0, %v4724
      %v4726 = vpop.f32.mrb[0].mxu0
      %v4727 = vadd.f32 0.0, %v4726
      %v4728 = vpop.f32.mrb[0].mxu0
      %v4729 = vadd.f32 0.0, %v4728
      %v4730 = vpop.f32.mrb[0].mxu0
      %v4731 = vadd.f32 0.0, %v4730
      %4732 = vmatprep.mubr.bf16.mxu0 0
      %4733 = vmatmul.mubr.bf16.gmra.mrb[0].mxu0 %v4591
      %v4734 = vpop.f32.mrb[0].mxu0
      %v4735 = vadd.f32 0.0, %v4734
      %v4736 = vpop.f32.mrb[0].mxu0
      %v4737 = vadd.f32 0.0, %v4736
      %v4738 = vpop.f32.mrb[0].mxu0
      %v4739 = vadd.f32 0.0, %v4738
      %v4740 = vpop.f32.mrb[0].mxu0
      %v4741 = vadd.f32 0.0, %v4740
      %4742 = vmatprep.mubr.bf16.mxu0 0
      %4743 = vmatmul.mubr.bf16.gmra.mrb[0].mxu0 %v4594
      %v4744 = vpop.f32.mrb[0].mxu0
      %v4745 = vadd.f32 0.0, %v4744
      %v4746 = vpop.f32.mrb[0].mxu0
      %v4747 = vadd.f32 0.0, %v4746
      %v4748 = vpop.f32.mrb[0].mxu0
      %v4749 = vadd.f32 0.0, %v4748
      %v4750 = vpop.f32.mrb[0].mxu0
      %v4751 = vadd.f32 0.0, %v4750
      %4752 = vmatprep.mubr.bf16.mxu0 0
      %4753 = vmatmul.mubr.bf16.gmra.mrb[0].mxu0 %v4597
      %v4754 = vpop.f32.mrb[0].mxu0
      %v4755 = vadd.f32 0.0, %v4754
      %v4756 = vpop.f32.mrb[0].mxu0
      %v4757 = vadd.f32 0.0, %v4756
      %v4758 = vpop.f32.mrb[0].mxu0
      %v4759 = vadd.f32 0.0, %v4758
      %v4760 = vpop.f32.mrb[0].mxu0
      %v4761 = vadd.f32 0.0, %v4760
      %4762 = vmatprep.mubr.bf16.mxu0 0
      %4763 = vmatmul.mubr.bf16.gmra.mrb[0].mxu0 %v4600
      %v4764 = vpop.f32.mrb[0].mxu0
      %v4765 = vadd.f32 0.0, %v4764
      %v4766 = vpop.f32.mrb[0].mxu0
      %v4767 = vadd.f32 0.0, %v4766
      %v4768 = vpop.f32.mrb[0].mxu0
      %v4769 = vadd.f32 0.0, %v4768
      %v4770 = vpop.f32.mrb[0].mxu0
      %v4771 = vadd.f32 0.0, %v4770
      %4772 = vmatprep.mubr.bf16.mxu0 0
      %4773 = vmatmul.mubr.bf16.gmra.mrb[0].mxu0 %v4603
      %v4774 = vpop.f32.mrb[0].mxu0
      %v4775 = vadd.f32 0.0, %v4774
      %v4776 = vpop.f32.mrb[0].mxu0
      %v4777 = vadd.f32 0.0, %v4776
      %v4778 = vpop.f32.mrb[0].mxu0
      %v4779 = vadd.f32 0.0, %v4778
      %v4780 = vpop.f32.mrb[0].mxu0
      %v4781 = vadd.f32 0.0, %v4780
      %4782 = vmatprep.mubr.bf16.mxu0 0
      %4783 = vmatmul.mubr.bf16.gmra.mrb[0].mxu0 %v4606
      %v4784 = vpop.f32.mrb[0].mxu0
      %v4785 = vadd.f32 0.0, %v4784
      %v4786 = vpop.f32.mrb[0].mxu0
      %v4787 = vadd.f32 0.0, %v4786
      %v4788 = vpop.f32.mrb[0].mxu0
      %v4789 = vadd.f32 0.0, %v4788
      %v4790 = vpop.f32.mrb[0].mxu0
      %v4791 = vadd.f32 0.0, %v4790
      %4792 = vmatprep.mubr.bf16.mxu0 0
      %4793 = vmatmul.mubr.bf16.gmra.mrb[0].mxu0 %v4609
      %v4794 = vpop.f32.mrb[0].mxu0
      %v4795 = vadd.f32 0.0, %v4794
      %v4796 = vpop.f32.mrb[0].mxu0
      %v4797 = vadd.f32 0.0, %v4796
      %v4798 = vpop.f32.mrb[0].mxu0
      %v4799 = vadd.f32 0.0, %v4798
      %v4800 = vpop.f32.mrb[0].mxu0
      %v4801 = vadd.f32 0.0, %v4800
      %4802 = vmatprep.mubr.bf16.mxu0 0
      %4803 = vmatmul.mubr.bf16.gmra.mrb[0].mxu0 %v4612
      %v4804 = vpop.f32.mrb[0].mxu0
      %v4805 = vadd.f32 0.0, %v4804
      %v4806 = vpop.f32.mrb[0].mxu0
      %v4807 = vadd.f32 0.0, %v4806
      %v4808 = vpop.f32.mrb[0].mxu0
      %v4809 = vadd.f32 0.0, %v4808
      %v4810 = vpop.f32.mrb[0].mxu0
      %v4811 = vadd.f32 0.0, %v4810
      %4812 = vdwg.mxu0
      %v4813 = vadd.f32 %v4334, %v4655
      %v4814 = vadd.f32 %v4335, %v4657
      %v4815 = vadd.f32 %v4336, %v4659
      %v4816 = vadd.f32 %v4337, %v4661
      %v4817 = vadd.f32 %v4338, %v4665
      %v4818 = vadd.f32 %v4339, %v4667
      %v4819 = vadd.f32 %v4340, %v4669
      %v4820 = vadd.f32 %v4341, %v4671
      %v4821 = vadd.f32 %v4342, %v4675
      %v4822 = vadd.f32 %v4343, %v4677
      %v4823 = vadd.f32 %v4344, %v4679
      %v4824 = vadd.f32 %v4345, %v4681
      %v4825 = vadd.f32 %v4346, %v4685
      %v4826 = vadd.f32 %v4347, %v4687
      %v4827 = vadd.f32 %v4348, %v4689
      %v4828 = vadd.f32 %v4349, %v4691
      %v4829 = vadd.f32 %v4350, %v4695
      %v4830 = vadd.f32 %v4351, %v4697
      %v4831 = vadd.f32 %v4352, %v4699
      %v4832 = vadd.f32 %v4353, %v4701
      %v4833 = vadd.f32 %v4354, %v4705
      %v4834 = vadd.f32 %v4355, %v4707
      %v4835 = vadd.f32 %v4356, %v4709
      %v4836 = vadd.f32 %v4357, %v4711
      %v4837 = vadd.f32 %v4358, %v4715
      %v4838 = vadd.f32 %v4359, %v4717
      %v4839 = vadd.f32 %v4360, %v4719
      %v4840 = vadd.f32 %v4361, %v4721
      %v4841 = vadd.f32 %v4362, %v4725
      %v4842 = vadd.f32 %v4363, %v4727
      %v4843 = vadd.f32 %v4364, %v4729
      %v4844 = vadd.f32 %v4365, %v4731
      %v4845 = vadd.f32 %v4366, %v4735
      %v4846 = vadd.f32 %v4367, %v4737
      %v4847 = vadd.f32 %v4368, %v4739
      %v4848 = vadd.f32 %v4369, %v4741
      %v4849 = vadd.f32 %v4370, %v4745
      %v4850 = vadd.f32 %v4371, %v4747
      %v4851 = vadd.f32 %v4372, %v4749
      %v4852 = vadd.f32 %v4373, %v4751
      %v4853 = vadd.f32 %v4374, %v4755
      %v4854 = vadd.f32 %v4375, %v4757
      %v4855 = vadd.f32 %v4376, %v4759
      %v4856 = vadd.f32 %v4377, %v4761
      %v4857 = vadd.f32 %v4378, %v4765
      %v4858 = vadd.f32 %v4379, %v4767
      %v4859 = vadd.f32 %v4380, %v4769
      %v4860 = vadd.f32 %v4381, %v4771
      %v4861 = vadd.f32 %v4382, %v4775
      %v4862 = vadd.f32 %v4383, %v4777
      %v4863 = vadd.f32 %v4384, %v4779
      %v4864 = vadd.f32 %v4385, %v4781
      %v4865 = vadd.f32 %v4386, %v4785
      %v4866 = vadd.f32 %v4387, %v4787
      %v4867 = vadd.f32 %v4388, %v4789
      %v4868 = vadd.f32 %v4389, %v4791
      %v4869 = vadd.f32 %v4390, %v4795
      %v4870 = vadd.f32 %v4391, %v4797
      %v4871 = vadd.f32 %v4392, %v4799
      %v4872 = vadd.f32 %v4393, %v4801
      %v4873 = vadd.f32 %v4394, %v4805
      %v4874 = vadd.f32 %v4395, %v4807
      %v4875 = vadd.f32 %v4396, %v4809
      %v4876 = vadd.f32 %v4397, %v4811
      %v4877 = vld [vmem:[%s4398] sm:$0xf]
      %v4878 = vld [vmem:[%s4398 + $0x4] sm:$0xf]
      %v4879 = vld [vmem:[%s4398 + $0x8] sm:$0x1]
      %v4880 = vld [vmem:[%s4398 + $0xc] sm:$0xf]
      %v4881 = vld [vmem:[%s4398 + $0x10] sm:$0xf]
      %v4882 = vld [vmem:[%s4398 + $0x14] sm:$0x1]
      %v4883 = vld [vmem:[%s4398 + $0x18] sm:$0xf]
      %v4884 = vld [vmem:[%s4398 + $0x1c] sm:$0xf]
      %v4885 = vld [vmem:[%s4398 + $0x20] sm:$0x1]
      %v4886 = vld [vmem:[%s4398 + $0x24] sm:$0xf]
      %v4887 = vld [vmem:[%s4398 + $0x28] sm:$0xf]
      %v4888 = vld [vmem:[%s4398 + $0x2c] sm:$0x1]
      %v4889 = vld [vmem:[%s4398 + $0x30] sm:$0xf]
      %v4890 = vld [vmem:[%s4398 + $0x34] sm:$0xf]
      %v4891 = vld [vmem:[%s4398 + $0x38] sm:$0x1]
      %v4892 = vld [vmem:[%s4398 + $0x3c] sm:$0xf]
      %v4893 = vld [vmem:[%s4398 + $0x40] sm:$0xf]
      %v4894 = vld [vmem:[%s4398 + $0x44] sm:$0x1]
      %v4895 = vld [vmem:[%s4398 + $0x48] sm:$0xf]
      %v4896 = vld [vmem:[%s4398 + $0x4c] sm:$0xf]
      %v4897 = vld [vmem:[%s4398 + $0x50] sm:$0x1]
      %v4898 = vld [vmem:[%s4398 + $0x54] sm:$0xf]
      %v4899 = vld [vmem:[%s4398 + $0x58] sm:$0xf]
      %v4900 = vld [vmem:[%s4398 + $0x5c] sm:$0x1]
      %v4901 = vld [vmem:[%s4398 + $0x78] sm:$0xf]
      %v4902 = vld [vmem:[%s4398 + $0x7c] sm:$0xf]
      %v4903 = vld [vmem:[%s4398 + $0x80] sm:$0x1]
      %v4904 = vld [vmem:[%s4398 + $0x84] sm:$0xf]
      %v4905 = vld [vmem:[%s4398 + $0x88] sm:$0xf]
      %v4906 = vld [vmem:[%s4398 + $0x8c] sm:$0x1]
      %v4907 = vld [vmem:[%s4398 + $0x90] sm:$0xf]
      %v4908 = vld [vmem:[%s4398 + $0x94] sm:$0xf]
      %v4909 = vld [vmem:[%s4398 + $0x98] sm:$0x1]
      %v4910 = vld [vmem:[%s4398 + $0x9c] sm:$0xf]
      %v4911 = vld [vmem:[%s4398 + $0xa0] sm:$0xf]
      %v4912 = vld [vmem:[%s4398 + $0xa4] sm:$0x1]
      %v4913 = vld [vmem:[%s4398 + $0xa8] sm:$0xf]
      %v4914 = vld [vmem:[%s4398 + $0xac] sm:$0xf]
      %v4915 = vld [vmem:[%s4398 + $0xb0] sm:$0x1]
      %v4916 = vld [vmem:[%s4398 + $0xb4] sm:$0xf]
      %v4917 = vld [vmem:[%s4398 + $0xb8] sm:$0xf]
      %v4918 = vld [vmem:[%s4398 + $0xbc] sm:$0x1]
      %v4919 = vld [vmem:[%s4398 + $0xc0] sm:$0xf]
      %v4920 = vld [vmem:[%s4398 + $0xc4] sm:$0xf]
      %v4921 = vld [vmem:[%s4398 + $0xc8] sm:$0x1]
      %v4922 = vld [vmem:[%s4398 + $0xcc] sm:$0xf]
      %v4923 = vld [vmem:[%s4398 + $0xd0] sm:$0xf]
      %v4924 = vld [vmem:[%s4398 + $0xd4] sm:$0x1]
      %v4926 = vshrl.u32 %v4877, 16
      %v4928 = vrot.slane %v4926, 4
      %v4929 = vshll.u32 %v4877, 16
      %v4931 = vrot.slane %v4929, 5
      %v4932 = vor.u32 %v4928, %v4931
      %v4933 = vrot.slane %v4932, 4
      %v4935 = vshll.u32 %v4878, 16
      %v4937 = vrot.slane %v4935, 5
      %v4938 = vsel %vm798, %v4933, %v4937
      %v4939 = vshrl.u32 %v4878, 16
      %v4941 = vrot.slane %v4939, 4
      %v4942 = vor.u32 %v4941, %v4937
      %v4943 = vrot.slane %v4942, 4
      %v4945 = vshll.u32 %v4879, 16
      %v4947 = vrot.slane %v4945, 5
      %v4948 = vsel %vm798, %v4943, %v4947
      %v4950 = vshrl.u32 %v4880, 16
      %v4952 = vrot.slane %v4950, 4
      %v4953 = vshll.u32 %v4880, 16
      %v4955 = vrot.slane %v4953, 5
      %v4956 = vor.u32 %v4952, %v4955
      %v4957 = vrot.slane %v4956, 4
      %v4959 = vshll.u32 %v4881, 16
      %v4961 = vrot.slane %v4959, 5
      %v4962 = vsel %vm798, %v4957, %v4961
      %v4963 = vshrl.u32 %v4881, 16
      %v4965 = vrot.slane %v4963, 4
      %v4966 = vor.u32 %v4965, %v4961
      %v4967 = vrot.slane %v4966, 4
      %v4969 = vshll.u32 %v4882, 16
      %v4971 = vrot.slane %v4969, 5
      %v4972 = vsel %vm798, %v4967, %v4971
      %v4974 = vshrl.u32 %v4883, 16
      %v4976 = vrot.slane %v4974, 4
      %v4977 = vshll.u32 %v4883, 16
      %v4979 = vrot.slane %v4977, 5
      %v4980 = vor.u32 %v4976, %v4979
      %v4981 = vrot.slane %v4980, 4
      %v4983 = vshll.u32 %v4884, 16
      %v4985 = vrot.slane %v4983, 5
      %v4986 = vsel %vm798, %v4981, %v4985
      %v4987 = vshrl.u32 %v4884, 16
      %v4989 = vrot.slane %v4987, 4
      %v4990 = vor.u32 %v4989, %v4985
      %v4991 = vrot.slane %v4990, 4
      %v4993 = vshll.u32 %v4885, 16
      %v4995 = vrot.slane %v4993, 5
      %v4996 = vsel %vm798, %v4991, %v4995
      %v4998 = vshrl.u32 %v4886, 16
      %v5000 = vrot.slane %v4998, 4
      %v5001 = vshll.u32 %v4886, 16
      %v5003 = vrot.slane %v5001, 5
      %v5004 = vor.u32 %v5000, %v5003
      %v5005 = vrot.slane %v5004, 4
      %v5007 = vshll.u32 %v4887, 16
      %v5009 = vrot.slane %v5007, 5
      %v5010 = vsel %vm798, %v5005, %v5009
      %v5011 = vshrl.u32 %v4887, 16
      %v5013 = vrot.slane %v5011, 4
      %v5014 = vor.u32 %v5013, %v5009
      %v5015 = vrot.slane %v5014, 4
      %v5017 = vshll.u32 %v4888, 16
      %v5019 = vrot.slane %v5017, 5
      %v5020 = vsel %vm798, %v5015, %v5019
      %v5022 = vshrl.u32 %v4889, 16
      %v5024 = vrot.slane %v5022, 4
      %v5025 = vshll.u32 %v4889, 16
      %v5027 = vrot.slane %v5025, 5
      %v5028 = vor.u32 %v5024, %v5027
      %v5029 = vrot.slane %v5028, 4
      %v5031 = vshll.u32 %v4890, 16
      %v5033 = vrot.slane %v5031, 5
      %v5034 = vsel %vm798, %v5029, %v5033
      %v5035 = vshrl.u32 %v4890, 16
      %v5037 = vrot.slane %v5035, 4
      %v5038 = vor.u32 %v5037, %v5033
      %v5039 = vrot.slane %v5038, 4
      %v5041 = vshll.u32 %v4891, 16
      %v5043 = vrot.slane %v5041, 5
      %v5044 = vsel %vm798, %v5039, %v5043
      %v5046 = vshrl.u32 %v4892, 16
      %v5048 = vrot.slane %v5046, 4
      %v5049 = vshll.u32 %v4892, 16
      %v5051 = vrot.slane %v5049, 5
      %v5052 = vor.u32 %v5048, %v5051
      %v5053 = vrot.slane %v5052, 4
      %v5055 = vshll.u32 %v4893, 16
      %v5057 = vrot.slane %v5055, 5
      %v5058 = vsel %vm798, %v5053, %v5057
      %v5059 = vshrl.u32 %v4893, 16
      %v5061 = vrot.slane %v5059, 4
      %v5062 = vor.u32 %v5061, %v5057
      %v5063 = vrot.slane %v5062, 4
      %v5065 = vshll.u32 %v4894, 16
      %v5067 = vrot.slane %v5065, 5
      %v5068 = vsel %vm798, %v5063, %v5067
      %v5070 = vshrl.u32 %v4895, 16
      %v5072 = vrot.slane %v5070, 4
      %v5073 = vshll.u32 %v4895, 16
      %v5075 = vrot.slane %v5073, 5
      %v5076 = vor.u32 %v5072, %v5075
      %v5077 = vrot.slane %v5076, 4
      %v5079 = vshll.u32 %v4896, 16
      %v5081 = vrot.slane %v5079, 5
      %v5082 = vsel %vm798, %v5077, %v5081
      %v5083 = vshrl.u32 %v4896, 16
      %v5085 = vrot.slane %v5083, 4
      %v5086 = vor.u32 %v5085, %v5081
      %v5087 = vrot.slane %v5086, 4
      %v5089 = vshll.u32 %v4897, 16
      %v5091 = vrot.slane %v5089, 5
      %v5092 = vsel %vm798, %v5087, %v5091
      %v5094 = vshrl.u32 %v4898, 16
      %v5096 = vrot.slane %v5094, 4
      %v5097 = vshll.u32 %v4898, 16
      %v5099 = vrot.slane %v5097, 5
      %v5100 = vor.u32 %v5096, %v5099
      %v5101 = vrot.slane %v5100, 4
      %v5103 = vshll.u32 %v4899, 16
      %v5105 = vrot.slane %v5103, 5
      %v5106 = vsel %vm798, %v5101, %v5105
      %v5107 = vshrl.u32 %v4899, 16
      %v5109 = vrot.slane %v5107, 4
      %v5110 = vor.u32 %v5109, %v5105
      %v5111 = vrot.slane %v5110, 4
      %v5113 = vshll.u32 %v4900, 16
      %v5115 = vrot.slane %v5113, 5
      %v5116 = vsel %vm798, %v5111, %v5115
      %v5118 = vshrl.u32 %v4901, 16
      %v5120 = vrot.slane %v5118, 4
      %v5121 = vshll.u32 %v4901, 16
      %v5123 = vrot.slane %v5121, 5
      %v5124 = vor.u32 %v5120, %v5123
      %v5125 = vrot.slane %v5124, 4
      %v5127 = vshll.u32 %v4902, 16
      %v5129 = vrot.slane %v5127, 5
      %v5130 = vsel %vm798, %v5125, %v5129
      %v5131 = vshrl.u32 %v4902, 16
      %v5133 = vrot.slane %v5131, 4
      %v5134 = vor.u32 %v5133, %v5129
      %v5135 = vrot.slane %v5134, 4
      %v5137 = vshll.u32 %v4903, 16
      %v5139 = vrot.slane %v5137, 5
      %v5140 = vsel %vm798, %v5135, %v5139
      %v5142 = vshrl.u32 %v4904, 16
      %v5144 = vrot.slane %v5142, 4
      %v5145 = vshll.u32 %v4904, 16
      %v5147 = vrot.slane %v5145, 5
      %v5148 = vor.u32 %v5144, %v5147
      %v5149 = vrot.slane %v5148, 4
      %v5151 = vshll.u32 %v4905, 16
      %v5153 = vrot.slane %v5151, 5
      %v5154 = vsel %vm798, %v5149, %v5153
      %v5155 = vshrl.u32 %v4905, 16
      %v5157 = vrot.slane %v5155, 4
      %v5158 = vor.u32 %v5157, %v5153
      %v5159 = vrot.slane %v5158, 4
      %v5161 = vshll.u32 %v4906, 16
      %v5163 = vrot.slane %v5161, 5
      %v5164 = vsel %vm798, %v5159, %v5163
      %v5166 = vshrl.u32 %v4907, 16
      %v5168 = vrot.slane %v5166, 4
      %v5169 = vshll.u32 %v4907, 16
      %v5171 = vrot.slane %v5169, 5
      %v5172 = vor.u32 %v5168, %v5171
      %v5173 = vrot.slane %v5172, 4
      %v5175 = vshll.u32 %v4908, 16
      %v5177 = vrot.slane %v5175, 5
      %v5178 = vsel %vm798, %v5173, %v5177
      %v5179 = vshrl.u32 %v4908, 16
      %v5181 = vrot.slane %v5179, 4
      %v5182 = vor.u32 %v5181, %v5177
      %v5183 = vrot.slane %v5182, 4
      %v5185 = vshll.u32 %v4909, 16
      %v5187 = vrot.slane %v5185, 5
      %v5188 = vsel %vm798, %v5183, %v5187
      %v5190 = vshrl.u32 %v4910, 16
      %v5192 = vrot.slane %v5190, 4
      %v5193 = vshll.u32 %v4910, 16
      %v5195 = vrot.slane %v5193, 5
      %v5196 = vor.u32 %v5192, %v5195
      %v5197 = vrot.slane %v5196, 4
      %v5199 = vshll.u32 %v4911, 16
      %v5201 = vrot.slane %v5199, 5
      %v5202 = vsel %vm798, %v5197, %v5201
      %v5203 = vshrl.u32 %v4911, 16
      %v5205 = vrot.slane %v5203, 4
      %v5206 = vor.u32 %v5205, %v5201
      %v5207 = vrot.slane %v5206, 4
      %v5209 = vshll.u32 %v4912, 16
      %v5211 = vrot.slane %v5209, 5
      %v5212 = vsel %vm798, %v5207, %v5211
      %v5214 = vshrl.u32 %v4913, 16
      %v5216 = vrot.slane %v5214, 4
      %v5217 = vshll.u32 %v4913, 16
      %v5219 = vrot.slane %v5217, 5
      %v5220 = vor.u32 %v5216, %v5219
      %v5221 = vrot.slane %v5220, 4
      %v5223 = vshll.u32 %v4914, 16
      %v5225 = vrot.slane %v5223, 5
      %v5226 = vsel %vm798, %v5221, %v5225
      %v5227 = vshrl.u32 %v4914, 16
      %v5229 = vrot.slane %v5227, 4
      %v5230 = vor.u32 %v5229, %v5225
      %v5231 = vrot.slane %v5230, 4
      %v5233 = vshll.u32 %v4915, 16
      %v5235 = vrot.slane %v5233, 5
      %v5236 = vsel %vm798, %v5231, %v5235
      %v5238 = vshrl.u32 %v4916, 16
      %v5240 = vrot.slane %v5238, 4
      %v5241 = vshll.u32 %v4916, 16
      %v5243 = vrot.slane %v5241, 5
      %v5244 = vor.u32 %v5240, %v5243
      %v5245 = vrot.slane %v5244, 4
      %v5247 = vshll.u32 %v4917, 16
      %v5249 = vrot.slane %v5247, 5
      %v5250 = vsel %vm798, %v5245, %v5249
      %v5251 = vshrl.u32 %v4917, 16
      %v5253 = vrot.slane %v5251, 4
      %v5254 = vor.u32 %v5253, %v5249
      %v5255 = vrot.slane %v5254, 4
      %v5257 = vshll.u32 %v4918, 16
      %v5259 = vrot.slane %v5257, 5
      %v5260 = vsel %vm798, %v5255, %v5259
      %v5262 = vshrl.u32 %v4919, 16
      %v5264 = vrot.slane %v5262, 4
      %v5265 = vshll.u32 %v4919, 16
      %v5267 = vrot.slane %v5265, 5
      %v5268 = vor.u32 %v5264, %v5267
      %v5269 = vrot.slane %v5268, 4
      %v5271 = vshll.u32 %v4920, 16
      %v5273 = vrot.slane %v5271, 5
      %v5274 = vsel %vm798, %v5269, %v5273
      %v5275 = vshrl.u32 %v4920, 16
      %v5277 = vrot.slane %v5275, 4
      %v5278 = vor.u32 %v5277, %v5273
      %v5279 = vrot.slane %v5278, 4
      %v5281 = vshll.u32 %v4921, 16
      %v5283 = vrot.slane %v5281, 5
      %v5284 = vsel %vm798, %v5279, %v5283
      %v5286 = vshrl.u32 %v4922, 16
      %v5288 = vrot.slane %v5286, 4
      %v5289 = vshll.u32 %v4922, 16
      %v5291 = vrot.slane %v5289, 5
      %v5292 = vor.u32 %v5288, %v5291
      %v5293 = vrot.slane %v5292, 4
      %v5295 = vshll.u32 %v4923, 16
      %v5297 = vrot.slane %v5295, 5
      %v5298 = vsel %vm798, %v5293, %v5297
      %v5299 = vshrl.u32 %v4923, 16
      %v5301 = vrot.slane %v5299, 4
      %v5302 = vor.u32 %v5301, %v5297
      %v5303 = vrot.slane %v5302, 4
      %v5305 = vshll.u32 %v4924, 16
      %v5307 = vrot.slane %v5305, 5
      %v5308 = vsel %vm798, %v5303, %v5307
      %s5309 = scalar_lea.vmem %s1, 504
      %v5310 = vld [vmem:[%s5309] sm:$0xff]
      %v5311 = vld [vmem:[%s5309 + $0x8] sm:$0xff]
      %v5312 = vld [vmem:[%s5309 + $0x10] sm:$0xff]
      %v5313 = vld [vmem:[%s5309 + $0x18] sm:$0xff]
      %v5314 = vld [vmem:[%s5309 + $0x20] sm:$0xff]
      %v5315 = vld [vmem:[%s5309 + $0x28] sm:$0xff]
      %v5316 = vld [vmem:[%s5309 + $0x30] sm:$0xff]
      %v5317 = vld [vmem:[%s5309 + $0x38] sm:$0xff]
      %v5318 = vld [vmem:[%s5309 + $0x40] sm:$0xff]
      %v5319 = vunpack.c.l.b16 %v4938
      %v5320 = vunpack.c.l.b16 %v4948
      %v5321 = vunpack.c.l.b16 %v4962
      %v5322 = vunpack.c.l.b16 %v4972
      %v5323 = vunpack.c.l.b16 %v4986
      %v5324 = vunpack.c.l.b16 %v4996
      %v5325 = vunpack.c.l.b16 %v5010
      %v5326 = vunpack.c.l.b16 %v5020
      %v5327 = vunpack.c.l.b16 %v5034
      %v5328 = vunpack.c.l.b16 %v5044
      %v5329 = vunpack.c.l.b16 %v5058
      %v5330 = vunpack.c.l.b16 %v5068
      %v5331 = vunpack.c.l.b16 %v5082
      %v5332 = vunpack.c.l.b16 %v5092
      %v5333 = vunpack.c.l.b16 %v5106
      %v5334 = vunpack.c.l.b16 %v5116
      %v5335 = vunpack.c.l.b16 %v5130
      %v5336 = vunpack.c.l.b16 %v5140
      %v5337 = vunpack.c.l.b16 %v5154
      %v5338 = vunpack.c.l.b16 %v5164
      %v5339 = vunpack.c.l.b16 %v5178
      %v5340 = vunpack.c.l.b16 %v5188
      %v5341 = vunpack.c.l.b16 %v5202
      %v5342 = vunpack.c.l.b16 %v5212
      %v5343 = vunpack.c.l.b16 %v5226
      %v5344 = vunpack.c.l.b16 %v5236
      %v5345 = vunpack.c.l.b16 %v5250
      %v5346 = vunpack.c.l.b16 %v5260
      %v5347 = vunpack.c.l.b16 %v5274
      %v5348 = vunpack.c.l.b16 %v5284
      %v5349 = vunpack.c.l.b16 %v5298
      %v5350 = vunpack.c.l.b16 %v5308
      %v5351 = vpack.c.b16 %v5320, %v5319
      %v5352 = vpack.c.b16 %v5322, %v5321
      %v5353 = vpack.c.b16 %v5324, %v5323
      %v5354 = vpack.c.b16 %v5326, %v5325
      %v5355 = vpack.c.b16 %v5328, %v5327
      %v5356 = vpack.c.b16 %v5330, %v5329
      %v5357 = vpack.c.b16 %v5332, %v5331
      %v5358 = vpack.c.b16 %v5334, %v5333
      %v5359 = vpack.c.b16 %v5336, %v5335
      %v5360 = vpack.c.b16 %v5338, %v5337
      %v5361 = vpack.c.b16 %v5340, %v5339
      %v5362 = vpack.c.b16 %v5342, %v5341
      %v5363 = vpack.c.b16 %v5344, %v5343
      %v5364 = vpack.c.b16 %v5346, %v5345
      %v5365 = vpack.c.b16 %v5348, %v5347
      %v5366 = vpack.c.b16 %v5350, %v5349
      %v5376 = vunpack.c.l.b16 %v5310
      %v5377 = vunpack.c.h.b16 %v5310
      %v5378 = vunpack.c.l.b16 %v5311
      %v5379 = vunpack.c.h.b16 %v5311
      %v5380 = vunpack.c.l.b16 %v5312
      %v5381 = vunpack.c.h.b16 %v5312
      %v5382 = vunpack.c.l.b16 %v5313
      %v5383 = vunpack.c.h.b16 %v5313
      %v5384 = vunpack.c.l.b16 %v5314
      %v5385 = vunpack.c.h.b16 %v5314
      %v5386 = vunpack.c.l.b16 %v5315
      %v5387 = vunpack.c.h.b16 %v5315
      %v5388 = vunpack.c.l.b16 %v5316
      %v5389 = vunpack.c.h.b16 %v5316
      %v5390 = vunpack.c.l.b16 %v5317
      %v5391 = vunpack.c.h.b16 %v5317
      %v5392 = vunpack.c.l.b16 %v5318
      %v5393 = vunpack.c.h.b16 %v5318
      %v5394 = vpack.c.b16 %v5378, %v5376
      %v5395 = vpack.c.b16 %v5379, %v5377
      %v5396 = vpack.c.b16 %v5382, %v5380
      %v5397 = vpack.c.b16 %v5383, %v5381
      %v5398 = vpack.c.b16 %v5386, %v5384
      %v5399 = vpack.c.b16 %v5387, %v5385
      %v5400 = vpack.c.b16 %v5390, %v5388
      %v5401 = vpack.c.b16 %v5391, %v5389
      %v5402 = vpack.c.b16 %v5392, %v5392
      %v5403 = vpack.c.b16 %v5393, %v5393
      %v5413 = vsel %vm1286, %v5351, 0
      %v5416 = vsel %vm1286, %v5352, 0
      %v5419 = vsel %vm1286, %v5353, 0
      %v5422 = vsel %vm1286, %v5354, 0
      %v5425 = vsel %vm1286, %v5355, 0
      %v5428 = vsel %vm1286, %v5356, 0
      %v5431 = vsel %vm1286, %v5357, 0
      %v5434 = vsel %vm1286, %v5358, 0
      %v5437 = vsel %vm1286, %v5359, 0
      %v5440 = vsel %vm1286, %v5360, 0
      %v5443 = vsel %vm1286, %v5361, 0
      %v5446 = vsel %vm1286, %v5362, 0
      %v5449 = vsel %vm1286, %v5363, 0
      %v5452 = vsel %vm1286, %v5364, 0
      %v5455 = vsel %vm1286, %v5365, 0
      %v5458 = vsel %vm1286, %v5366, 0
      %v5461 = vsel %vm1335, %v5402, 0
      %v5464 = vsel %vm1335, %v5403, 0
      %5466 = vmatprep.subr.bf16.mxu0 %v5395
      %5467 = vmatpush1.bf16.msra.mxu0 %v5394
      %5468 = vmatprep.subr.bf16.mxu0 %v5397
      %5469 = vmatpush1.bf16.msra.mxu0 %v5396
      %5470 = vmatprep.subr.bf16.mxu0 %v5399
      %5471 = vmatpush1.bf16.msra.mxu0 %v5398
      %5472 = vmatprep.subr.bf16.mxu0 %v5401
      %5473 = vmatpush1.bf16.msra.mxu0 %v5400
      %5474 = vmatprep.subr.bf16.mxu0 %v5464
      %5475 = vmatpush1.bf16.msra.mxu0 %v5461
      %5476 = vmatprep.subr.bf16.mxu0 0
      %5477 = vmatpush1.bf16.msra.mxu0 0
      %5478 = vmatprep.subr.bf16.mxu0 0
      %5479 = vmatpush1.bf16.msra.mxu0 0
      %5480 = vmatprep.subr.bf16.mxu0 0
      %5481 = vmatpush1.bf16.msra.mxu0 0
      %5482 = vmatprep.subr.bf16.mxu0 0
      %5483 = vmatpush1.bf16.msra.mxu0 0
      %5484 = vmatprep.subr.bf16.mxu0 0
      %5485 = vmatpush1.bf16.msra.mxu0 0
      %5486 = vmatprep.subr.bf16.mxu0 0
      %5487 = vmatpush1.bf16.msra.mxu0 0
      %5488 = vmatprep.subr.bf16.mxu0 0
      %5489 = vmatpush1.bf16.msra.mxu0 0
      %5490 = vmatprep.subr.bf16.mxu0 0
      %5491 = vmatpush1.bf16.msra.mxu0 0
      %5492 = vmatprep.subr.bf16.mxu0 0
      %5493 = vmatpush1.bf16.msra.mxu0 0
      %5494 = vmatprep.subr.bf16.mxu0 0
      %5495 = vmatpush1.bf16.msra.mxu0 0
      %5496 = vmatprep.subr.bf16.mxu0 0
      %5497 = vmatpush1.bf16.msra.mxu0 0
      %5498 = vmatprep.mubr.bf16.mxu0 0
      %5499 = vmatmul.mubr.bf16.gmra.mrb[0].mxu0 %v5413
      %v5500 = vpop.f32.mrb[0].mxu0
      %v5501 = vadd.f32 0.0, %v5500
      %v5502 = vpop.f32.mrb[0].mxu0
      %v5503 = vadd.f32 0.0, %v5502
      %v5504 = vpop.f32.mrb[0].mxu0
      %v5505 = vadd.f32 0.0, %v5504
      %v5506 = vpop.f32.mrb[0].mxu0
      %v5507 = vadd.f32 0.0, %v5506
      %5508 = vmatprep.mubr.bf16.mxu0 0
      %5509 = vmatmul.mubr.bf16.gmra.mrb[0].mxu0 %v5416
      %v5510 = vpop.f32.mrb[0].mxu0
      %v5511 = vadd.f32 0.0, %v5510
      %v5512 = vpop.f32.mrb[0].mxu0
      %v5513 = vadd.f32 0.0, %v5512
      %v5514 = vpop.f32.mrb[0].mxu0
      %v5515 = vadd.f32 0.0, %v5514
      %v5516 = vpop.f32.mrb[0].mxu0
      %v5517 = vadd.f32 0.0, %v5516
      %5518 = vmatprep.mubr.bf16.mxu0 0
      %5519 = vmatmul.mubr.bf16.gmra.mrb[0].mxu0 %v5419
      %v5520 = vpop.f32.mrb[0].mxu0
      %v5521 = vadd.f32 0.0, %v5520
      %v5522 = vpop.f32.mrb[0].mxu0
      %v5523 = vadd.f32 0.0, %v5522
      %v5524 = vpop.f32.mrb[0].mxu0
      %v5525 = vadd.f32 0.0, %v5524
      %v5526 = vpop.f32.mrb[0].mxu0
      %v5527 = vadd.f32 0.0, %v5526
      %5528 = vmatprep.mubr.bf16.mxu0 0
      %5529 = vmatmul.mubr.bf16.gmra.mrb[0].mxu0 %v5422
      %v5530 = vpop.f32.mrb[0].mxu0
      %v5531 = vadd.f32 0.0, %v5530
      %v5532 = vpop.f32.mrb[0].mxu0
      %v5533 = vadd.f32 0.0, %v5532
      %v5534 = vpop.f32.mrb[0].mxu0
      %v5535 = vadd.f32 0.0, %v5534
      %v5536 = vpop.f32.mrb[0].mxu0
      %v5537 = vadd.f32 0.0, %v5536
      %5538 = vmatprep.mubr.bf16.mxu0 0
      %5539 = vmatmul.mubr.bf16.gmra.mrb[0].mxu0 %v5425
      %v5540 = vpop.f32.mrb[0].mxu0
      %v5541 = vadd.f32 0.0, %v5540
      %v5542 = vpop.f32.mrb[0].mxu0
      %v5543 = vadd.f32 0.0, %v5542
      %v5544 = vpop.f32.mrb[0].mxu0
      %v5545 = vadd.f32 0.0, %v5544
      %v5546 = vpop.f32.mrb[0].mxu0
      %v5547 = vadd.f32 0.0, %v5546
      %5548 = vmatprep.mubr.bf16.mxu0 0
      %5549 = vmatmul.mubr.bf16.gmra.mrb[0].mxu0 %v5428
      %v5550 = vpop.f32.mrb[0].mxu0
      %v5551 = vadd.f32 0.0, %v5550
      %v5552 = vpop.f32.mrb[0].mxu0
      %v5553 = vadd.f32 0.0, %v5552
      %v5554 = vpop.f32.mrb[0].mxu0
      %v5555 = vadd.f32 0.0, %v5554
      %v5556 = vpop.f32.mrb[0].mxu0
      %v5557 = vadd.f32 0.0, %v5556
      %5558 = vmatprep.mubr.bf16.mxu0 0
      %5559 = vmatmul.mubr.bf16.gmra.mrb[0].mxu0 %v5431
      %v5560 = vpop.f32.mrb[0].mxu0
      %v5561 = vadd.f32 0.0, %v5560
      %v5562 = vpop.f32.mrb[0].mxu0
      %v5563 = vadd.f32 0.0, %v5562
      %v5564 = vpop.f32.mrb[0].mxu0
      %v5565 = vadd.f32 0.0, %v5564
      %v5566 = vpop.f32.mrb[0].mxu0
      %v5567 = vadd.f32 0.0, %v5566
      %5568 = vmatprep.mubr.bf16.mxu0 0
      %5569 = vmatmul.mubr.bf16.gmra.mrb[0].mxu0 %v5434
      %v5570 = vpop.f32.mrb[0].mxu0
      %v5571 = vadd.f32 0.0, %v5570
      %v5572 = vpop.f32.mrb[0].mxu0
      %v5573 = vadd.f32 0.0, %v5572
      %v5574 = vpop.f32.mrb[0].mxu0
      %v5575 = vadd.f32 0.0, %v5574
      %v5576 = vpop.f32.mrb[0].mxu0
      %v5577 = vadd.f32 0.0, %v5576
      %5578 = vmatprep.mubr.bf16.mxu0 0
      %5579 = vmatmul.mubr.bf16.gmra.mrb[0].mxu0 %v5437
      %v5580 = vpop.f32.mrb[0].mxu0
      %v5581 = vadd.f32 0.0, %v5580
      %v5582 = vpop.f32.mrb[0].mxu0
      %v5583 = vadd.f32 0.0, %v5582
      %v5584 = vpop.f32.mrb[0].mxu0
      %v5585 = vadd.f32 0.0, %v5584
      %v5586 = vpop.f32.mrb[0].mxu0
      %v5587 = vadd.f32 0.0, %v5586
      %5588 = vmatprep.mubr.bf16.mxu0 0
      %5589 = vmatmul.mubr.bf16.gmra.mrb[0].mxu0 %v5440
      %v5590 = vpop.f32.mrb[0].mxu0
      %v5591 = vadd.f32 0.0, %v5590
      %v5592 = vpop.f32.mrb[0].mxu0
      %v5593 = vadd.f32 0.0, %v5592
      %v5594 = vpop.f32.mrb[0].mxu0
      %v5595 = vadd.f32 0.0, %v5594
      %v5596 = vpop.f32.mrb[0].mxu0
      %v5597 = vadd.f32 0.0, %v5596
      %5598 = vmatprep.mubr.bf16.mxu0 0
      %5599 = vmatmul.mubr.bf16.gmra.mrb[0].mxu0 %v5443
      %v5600 = vpop.f32.mrb[0].mxu0
      %v5601 = vadd.f32 0.0, %v5600
      %v5602 = vpop.f32.mrb[0].mxu0
      %v5603 = vadd.f32 0.0, %v5602
      %v5604 = vpop.f32.mrb[0].mxu0
      %v5605 = vadd.f32 0.0, %v5604
      %v5606 = vpop.f32.mrb[0].mxu0
      %v5607 = vadd.f32 0.0, %v5606
      %5608 = vmatprep.mubr.bf16.mxu0 0
      %5609 = vmatmul.mubr.bf16.gmra.mrb[0].mxu0 %v5446
      %v5610 = vpop.f32.mrb[0].mxu0
      %v5611 = vadd.f32 0.0, %v5610
      %v5612 = vpop.f32.mrb[0].mxu0
      %v5613 = vadd.f32 0.0, %v5612
      %v5614 = vpop.f32.mrb[0].mxu0
      %v5615 = vadd.f32 0.0, %v5614
      %v5616 = vpop.f32.mrb[0].mxu0
      %v5617 = vadd.f32 0.0, %v5616
      %5618 = vmatprep.mubr.bf16.mxu0 0
      %5619 = vmatmul.mubr.bf16.gmra.mrb[0].mxu0 %v5449
      %v5620 = vpop.f32.mrb[0].mxu0
      %v5621 = vadd.f32 0.0, %v5620
      %v5622 = vpop.f32.mrb[0].mxu0
      %v5623 = vadd.f32 0.0, %v5622
      %v5624 = vpop.f32.mrb[0].mxu0
      %v5625 = vadd.f32 0.0, %v5624
      %v5626 = vpop.f32.mrb[0].mxu0
      %v5627 = vadd.f32 0.0, %v5626
      %5628 = vmatprep.mubr.bf16.mxu0 0
      %5629 = vmatmul.mubr.bf16.gmra.mrb[0].mxu0 %v5452
      %v5630 = vpop.f32.mrb[0].mxu0
      %v5631 = vadd.f32 0.0, %v5630
      %v5632 = vpop.f32.mrb[0].mxu0
      %v5633 = vadd.f32 0.0, %v5632
      %v5634 = vpop.f32.mrb[0].mxu0
      %v5635 = vadd.f32 0.0, %v5634
      %v5636 = vpop.f32.mrb[0].mxu0
      %v5637 = vadd.f32 0.0, %v5636
      %5638 = vmatprep.mubr.bf16.mxu0 0
      %5639 = vmatmul.mubr.bf16.gmra.mrb[0].mxu0 %v5455
      %v5640 = vpop.f32.mrb[0].mxu0
      %v5641 = vadd.f32 0.0, %v5640
      %v5642 = vpop.f32.mrb[0].mxu0
      %v5643 = vadd.f32 0.0, %v5642
      %v5644 = vpop.f32.mrb[0].mxu0
      %v5645 = vadd.f32 0.0, %v5644
      %v5646 = vpop.f32.mrb[0].mxu0
      %v5647 = vadd.f32 0.0, %v5646
      %5648 = vmatprep.mubr.bf16.mxu0 0
      %5649 = vmatmul.mubr.bf16.gmra.mrb[0].mxu0 %v5458
      %v5650 = vpop.f32.mrb[0].mxu0
      %v5651 = vadd.f32 0.0, %v5650
      %v5652 = vpop.f32.mrb[0].mxu0
      %v5653 = vadd.f32 0.0, %v5652
      %v5654 = vpop.f32.mrb[0].mxu0
      %v5655 = vadd.f32 0.0, %v5654
      %v5656 = vpop.f32.mrb[0].mxu0
      %v5657 = vadd.f32 0.0, %v5656
      %5658 = vdwg.mxu0
      %v5659 = vadd.f32 %v4813, %v5501
      %v5660 = vadd.f32 %v4814, %v5503
      %v5661 = vadd.f32 %v4815, %v5505
      %v5662 = vadd.f32 %v4816, %v5507
      %v5663 = vadd.f32 %v4817, %v5511
      %v5664 = vadd.f32 %v4818, %v5513
      %v5665 = vadd.f32 %v4819, %v5515
      %v5666 = vadd.f32 %v4820, %v5517
      %v5667 = vadd.f32 %v4821, %v5521
      %v5668 = vadd.f32 %v4822, %v5523
      %v5669 = vadd.f32 %v4823, %v5525
      %v5670 = vadd.f32 %v4824, %v5527
      %v5671 = vadd.f32 %v4825, %v5531
      %v5672 = vadd.f32 %v4826, %v5533
      %v5673 = vadd.f32 %v4827, %v5535
      %v5674 = vadd.f32 %v4828, %v5537
      %v5675 = vadd.f32 %v4829, %v5541
      %v5676 = vadd.f32 %v4830, %v5543
      %v5677 = vadd.f32 %v4831, %v5545
      %v5678 = vadd.f32 %v4832, %v5547
      %v5679 = vadd.f32 %v4833, %v5551
      %v5680 = vadd.f32 %v4834, %v5553
      %v5681 = vadd.f32 %v4835, %v5555
      %v5682 = vadd.f32 %v4836, %v5557
      %v5683 = vadd.f32 %v4837, %v5561
      %v5684 = vadd.f32 %v4838, %v5563
      %v5685 = vadd.f32 %v4839, %v5565
      %v5686 = vadd.f32 %v4840, %v5567
      %v5687 = vadd.f32 %v4841, %v5571
      %v5688 = vadd.f32 %v4842, %v5573
      %v5689 = vadd.f32 %v4843, %v5575
      %v5690 = vadd.f32 %v4844, %v5577
      %v5691 = vadd.f32 %v4845, %v5581
      %v5692 = vadd.f32 %v4846, %v5583
      %v5693 = vadd.f32 %v4847, %v5585
      %v5694 = vadd.f32 %v4848, %v5587
      %v5695 = vadd.f32 %v4849, %v5591
      %v5696 = vadd.f32 %v4850, %v5593
      %v5697 = vadd.f32 %v4851, %v5595
      %v5698 = vadd.f32 %v4852, %v5597
      %v5699 = vadd.f32 %v4853, %v5601
      %v5700 = vadd.f32 %v4854, %v5603
      %v5701 = vadd.f32 %v4855, %v5605
      %v5702 = vadd.f32 %v4856, %v5607
      %v5703 = vadd.f32 %v4857, %v5611
      %v5704 = vadd.f32 %v4858, %v5613
      %v5705 = vadd.f32 %v4859, %v5615
      %v5706 = vadd.f32 %v4860, %v5617
      %v5707 = vadd.f32 %v4861, %v5621
      %v5708 = vadd.f32 %v4862, %v5623
      %v5709 = vadd.f32 %v4863, %v5625
      %v5710 = vadd.f32 %v4864, %v5627
      %v5711 = vadd.f32 %v4865, %v5631
      %v5712 = vadd.f32 %v4866, %v5633
      %v5713 = vadd.f32 %v4867, %v5635
      %v5714 = vadd.f32 %v4868, %v5637
      %v5715 = vadd.f32 %v4869, %v5641
      %v5716 = vadd.f32 %v4870, %v5643
      %v5717 = vadd.f32 %v4871, %v5645
      %v5718 = vadd.f32 %v4872, %v5647
      %v5719 = vadd.f32 %v4873, %v5651
      %v5720 = vadd.f32 %v4874, %v5653
      %v5721 = vadd.f32 %v4875, %v5655
      %v5722 = vadd.f32 %v4876, %v5657
      %v5723 = vld [vmem:[%s4398] sm:$0xe]
      %v5724 = vld [vmem:[%s4398 + $0xc] sm:$0xe]
      %v5725 = vld [vmem:[%s4398 + $0x18] sm:$0xe]
      %v5726 = vld [vmem:[%s4398 + $0x24] sm:$0xe]
      %v5727 = vld [vmem:[%s4398 + $0x30] sm:$0xe]
      %v5728 = vld [vmem:[%s4398 + $0x3c] sm:$0xe]
      %v5729 = vld [vmem:[%s4398 + $0x48] sm:$0xe]
      %v5730 = vld [vmem:[%s4398 + $0x54] sm:$0xe]
      %v5731 = vld [vmem:[%s4398 + $0x78] sm:$0xe]
      %v5732 = vld [vmem:[%s4398 + $0x84] sm:$0xe]
      %v5733 = vld [vmem:[%s4398 + $0x90] sm:$0xe]
      %v5734 = vld [vmem:[%s4398 + $0x9c] sm:$0xe]
      %v5735 = vld [vmem:[%s4398 + $0xa8] sm:$0xe]
      %v5736 = vld [vmem:[%s4398 + $0xb4] sm:$0xe]
      %v5737 = vld [vmem:[%s4398 + $0xc0] sm:$0xe]
      %v5738 = vld [vmem:[%s4398 + $0xcc] sm:$0xe]
      %v5787 = vrot.slane %v5723, 5
      %v5788 = vrot.slane %v5787, 4
      %v5789 = vrot.slane %v4878, 5
      %v5790 = vsel %vm1957, %v5788, %v5789
      %v5791 = vrot.slane %v5789, 4
      %v5792 = vrot.slane %v4879, 5
      %v5793 = vsel %vm1957, %v5791, %v5792
      %v5794 = vrot.slane %v5724, 5
      %v5795 = vrot.slane %v5794, 4
      %v5796 = vrot.slane %v4881, 5
      %v5797 = vsel %vm1957, %v5795, %v5796
      %v5798 = vrot.slane %v5796, 4
      %v5799 = vrot.slane %v4882, 5
      %v5800 = vsel %vm1957, %v5798, %v5799
      %v5801 = vrot.slane %v5725, 5
      %v5802 = vrot.slane %v5801, 4
      %v5803 = vrot.slane %v4884, 5
      %v5804 = vsel %vm1957, %v5802, %v5803
      %v5805 = vrot.slane %v5803, 4
      %v5806 = vrot.slane %v4885, 5
      %v5807 = vsel %vm1957, %v5805, %v5806
      %v5808 = vrot.slane %v5726, 5
      %v5809 = vrot.slane %v5808, 4
      %v5810 = vrot.slane %v4887, 5
      %v5811 = vsel %vm1957, %v5809, %v5810
      %v5812 = vrot.slane %v5810, 4
      %v5813 = vrot.slane %v4888, 5
      %v5814 = vsel %vm1957, %v5812, %v5813
      %v5815 = vrot.slane %v5727, 5
      %v5816 = vrot.slane %v5815, 4
      %v5817 = vrot.slane %v4890, 5
      %v5818 = vsel %vm1957, %v5816, %v5817
      %v5819 = vrot.slane %v5817, 4
      %v5820 = vrot.slane %v4891, 5
      %v5821 = vsel %vm1957, %v5819, %v5820
      %v5822 = vrot.slane %v5728, 5
      %v5823 = vrot.slane %v5822, 4
      %v5824 = vrot.slane %v4893, 5
      %v5825 = vsel %vm1957, %v5823, %v5824
      %v5826 = vrot.slane %v5824, 4
      %v5827 = vrot.slane %v4894, 5
      %v5828 = vsel %vm1957, %v5826, %v5827
      %v5829 = vrot.slane %v5729, 5
      %v5830 = vrot.slane %v5829, 4
      %v5831 = vrot.slane %v4896, 5
      %v5832 = vsel %vm1957, %v5830, %v5831
      %v5833 = vrot.slane %v5831, 4
      %v5834 = vrot.slane %v4897, 5
      %v5835 = vsel %vm1957, %v5833, %v5834
      %v5836 = vrot.slane %v5730, 5
      %v5837 = vrot.slane %v5836, 4
      %v5838 = vrot.slane %v4899, 5
      %v5839 = vsel %vm1957, %v5837, %v5838
      %v5840 = vrot.slane %v5838, 4
      %v5841 = vrot.slane %v4900, 5
      %v5842 = vsel %vm1957, %v5840, %v5841
      %v5843 = vrot.slane %v5731, 5
      %v5844 = vrot.slane %v5843, 4
      %v5845 = vrot.slane %v4902, 5
      %v5846 = vsel %vm1957, %v5844, %v5845
      %v5847 = vrot.slane %v5845, 4
      %v5848 = vrot.slane %v4903, 5
      %v5849 = vsel %vm1957, %v5847, %v5848
      %v5850 = vrot.slane %v5732, 5
      %v5851 = vrot.slane %v5850, 4
      %v5852 = vrot.slane %v4905, 5
      %v5853 = vsel %vm1957, %v5851, %v5852
      %v5854 = vrot.slane %v5852, 4
      %v5855 = vrot.slane %v4906, 5
      %v5856 = vsel %vm1957, %v5854, %v5855
      %v5857 = vrot.slane %v5733, 5
      %v5858 = vrot.slane %v5857, 4
      %v5859 = vrot.slane %v4908, 5
      %v5860 = vsel %vm1957, %v5858, %v5859
      %v5861 = vrot.slane %v5859, 4
      %v5862 = vrot.slane %v4909, 5
      %v5863 = vsel %vm1957, %v5861, %v5862
      %v5864 = vrot.slane %v5734, 5
      %v5865 = vrot.slane %v5864, 4
      %v5866 = vrot.slane %v4911, 5
      %v5867 = vsel %vm1957, %v5865, %v5866
      %v5868 = vrot.slane %v5866, 4
      %v5869 = vrot.slane %v4912, 5
      %v5870 = vsel %vm1957, %v5868, %v5869
      %v5871 = vrot.slane %v5735, 5
      %v5872 = vrot.slane %v5871, 4
      %v5873 = vrot.slane %v4914, 5
      %v5874 = vsel %vm1957, %v5872, %v5873
      %v5875 = vrot.slane %v5873, 4
      %v5876 = vrot.slane %v4915, 5
      %v5877 = vsel %vm1957, %v5875, %v5876
      %v5878 = vrot.slane %v5736, 5
      %v5879 = vrot.slane %v5878, 4
      %v5880 = vrot.slane %v4917, 5
      %v5881 = vsel %vm1957, %v5879, %v5880
      %v5882 = vrot.slane %v5880, 4
      %v5883 = vrot.slane %v4918, 5
      %v5884 = vsel %vm1957, %v5882, %v5883
      %v5885 = vrot.slane %v5737, 5
      %v5886 = vrot.slane %v5885, 4
      %v5887 = vrot.slane %v4920, 5
      %v5888 = vsel %vm1957, %v5886, %v5887
      %v5889 = vrot.slane %v5887, 4
      %v5890 = vrot.slane %v4921, 5
      %v5891 = vsel %vm1957, %v5889, %v5890
      %v5892 = vrot.slane %v5738, 5
      %v5893 = vrot.slane %v5892, 4
      %v5894 = vrot.slane %v4923, 5
      %v5895 = vsel %vm1957, %v5893, %v5894
      %v5896 = vrot.slane %v5894, 4
      %v5897 = vrot.slane %v4924, 5
      %v5898 = vsel %vm1957, %v5896, %v5897
      %s5899 = scalar_lea.vmem %s1, 576
      %v5900 = vld [vmem:[%s5899] sm:$0xff]
      %v5901 = vld [vmem:[%s5899 + $0x8] sm:$0xff]
      %v5902 = vld [vmem:[%s5899 + $0x10] sm:$0xff]
      %v5903 = vld [vmem:[%s5899 + $0x18] sm:$0xff]
      %v5904 = vld [vmem:[%s5899 + $0x20] sm:$0xff]
      %v5905 = vld [vmem:[%s5899 + $0x28] sm:$0xff]
      %v5906 = vld [vmem:[%s5899 + $0x30] sm:$0xff]
      %v5907 = vld [vmem:[%s5899 + $0x38] sm:$0xff]
      %v5908 = vld [vmem:[%s5899 + $0x40] sm:$0xff]
      %v5909 = vunpack.c.l.b16 %v5790
      %v5910 = vunpack.c.l.b16 %v5793
      %v5911 = vunpack.c.l.b16 %v5797
      %v5912 = vunpack.c.l.b16 %v5800
      %v5913 = vunpack.c.l.b16 %v5804
      %v5914 = vunpack.c.l.b16 %v5807
      %v5915 = vunpack.c.l.b16 %v5811
      %v5916 = vunpack.c.l.b16 %v5814
      %v5917 = vunpack.c.l.b16 %v5818
      %v5918 = vunpack.c.l.b16 %v5821
      %v5919 = vunpack.c.l.b16 %v5825
      %v5920 = vunpack.c.l.b16 %v5828
      %v5921 = vunpack.c.l.b16 %v5832
      %v5922 = vunpack.c.l.b16 %v5835
      %v5923 = vunpack.c.l.b16 %v5839
      %v5924 = vunpack.c.l.b16 %v5842
      %v5925 = vunpack.c.l.b16 %v5846
      %v5926 = vunpack.c.l.b16 %v5849
      %v5927 = vunpack.c.l.b16 %v5853
      %v5928 = vunpack.c.l.b16 %v5856
      %v5929 = vunpack.c.l.b16 %v5860
      %v5930 = vunpack.c.l.b16 %v5863
      %v5931 = vunpack.c.l.b16 %v5867
      %v5932 = vunpack.c.l.b16 %v5870
      %v5933 = vunpack.c.l.b16 %v5874
      %v5934 = vunpack.c.l.b16 %v5877
      %v5935 = vunpack.c.l.b16 %v5881
      %v5936 = vunpack.c.l.b16 %v5884
      %v5937 = vunpack.c.l.b16 %v5888
      %v5938 = vunpack.c.l.b16 %v5891
      %v5939 = vunpack.c.l.b16 %v5895
      %v5940 = vunpack.c.l.b16 %v5898
      %v5941 = vpack.c.b16 %v5910, %v5909
      %v5942 = vpack.c.b16 %v5912, %v5911
      %v5943 = vpack.c.b16 %v5914, %v5913
      %v5944 = vpack.c.b16 %v5916, %v5915
      %v5945 = vpack.c.b16 %v5918, %v5917
      %v5946 = vpack.c.b16 %v5920, %v5919
      %v5947 = vpack.c.b16 %v5922, %v5921
      %v5948 = vpack.c.b16 %v5924, %v5923
      %v5949 = vpack.c.b16 %v5926, %v5925
      %v5950 = vpack.c.b16 %v5928, %v5927
      %v5951 = vpack.c.b16 %v5930, %v5929
      %v5952 = vpack.c.b16 %v5932, %v5931
      %v5953 = vpack.c.b16 %v5934, %v5933
      %v5954 = vpack.c.b16 %v5936, %v5935
      %v5955 = vpack.c.b16 %v5938, %v5937
      %v5956 = vpack.c.b16 %v5940, %v5939
      %v5966 = vunpack.c.l.b16 %v5900
      %v5967 = vunpack.c.h.b16 %v5900
      %v5968 = vunpack.c.l.b16 %v5901
      %v5969 = vunpack.c.h.b16 %v5901
      %v5970 = vunpack.c.l.b16 %v5902
      %v5971 = vunpack.c.h.b16 %v5902
      %v5972 = vunpack.c.l.b16 %v5903
      %v5973 = vunpack.c.h.b16 %v5903
      %v5974 = vunpack.c.l.b16 %v5904
      %v5975 = vunpack.c.h.b16 %v5904
      %v5976 = vunpack.c.l.b16 %v5905
      %v5977 = vunpack.c.h.b16 %v5905
      %v5978 = vunpack.c.l.b16 %v5906
      %v5979 = vunpack.c.h.b16 %v5906
      %v5980 = vunpack.c.l.b16 %v5907
      %v5981 = vunpack.c.h.b16 %v5907
      %v5982 = vunpack.c.l.b16 %v5908
      %v5983 = vunpack.c.h.b16 %v5908
      %v5984 = vpack.c.b16 %v5968, %v5966
      %v5985 = vpack.c.b16 %v5969, %v5967
      %v5986 = vpack.c.b16 %v5972, %v5970
      %v5987 = vpack.c.b16 %v5973, %v5971
      %v5988 = vpack.c.b16 %v5976, %v5974
      %v5989 = vpack.c.b16 %v5977, %v5975
      %v5990 = vpack.c.b16 %v5980, %v5978
      %v5991 = vpack.c.b16 %v5981, %v5979
      %v5992 = vpack.c.b16 %v5982, %v5982
      %v5993 = vpack.c.b16 %v5983, %v5983
      %v6003 = vsel %vm1286, %v5941, 0
      %v6006 = vsel %vm1286, %v5942, 0
      %v6009 = vsel %vm1286, %v5943, 0
      %v6012 = vsel %vm1286, %v5944, 0
      %v6015 = vsel %vm1286, %v5945, 0
      %v6018 = vsel %vm1286, %v5946, 0
      %v6021 = vsel %vm1286, %v5947, 0
      %v6024 = vsel %vm1286, %v5948, 0
      %v6027 = vsel %vm1286, %v5949, 0
      %v6030 = vsel %vm1286, %v5950, 0
      %v6033 = vsel %vm1286, %v5951, 0
      %v6036 = vsel %vm1286, %v5952, 0
      %v6039 = vsel %vm1286, %v5953, 0
      %v6042 = vsel %vm1286, %v5954, 0
      %v6045 = vsel %vm1286, %v5955, 0
      %v6048 = vsel %vm1286, %v5956, 0
      %v6051 = vsel %vm1335, %v5992, 0
      %v6054 = vsel %vm1335, %v5993, 0
      %6056 = vmatprep.subr.bf16.mxu0 %v5985
      %6057 = vmatpush1.bf16.msra.mxu0 %v5984
      %6058 = vmatprep.subr.bf16.mxu0 %v5987
      %6059 = vmatpush1.bf16.msra.mxu0 %v5986
      %6060 = vmatprep.subr.bf16.mxu0 %v5989
      %6061 = vmatpush1.bf16.msra.mxu0 %v5988
      %6062 = vmatprep.subr.bf16.mxu0 %v5991
      %6063 = vmatpush1.bf16.msra.mxu0 %v5990
      %6064 = vmatprep.subr.bf16.mxu0 %v6054
      %6065 = vmatpush1.bf16.msra.mxu0 %v6051
      %6066 = vmatprep.subr.bf16.mxu0 0
      %6067 = vmatpush1.bf16.msra.mxu0 0
      %6068 = vmatprep.subr.bf16.mxu0 0
      %6069 = vmatpush1.bf16.msra.mxu0 0
      %6070 = vmatprep.subr.bf16.mxu0 0
      %6071 = vmatpush1.bf16.msra.mxu0 0
      %6072 = vmatprep.subr.bf16.mxu0 0
      %6073 = vmatpush1.bf16.msra.mxu0 0
      %6074 = vmatprep.subr.bf16.mxu0 0
      %6075 = vmatpush1.bf16.msra.mxu0 0
      %6076 = vmatprep.subr.bf16.mxu0 0
      %6077 = vmatpush1.bf16.msra.mxu0 0
      %6078 = vmatprep.subr.bf16.mxu0 0
      %6079 = vmatpush1.bf16.msra.mxu0 0
      %6080 = vmatprep.subr.bf16.mxu0 0
      %6081 = vmatpush1.bf16.msra.mxu0 0
      %6082 = vmatprep.subr.bf16.mxu0 0
      %6083 = vmatpush1.bf16.msra.mxu0 0
      %6084 = vmatprep.subr.bf16.mxu0 0
      %6085 = vmatpush1.bf16.msra.mxu0 0
      %6086 = vmatprep.subr.bf16.mxu0 0
      %6087 = vmatpush1.bf16.msra.mxu0 0
      %6088 = vmatprep.mubr.bf16.mxu0 0
      %6089 = vmatmul.mubr.bf16.gmra.mrb[0].mxu0 %v6003
      %v6090 = vpop.f32.mrb[0].mxu0
      %v6091 = vadd.f32 0.0, %v6090
      %v6092 = vpop.f32.mrb[0].mxu0
      %v6093 = vadd.f32 0.0, %v6092
      %v6094 = vpop.f32.mrb[0].mxu0
      %v6095 = vadd.f32 0.0, %v6094
      %v6096 = vpop.f32.mrb[0].mxu0
      %v6097 = vadd.f32 0.0, %v6096
      %6098 = vmatprep.mubr.bf16.mxu0 0
      %6099 = vmatmul.mubr.bf16.gmra.mrb[0].mxu0 %v6006
      %v6100 = vpop.f32.mrb[0].mxu0
      %v6101 = vadd.f32 0.0, %v6100
      %v6102 = vpop.f32.mrb[0].mxu0
      %v6103 = vadd.f32 0.0, %v6102
      %v6104 = vpop.f32.mrb[0].mxu0
      %v6105 = vadd.f32 0.0, %v6104
      %v6106 = vpop.f32.mrb[0].mxu0
      %v6107 = vadd.f32 0.0, %v6106
      %6108 = vmatprep.mubr.bf16.mxu0 0
      %6109 = vmatmul.mubr.bf16.gmra.mrb[0].mxu0 %v6009
      %v6110 = vpop.f32.mrb[0].mxu0
      %v6111 = vadd.f32 0.0, %v6110
      %v6112 = vpop.f32.mrb[0].mxu0
      %v6113 = vadd.f32 0.0, %v6112
      %v6114 = vpop.f32.mrb[0].mxu0
      %v6115 = vadd.f32 0.0, %v6114
      %v6116 = vpop.f32.mrb[0].mxu0
      %v6117 = vadd.f32 0.0, %v6116
      %6118 = vmatprep.mubr.bf16.mxu0 0
      %6119 = vmatmul.mubr.bf16.gmra.mrb[0].mxu0 %v6012
      %v6120 = vpop.f32.mrb[0].mxu0
      %v6121 = vadd.f32 0.0, %v6120
      %v6122 = vpop.f32.mrb[0].mxu0
      %v6123 = vadd.f32 0.0, %v6122
      %v6124 = vpop.f32.mrb[0].mxu0
      %v6125 = vadd.f32 0.0, %v6124
      %v6126 = vpop.f32.mrb[0].mxu0
      %v6127 = vadd.f32 0.0, %v6126
      %6128 = vmatprep.mubr.bf16.mxu0 0
      %6129 = vmatmul.mubr.bf16.gmra.mrb[0].mxu0 %v6015
      %v6130 = vpop.f32.mrb[0].mxu0
      %v6131 = vadd.f32 0.0, %v6130
      %v6132 = vpop.f32.mrb[0].mxu0
      %v6133 = vadd.f32 0.0, %v6132
      %v6134 = vpop.f32.mrb[0].mxu0
      %v6135 = vadd.f32 0.0, %v6134
      %v6136 = vpop.f32.mrb[0].mxu0
      %v6137 = vadd.f32 0.0, %v6136
      %6138 = vmatprep.mubr.bf16.mxu0 0
      %6139 = vmatmul.mubr.bf16.gmra.mrb[0].mxu0 %v6018
      %v6140 = vpop.f32.mrb[0].mxu0
      %v6141 = vadd.f32 0.0, %v6140
      %v6142 = vpop.f32.mrb[0].mxu0
      %v6143 = vadd.f32 0.0, %v6142
      %v6144 = vpop.f32.mrb[0].mxu0
      %v6145 = vadd.f32 0.0, %v6144
      %v6146 = vpop.f32.mrb[0].mxu0
      %v6147 = vadd.f32 0.0, %v6146
      %6148 = vmatprep.mubr.bf16.mxu0 0
      %6149 = vmatmul.mubr.bf16.gmra.mrb[0].mxu0 %v6021
      %v6150 = vpop.f32.mrb[0].mxu0
      %v6151 = vadd.f32 0.0, %v6150
      %v6152 = vpop.f32.mrb[0].mxu0
      %v6153 = vadd.f32 0.0, %v6152
      %v6154 = vpop.f32.mrb[0].mxu0
      %v6155 = vadd.f32 0.0, %v6154
      %v6156 = vpop.f32.mrb[0].mxu0
      %v6157 = vadd.f32 0.0, %v6156
      %6158 = vmatprep.mubr.bf16.mxu0 0
      %6159 = vmatmul.mubr.bf16.gmra.mrb[0].mxu0 %v6024
      %v6160 = vpop.f32.mrb[0].mxu0
      %v6161 = vadd.f32 0.0, %v6160
      %v6162 = vpop.f32.mrb[0].mxu0
      %v6163 = vadd.f32 0.0, %v6162
      %v6164 = vpop.f32.mrb[0].mxu0
      %v6165 = vadd.f32 0.0, %v6164
      %v6166 = vpop.f32.mrb[0].mxu0
      %v6167 = vadd.f32 0.0, %v6166
      %6168 = vmatprep.mubr.bf16.mxu0 0
      %6169 = vmatmul.mubr.bf16.gmra.mrb[0].mxu0 %v6027
      %v6170 = vpop.f32.mrb[0].mxu0
      %v6171 = vadd.f32 0.0, %v6170
      %v6172 = vpop.f32.mrb[0].mxu0
      %v6173 = vadd.f32 0.0, %v6172
      %v6174 = vpop.f32.mrb[0].mxu0
      %v6175 = vadd.f32 0.0, %v6174
      %v6176 = vpop.f32.mrb[0].mxu0
      %v6177 = vadd.f32 0.0, %v6176
      %6178 = vmatprep.mubr.bf16.mxu0 0
      %6179 = vmatmul.mubr.bf16.gmra.mrb[0].mxu0 %v6030
      %v6180 = vpop.f32.mrb[0].mxu0
      %v6181 = vadd.f32 0.0, %v6180
      %v6182 = vpop.f32.mrb[0].mxu0
      %v6183 = vadd.f32 0.0, %v6182
      %v6184 = vpop.f32.mrb[0].mxu0
      %v6185 = vadd.f32 0.0, %v6184
      %v6186 = vpop.f32.mrb[0].mxu0
      %v6187 = vadd.f32 0.0, %v6186
      %6188 = vmatprep.mubr.bf16.mxu0 0
      %6189 = vmatmul.mubr.bf16.gmra.mrb[0].mxu0 %v6033
      %v6190 = vpop.f32.mrb[0].mxu0
      %v6191 = vadd.f32 0.0, %v6190
      %v6192 = vpop.f32.mrb[0].mxu0
      %v6193 = vadd.f32 0.0, %v6192
      %v6194 = vpop.f32.mrb[0].mxu0
      %v6195 = vadd.f32 0.0, %v6194
      %v6196 = vpop.f32.mrb[0].mxu0
      %v6197 = vadd.f32 0.0, %v6196
      %6198 = vmatprep.mubr.bf16.mxu0 0
      %6199 = vmatmul.mubr.bf16.gmra.mrb[0].mxu0 %v6036
      %v6200 = vpop.f32.mrb[0].mxu0
      %v6201 = vadd.f32 0.0, %v6200
      %v6202 = vpop.f32.mrb[0].mxu0
      %v6203 = vadd.f32 0.0, %v6202
      %v6204 = vpop.f32.mrb[0].mxu0
      %v6205 = vadd.f32 0.0, %v6204
      %v6206 = vpop.f32.mrb[0].mxu0
      %v6207 = vadd.f32 0.0, %v6206
      %6208 = vmatprep.mubr.bf16.mxu0 0
      %6209 = vmatmul.mubr.bf16.gmra.mrb[0].mxu0 %v6039
      %v6210 = vpop.f32.mrb[0].mxu0
      %v6211 = vadd.f32 0.0, %v6210
      %v6212 = vpop.f32.mrb[0].mxu0
      %v6213 = vadd.f32 0.0, %v6212
      %v6214 = vpop.f32.mrb[0].mxu0
      %v6215 = vadd.f32 0.0, %v6214
      %v6216 = vpop.f32.mrb[0].mxu0
      %v6217 = vadd.f32 0.0, %v6216
      %6218 = vmatprep.mubr.bf16.mxu0 0
      %6219 = vmatmul.mubr.bf16.gmra.mrb[0].mxu0 %v6042
      %v6220 = vpop.f32.mrb[0].mxu0
      %v6221 = vadd.f32 0.0, %v6220
      %v6222 = vpop.f32.mrb[0].mxu0
      %v6223 = vadd.f32 0.0, %v6222
      %v6224 = vpop.f32.mrb[0].mxu0
      %v6225 = vadd.f32 0.0, %v6224
      %v6226 = vpop.f32.mrb[0].mxu0
      %v6227 = vadd.f32 0.0, %v6226
      %6228 = vmatprep.mubr.bf16.mxu0 0
      %6229 = vmatmul.mubr.bf16.gmra.mrb[0].mxu0 %v6045
      %v6230 = vpop.f32.mrb[0].mxu0
      %v6231 = vadd.f32 0.0, %v6230
      %v6232 = vpop.f32.mrb[0].mxu0
      %v6233 = vadd.f32 0.0, %v6232
      %v6234 = vpop.f32.mrb[0].mxu0
      %v6235 = vadd.f32 0.0, %v6234
      %v6236 = vpop.f32.mrb[0].mxu0
      %v6237 = vadd.f32 0.0, %v6236
      %6238 = vmatprep.mubr.bf16.mxu0 0
      %6239 = vmatmul.mubr.bf16.gmra.mrb[0].mxu0 %v6048
      %v6240 = vpop.f32.mrb[0].mxu0
      %v6241 = vadd.f32 0.0, %v6240
      %v6242 = vpop.f32.mrb[0].mxu0
      %v6243 = vadd.f32 0.0, %v6242
      %v6244 = vpop.f32.mrb[0].mxu0
      %v6245 = vadd.f32 0.0, %v6244
      %v6246 = vpop.f32.mrb[0].mxu0
      %v6247 = vadd.f32 0.0, %v6246
      %6248 = vdwg.mxu0
      %v6249 = vadd.f32 %v5659, %v6091
      %v6250 = vadd.f32 %v5660, %v6093
      %v6251 = vadd.f32 %v5661, %v6095
      %v6252 = vadd.f32 %v5662, %v6097
      %v6253 = vadd.f32 %v5663, %v6101
      %v6254 = vadd.f32 %v5664, %v6103
      %v6255 = vadd.f32 %v5665, %v6105
      %v6256 = vadd.f32 %v5666, %v6107
      %v6257 = vadd.f32 %v5667, %v6111
      %v6258 = vadd.f32 %v5668, %v6113
      %v6259 = vadd.f32 %v5669, %v6115
      %v6260 = vadd.f32 %v5670, %v6117
      %v6261 = vadd.f32 %v5671, %v6121
      %v6262 = vadd.f32 %v5672, %v6123
      %v6263 = vadd.f32 %v5673, %v6125
      %v6264 = vadd.f32 %v5674, %v6127
      %v6265 = vadd.f32 %v5675, %v6131
      %v6266 = vadd.f32 %v5676, %v6133
      %v6267 = vadd.f32 %v5677, %v6135
      %v6268 = vadd.f32 %v5678, %v6137
      %v6269 = vadd.f32 %v5679, %v6141
      %v6270 = vadd.f32 %v5680, %v6143
      %v6271 = vadd.f32 %v5681, %v6145
      %v6272 = vadd.f32 %v5682, %v6147
      %v6273 = vadd.f32 %v5683, %v6151
      %v6274 = vadd.f32 %v5684, %v6153
      %v6275 = vadd.f32 %v5685, %v6155
      %v6276 = vadd.f32 %v5686, %v6157
      %v6277 = vadd.f32 %v5687, %v6161
      %v6278 = vadd.f32 %v5688, %v6163
      %v6279 = vadd.f32 %v5689, %v6165
      %v6280 = vadd.f32 %v5690, %v6167
      %v6281 = vadd.f32 %v5691, %v6171
      %v6282 = vadd.f32 %v5692, %v6173
      %v6283 = vadd.f32 %v5693, %v6175
      %v6284 = vadd.f32 %v5694, %v6177
      %v6285 = vadd.f32 %v5695, %v6181
      %v6286 = vadd.f32 %v5696, %v6183
      %v6287 = vadd.f32 %v5697, %v6185
      %v6288 = vadd.f32 %v5698, %v6187
      %v6289 = vadd.f32 %v5699, %v6191
      %v6290 = vadd.f32 %v5700, %v6193
      %v6291 = vadd.f32 %v5701, %v6195
      %v6292 = vadd.f32 %v5702, %v6197
      %v6293 = vadd.f32 %v5703, %v6201
      %v6294 = vadd.f32 %v5704, %v6203
      %v6295 = vadd.f32 %v5705, %v6205
      %v6296 = vadd.f32 %v5706, %v6207
      %v6297 = vadd.f32 %v5707, %v6211
      %v6298 = vadd.f32 %v5708, %v6213
      %v6299 = vadd.f32 %v5709, %v6215
      %v6300 = vadd.f32 %v5710, %v6217
      %v6301 = vadd.f32 %v5711, %v6221
      %v6302 = vadd.f32 %v5712, %v6223
      %v6303 = vadd.f32 %v5713, %v6225
      %v6304 = vadd.f32 %v5714, %v6227
      %v6305 = vadd.f32 %v5715, %v6231
      %v6306 = vadd.f32 %v5716, %v6233
      %v6307 = vadd.f32 %v5717, %v6235
      %v6308 = vadd.f32 %v5718, %v6237
      %v6309 = vadd.f32 %v5719, %v6241
      %v6310 = vadd.f32 %v5720, %v6243
      %v6311 = vadd.f32 %v5721, %v6245
      %v6312 = vadd.f32 %v5722, %v6247
      %v6313 = vld [vmem:[%s2] sm:$0x3]
      %v6315 = vlaneseq
      %v6316 = vshrl.u32 %v6315, 7
      %v6317 = vsub.s32 0, %v6316
      %v6318 = vrot.slane %v6313, %v6317
      %v6319 = vlaneseq
      %v6320 = vshrl.u32 %v6319, 7
      %v6321 = vsub.s32 1, %v6320
      %v6322 = vrot.slane %v6313, %v6321
      %v6325 = vmul.f32 %v6249, %v6318
      %v6326 = vmul.f32 %v6250, %v6322
      %v6327 = vmul.f32 %v6251, %v6318
      %v6328 = vmul.f32 %v6252, %v6322
      %v6329 = vmul.f32 %v6253, %v6318
      %v6330 = vmul.f32 %v6254, %v6322
      %v6331 = vmul.f32 %v6255, %v6318
      %v6332 = vmul.f32 %v6256, %v6322
      %v6333 = vmul.f32 %v6257, %v6318
      %v6334 = vmul.f32 %v6258, %v6322
      %v6335 = vmul.f32 %v6259, %v6318
      %v6336 = vmul.f32 %v6260, %v6322
      %v6337 = vmul.f32 %v6261, %v6318
      %v6338 = vmul.f32 %v6262, %v6322
      %v6339 = vmul.f32 %v6263, %v6318
      %v6340 = vmul.f32 %v6264, %v6322
      %v6341 = vmul.f32 %v6265, %v6318
      %v6342 = vmul.f32 %v6266, %v6322
      %v6343 = vmul.f32 %v6267, %v6318
      %v6344 = vmul.f32 %v6268, %v6322
      %v6345 = vmul.f32 %v6269, %v6318
      %v6346 = vmul.f32 %v6270, %v6322
      %v6347 = vmul.f32 %v6271, %v6318
      %v6348 = vmul.f32 %v6272, %v6322
      %v6349 = vmul.f32 %v6273, %v6318
      %v6350 = vmul.f32 %v6274, %v6322
      %v6351 = vmul.f32 %v6275, %v6318
      %v6352 = vmul.f32 %v6276, %v6322
      %v6353 = vmul.f32 %v6277, %v6318
      %v6354 = vmul.f32 %v6278, %v6322
      %v6355 = vmul.f32 %v6279, %v6318
      %v6356 = vmul.f32 %v6280, %v6322
      %v6357 = vmul.f32 %v6281, %v6318
      %v6358 = vmul.f32 %v6282, %v6322
      %v6359 = vmul.f32 %v6283, %v6318
      %v6360 = vmul.f32 %v6284, %v6322
      %v6361 = vmul.f32 %v6285, %v6318
      %v6362 = vmul.f32 %v6286, %v6322
      %v6363 = vmul.f32 %v6287, %v6318
      %v6364 = vmul.f32 %v6288, %v6322
      %v6365 = vmul.f32 %v6289, %v6318
      %v6366 = vmul.f32 %v6290, %v6322
      %v6367 = vmul.f32 %v6291, %v6318
      %v6368 = vmul.f32 %v6292, %v6322
      %v6369 = vmul.f32 %v6293, %v6318
      %v6370 = vmul.f32 %v6294, %v6322
      %v6371 = vmul.f32 %v6295, %v6318
      %v6372 = vmul.f32 %v6296, %v6322
      %v6373 = vmul.f32 %v6297, %v6318
      %v6374 = vmul.f32 %v6298, %v6322
      %v6375 = vmul.f32 %v6299, %v6318
      %v6376 = vmul.f32 %v6300, %v6322
      %v6377 = vmul.f32 %v6301, %v6318
      %v6378 = vmul.f32 %v6302, %v6322
      %v6379 = vmul.f32 %v6303, %v6318
      %v6380 = vmul.f32 %v6304, %v6322
      %v6381 = vmul.f32 %v6305, %v6318
      %v6382 = vmul.f32 %v6306, %v6322
      %v6383 = vmul.f32 %v6307, %v6318
      %v6384 = vmul.f32 %v6308, %v6322
      %v6385 = vmul.f32 %v6309, %v6318
      %v6386 = vmul.f32 %v6310, %v6322
      %v6387 = vmul.f32 %v6311, %v6318
      %v6388 = vmul.f32 %v6312, %v6322
      %v6389 = vld [vmem:[%s3] sm:$0x3]
      %v6391 = vlaneseq
      %v6392 = vshrl.u32 %v6391, 7
      %v6393 = vsub.s32 0, %v6392
      %v6394 = vrot.slane %v6389, %v6393
      %v6395 = vlaneseq
      %v6396 = vshrl.u32 %v6395, 7
      %v6397 = vsub.s32 1, %v6396
      %v6398 = vrot.slane %v6389, %v6397
      %v6401 = vadd.f32 %v6325, %v6394
      %v6402 = vadd.f32 %v6326, %v6398
      %v6403 = vadd.f32 %v6327, %v6394
      %v6404 = vadd.f32 %v6328, %v6398
      %v6405 = vadd.f32 %v6329, %v6394
      %v6406 = vadd.f32 %v6330, %v6398
      %v6407 = vadd.f32 %v6331, %v6394
      %v6408 = vadd.f32 %v6332, %v6398
      %v6409 = vadd.f32 %v6333, %v6394
      %v6410 = vadd.f32 %v6334, %v6398
      %v6411 = vadd.f32 %v6335, %v6394
      %v6412 = vadd.f32 %v6336, %v6398
      %v6413 = vadd.f32 %v6337, %v6394
      %v6414 = vadd.f32 %v6338, %v6398
      %v6415 = vadd.f32 %v6339, %v6394
      %v6416 = vadd.f32 %v6340, %v6398
      %v6417 = vadd.f32 %v6341, %v6394
      %v6418 = vadd.f32 %v6342, %v6398
      %v6419 = vadd.f32 %v6343, %v6394
      %v6420 = vadd.f32 %v6344, %v6398
      %v6421 = vadd.f32 %v6345, %v6394
      %v6422 = vadd.f32 %v6346, %v6398
      %v6423 = vadd.f32 %v6347, %v6394
      %v6424 = vadd.f32 %v6348, %v6398
      %v6425 = vadd.f32 %v6349, %v6394
      %v6426 = vadd.f32 %v6350, %v6398
      %v6427 = vadd.f32 %v6351, %v6394
      %v6428 = vadd.f32 %v6352, %v6398
      %v6429 = vadd.f32 %v6353, %v6394
      %v6430 = vadd.f32 %v6354, %v6398
      %v6431 = vadd.f32 %v6355, %v6394
      %v6432 = vadd.f32 %v6356, %v6398
      %v6433 = vadd.f32 %v6357, %v6394
      %v6434 = vadd.f32 %v6358, %v6398
      %v6435 = vadd.f32 %v6359, %v6394
      %v6436 = vadd.f32 %v6360, %v6398
      %v6437 = vadd.f32 %v6361, %v6394
      %v6438 = vadd.f32 %v6362, %v6398
      %v6439 = vadd.f32 %v6363, %v6394
      %v6440 = vadd.f32 %v6364, %v6398
      %v6441 = vadd.f32 %v6365, %v6394
      %v6442 = vadd.f32 %v6366, %v6398
      %v6443 = vadd.f32 %v6367, %v6394
      %v6444 = vadd.f32 %v6368, %v6398
      %v6445 = vadd.f32 %v6369, %v6394
      %v6446 = vadd.f32 %v6370, %v6398
      %v6447 = vadd.f32 %v6371, %v6394
      %v6448 = vadd.f32 %v6372, %v6398
      %v6449 = vadd.f32 %v6373, %v6394
      %v6450 = vadd.f32 %v6374, %v6398
      %v6451 = vadd.f32 %v6375, %v6394
      %v6452 = vadd.f32 %v6376, %v6398
      %v6453 = vadd.f32 %v6377, %v6394
      %v6454 = vadd.f32 %v6378, %v6398
      %v6455 = vadd.f32 %v6379, %v6394
      %v6456 = vadd.f32 %v6380, %v6398
      %v6457 = vadd.f32 %v6381, %v6394
      %v6458 = vadd.f32 %v6382, %v6398
      %v6459 = vadd.f32 %v6383, %v6394
      %v6460 = vadd.f32 %v6384, %v6398
      %v6461 = vadd.f32 %v6385, %v6394
      %v6462 = vadd.f32 %v6386, %v6398
      %v6463 = vadd.f32 %v6387, %v6394
      %v6464 = vadd.f32 %v6388, %v6398
      %v6465 = vmax.f32 %v6401, 0.0
      %v6466 = vmax.f32 %v6402, 0.0
      %v6467 = vmax.f32 %v6403, 0.0
      %v6468 = vmax.f32 %v6404, 0.0
      %v6469 = vmax.f32 %v6405, 0.0
      %v6470 = vmax.f32 %v6406, 0.0
      %v6471 = vmax.f32 %v6407, 0.0
      %v6472 = vmax.f32 %v6408, 0.0
      %v6473 = vmax.f32 %v6409, 0.0
      %v6474 = vmax.f32 %v6410, 0.0
      %v6475 = vmax.f32 %v6411, 0.0
      %v6476 = vmax.f32 %v6412, 0.0
      %v6477 = vmax.f32 %v6413, 0.0
      %v6478 = vmax.f32 %v6414, 0.0
      %v6479 = vmax.f32 %v6415, 0.0
      %v6480 = vmax.f32 %v6416, 0.0
      %v6481 = vmax.f32 %v6417, 0.0
      %v6482 = vmax.f32 %v6418, 0.0
      %v6483 = vmax.f32 %v6419, 0.0
      %v6484 = vmax.f32 %v6420, 0.0
      %v6485 = vmax.f32 %v6421, 0.0
      %v6486 = vmax.f32 %v6422, 0.0
      %v6487 = vmax.f32 %v6423, 0.0
      %v6488 = vmax.f32 %v6424, 0.0
      %v6489 = vmax.f32 %v6425, 0.0
      %v6490 = vmax.f32 %v6426, 0.0
      %v6491 = vmax.f32 %v6427, 0.0
      %v6492 = vmax.f32 %v6428, 0.0
      %v6493 = vmax.f32 %v6429, 0.0
      %v6494 = vmax.f32 %v6430, 0.0
      %v6495 = vmax.f32 %v6431, 0.0
      %v6496 = vmax.f32 %v6432, 0.0
      %v6497 = vmax.f32 %v6433, 0.0
      %v6498 = vmax.f32 %v6434, 0.0
      %v6499 = vmax.f32 %v6435, 0.0
      %v6500 = vmax.f32 %v6436, 0.0
      %v6501 = vmax.f32 %v6437, 0.0
      %v6502 = vmax.f32 %v6438, 0.0
      %v6503 = vmax.f32 %v6439, 0.0
      %v6504 = vmax.f32 %v6440, 0.0
      %v6505 = vmax.f32 %v6441, 0.0
      %v6506 = vmax.f32 %v6442, 0.0
      %v6507 = vmax.f32 %v6443, 0.0
      %v6508 = vmax.f32 %v6444, 0.0
      %v6509 = vmax.f32 %v6445, 0.0
      %v6510 = vmax.f32 %v6446, 0.0
      %v6511 = vmax.f32 %v6447, 0.0
      %v6512 = vmax.f32 %v6448, 0.0
      %v6513 = vmax.f32 %v6449, 0.0
      %v6514 = vmax.f32 %v6450, 0.0
      %v6515 = vmax.f32 %v6451, 0.0
      %v6516 = vmax.f32 %v6452, 0.0
      %v6517 = vmax.f32 %v6453, 0.0
      %v6518 = vmax.f32 %v6454, 0.0
      %v6519 = vmax.f32 %v6455, 0.0
      %v6520 = vmax.f32 %v6456, 0.0
      %v6521 = vmax.f32 %v6457, 0.0
      %v6522 = vmax.f32 %v6458, 0.0
      %v6523 = vmax.f32 %v6459, 0.0
      %v6524 = vmax.f32 %v6460, 0.0
      %v6525 = vmax.f32 %v6461, 0.0
      %v6526 = vmax.f32 %v6462, 0.0
      %v6527 = vmax.f32 %v6463, 0.0
      %v6528 = vmax.f32 %v6464, 0.0
      %v6529 = vadd.f32 %v6465, %v6467
      %v6530 = vadd.f32 %v6529, %v6469
      %v6531 = vadd.f32 %v6530, %v6471
      %v6532 = vadd.f32 %v6531, %v6473
      %v6533 = vadd.f32 %v6532, %v6475
      %v6534 = vadd.f32 %v6533, %v6477
      %v6535 = vadd.f32 %v6534, %v6479
      %v6536 = vadd.f32 %v6535, %v6481
      %v6537 = vadd.f32 %v6536, %v6483
      %v6538 = vadd.f32 %v6537, %v6485
      %v6539 = vadd.f32 %v6538, %v6487
      %v6540 = vadd.f32 %v6539, %v6489
      %v6541 = vadd.f32 %v6540, %v6491
      %v6542 = vadd.f32 %v6541, %v6493
      %v6543 = vadd.f32 %v6542, %v6495
      %v6544 = vrot.slane %v6543, 4
      %v6545 = vadd.f32 %v6543, %v6544
      %v6546 = vrot.slane %v6545, 2
      %v6547 = vadd.f32 %v6545, %v6546
      %v6548 = vrot.slane %v6547, 1
      %v6549 = vadd.f32 %v6547, %v6548
      %v6550 = vadd.f32 %v6466, %v6468
      %v6551 = vadd.f32 %v6550, %v6470
      %v6552 = vadd.f32 %v6551, %v6472
      %v6553 = vadd.f32 %v6552, %v6474
      %v6554 = vadd.f32 %v6553, %v6476
      %v6555 = vadd.f32 %v6554, %v6478
      %v6556 = vadd.f32 %v6555, %v6480
      %v6557 = vadd.f32 %v6556, %v6482
      %v6558 = vadd.f32 %v6557, %v6484
      %v6559 = vadd.f32 %v6558, %v6486
      %v6560 = vadd.f32 %v6559, %v6488
      %v6561 = vadd.f32 %v6560, %v6490
      %v6562 = vadd.f32 %v6561, %v6492
      %v6563 = vadd.f32 %v6562, %v6494
      %v6564 = vadd.f32 %v6563, %v6496
      %v6565 = vrot.slane %v6564, 4
      %v6566 = vadd.f32 %v6564, %v6565
      %v6567 = vrot.slane %v6566, 2
      %v6568 = vadd.f32 %v6566, %v6567
      %v6569 = vrot.slane %v6568, 1
      %v6570 = vadd.f32 %v6568, %v6569
      %v6571 = vadd.f32 %v6497, %v6499
      %v6572 = vadd.f32 %v6571, %v6501
      %v6573 = vadd.f32 %v6572, %v6503
      %v6574 = vadd.f32 %v6573, %v6505
      %v6575 = vadd.f32 %v6574, %v6507
      %v6576 = vadd.f32 %v6575, %v6509
      %v6577 = vadd.f32 %v6576, %v6511
      %v6578 = vadd.f32 %v6577, %v6513
      %v6579 = vadd.f32 %v6578, %v6515
      %v6580 = vadd.f32 %v6579, %v6517
      %v6581 = vadd.f32 %v6580, %v6519
      %v6582 = vadd.f32 %v6581, %v6521
      %v6583 = vadd.f32 %v6582, %v6523
      %v6584 = vadd.f32 %v6583, %v6525
      %v6585 = vadd.f32 %v6584, %v6527
      %v6586 = vrot.slane %v6585, 4
      %v6587 = vadd.f32 %v6585, %v6586
      %v6588 = vrot.slane %v6587, 2
      %v6589 = vadd.f32 %v6587, %v6588
      %v6590 = vrot.slane %v6589, 1
      %v6591 = vadd.f32 %v6589, %v6590
      %v6592 = vadd.f32 %v6498, %v6500
      %v6593 = vadd.f32 %v6592, %v6502
      %v6594 = vadd.f32 %v6593, %v6504
      %v6595 = vadd.f32 %v6594, %v6506
      %v6596 = vadd.f32 %v6595, %v6508
      %v6597 = vadd.f32 %v6596, %v6510
      %v6598 = vadd.f32 %v6597, %v6512
      %v6599 = vadd.f32 %v6598, %v6514
      %v6600 = vadd.f32 %v6599, %v6516
      %v6601 = vadd.f32 %v6600, %v6518
      %v6602 = vadd.f32 %v6601, %v6520
      %v6603 = vadd.f32 %v6602, %v6522
      %v6604 = vadd.f32 %v6603, %v6524
      %v6605 = vadd.f32 %v6604, %v6526
      %v6606 = vadd.f32 %v6605, %v6528
      %v6607 = vrot.slane %v6606, 4
      %v6608 = vadd.f32 %v6606, %v6607
      %v6609 = vrot.slane %v6608, 2
      %v6610 = vadd.f32 %v6608, %v6609
      %v6611 = vrot.slane %v6610, 1
      %v6612 = vadd.f32 %v6610, %v6611
      %v6617 = vcombine.low %v6549, %v6570
      %v6619 = vunpack.c.l.s4 1983009808
      %v6620 = vunpack.c.0.s8 %v6619
      %v6621 = vlaneseq
      %v6622 = vshrl.u32 %v6621, 7
      %v6623 = vsub.s32 %v6620, %v6622
      %v6624 = vrot.slane %v6617, %v6623
      %v6625 = vcombine.low %v6591, %v6612
      %v6627 = vunpack.c.l.s4 1983009808
      %v6628 = vunpack.c.0.s8 %v6627
      %v6629 = vlaneseq
      %v6630 = vshrl.u32 %v6629, 7
      %v6631 = vsub.s32 %v6628, %v6630
      %v6632 = vrot.slane %v6625, %v6631
      %vm6633 = vcmask 1044484
      %v6634 = vsel %vm6633, %v6624, %v6624
      %vm6635 = vcmask 1046534
      %v6636 = vsel %vm6635, %v6624, %v6634
      %v6637 = vrot.slane %v6632, 7
      %vm6638 = vcmask 1041409
      %v6639 = vsel %vm6638, %v6637, %v6636
      %vm6640 = vcmask 1043459
      %v6641 = vsel %vm6640, %v6637, %v6639
      %vm6642 = vcmask 1045509
      %v6643 = vsel %vm6642, %v6637, %v6641
      %vm6644 = vcmask 1047559
      %v6645 = vsel %vm6644, %v6637, %v6643
      %6647 = vst [vmem:[%s202] sm:$0xf] %v6645
      %p6648 = scmp.lt.s32.totalorder %s15, 1
      %s6649 = scalar_select %p6648, %s15, 1
      %s6650 = smul.addr %s6649, 2
      %s6651 = smul.addr %s6650, 2
      %s6652 = scalar_lea.vmem %s4, %s6651
      // Predicated region
      $region37: #{combine_forward.1} parent=35 // pred_check
        %p6653 = pneg %p122
      $region38: #{combine_forward.1} parent=35 // pred_check_branch
        %6655 = sbr.rel (%p6653) target = $region40
      $region39: #{combine_forward.1} parent=35 // pred_region
        _
      $region40: #{combine_forward.1} parent=35 // pred_fallthru
        _
    $region36: #{combine_forward.1} parent=5 // pred_fallthru
      _
    %p6656 = scmp.le.s32.totalorder 2, %s10
    // Predicated region
    $region41: #{combine_forward.1} parent=5 // pred_check
      %p6657 = pneg %p6656
    $region42: #{combine_forward.1} parent=5 // pred_check_branch
      %6659 = sbr.rel (%p6657) target = $region44
    $region43: #{combine_forward.1} parent=5 // pred_region
      %s6660 = ssub.s32 %s10, 2
      // Predicated region
      $region45: #{combine_forward.1} parent=43 // pred_check
        %p6661 = pneg %p128
      $region46: #{combine_forward.1} parent=43 // pred_check_branch
        %6663 = sbr.rel (%p6661) target = $region48
      $region47: #{combine_forward.1} parent=43 // pred_region
        %p6664 = scmp.lt.s32.totalorder %s16, 1
        %s6665 = scalar_select %p6664, %s16, 1
        %s6666 = smul.addr %s6665, 2
        %s6667 = smul.addr %s6666, 2
        %s6668 = scalar_lea.vmem %s4, %s6667
      $region48: #{combine_forward.1} parent=43 // pred_fallthru
        _
    $region44: #{combine_forward.1} parent=5 // pred_fallthru
      _
  $region6: #{combine_forward.1} parent=0 // loop_footer
    %s14 = sadd.s32 1, %s10
  $region7: #{combine_forward.1} parent=0 // loop_footer_branch
    %9 = sbr.rel target = $region3
  $region8: #{combine_forward.1} parent=0 // loop_exit
    _

</llo_original>
